<compile_context>
chip_gen: v5e
topology: v5e:2x2
jax: 0.10.0
libtpu: 0.0.40
codegen_flags: <defaults>
</compile_context>

<pallas_src>
import functools

import jax
import jax.numpy as jnp
from jax import lax
from jax.experimental import pallas as pl
from jax.experimental.pallas import tpu as pltpu


# ----------------------------------------------------------------------------
# Fused forward kernel: Bt images per grid step, everything stays in VMEM
# ----------------------------------------------------------------------------
def _fused_ae_kernel(h, w,
                     x_ref, w1_ref, b1_ref, w2_ref, b2_ref,
                     sa1_ref, sb1_ref, sa2_ref, sb2_ref,
                     w3_ref, b3_ref, w4_ref, b4_ref, o_ref):
    f32, bf16 = jnp.float32, jnp.bfloat16
    bt = x_ref.shape[0]

    def mm(a2d, w2d):
        # bf16 x bf16 -> f32 accumulate on the MXU.
        return jnp.dot(a2d.astype(bf16), w2d, preferred_element_type=f32)

    def conv3x3_same(a3, wf_ref_, b_ref_):
        # 3x3 "same" conv.  The W axis (and its zero padding) is folded into
        # the banded weight; the H axis uses +/-1 sublane shifts (zero rows at
        # the image boundary == zero padding).
        _, rows, lin = a3.shape
        wf = wf_ref_[...]                                 # (3*lin, lout) bf16
        lout = wf.shape[1]
        zrow = jnp.zeros((bt, 1, lin), f32)
        a_dn = jnp.concatenate([zrow, a3[:, :-1, :]], axis=1)  # row h-1 -> h
        a_up = jnp.concatenate([a3[:, 1:, :], zrow], axis=1)   # row h+1 -> h
        if lin % 128 == 0:
            # Fuse the 3 kernel-row bands into one deeper matmul (3*lin).
            lhs = jnp.concatenate([a_dn, a3, a_up], axis=-1)
            y = mm(lhs.reshape(bt * rows, 3 * lin), wf)
        else:
            # 16-lane pieces are not tile aligned -> keep three matmuls.
            y = (mm(a_dn.reshape(bt * rows, lin), wf[0:lin])
                 + mm(a3.reshape(bt * rows, lin), wf[lin:2 * lin])
                 + mm(a_up.reshape(bt * rows, lin), wf[2 * lin:3 * lin]))
        return (y + b_ref_[...]).reshape(bt, rows, lout)

    def maxpool2x2(a3, sa_ref_, sb_ref_):
        # Pool over H on the sublane path, pool over W via 0/1 lane selectors.
        _, rows, lin = a3.shape
        lout = sa_ref_.shape[1]
        a4 = a3.reshape(bt, rows // 2, 2, lin)
        m = jnp.maximum(a4[:, :, 0, :], a4[:, :, 1, :])         # H pooled
        m2 = m.reshape(bt * (rows // 2), lin)
        p = jnp.maximum(mm(m2, sa_ref_[...]), mm(m2, sb_ref_[...]))  # W pooled
        return p.reshape(bt, rows // 2, lout)

    def deconv2x2_s2(a3, wd_ref_, b_ref_):
        # ConvTranspose2d(kernel 2, stride 2): lane expansion per dh, then the
        # two dh results are row-interleaved through a size-2 sublane axis.
        _, rows, lin = a3.shape
        lout = wd_ref_.shape[2]
        a2 = a3.reshape(bt * rows, lin)
        z0 = mm(a2, wd_ref_[0]).reshape(bt, rows, lout)
        z1 = mm(a2, wd_ref_[1]).reshape(bt, rows, lout)
        z = jnp.stack([z0, z1], axis=2).reshape(bt, 2 * rows, lout)
        return z + b_ref_[...]

    x3 = x_ref[...]                                             # (bt, h, w)
    a1 = jnp.maximum(conv3x3_same(x3, w1_ref, b1_ref), 0.0)     # (bt, h,   w*16)
    p1 = maxpool2x2(a1, sa1_ref, sb1_ref)                       # (bt, h/2, w/2*16)
    a2 = jnp.maximum(conv3x3_same(p1, w2_ref, b2_ref), 0.0)     # (bt, h/2, w/2*4)
    p2 = maxpool2x2(a2, sa2_ref, sb2_ref)                       # (bt, h/4, w/4*4)
    d1 = jnp.maximum(deconv2x2_s2(p2, w3_ref, b3_ref), 0.0)     # (bt, h/2, w/2*16)

    # Final ConvTranspose2d(16 -> 1): packed so output lane j = dh*W + w_out,
    # i.e. row h2 of z holds output raster rows 2*h2 and 2*h2+1 back to back.
    # Write them as lane-dense slabs into the flattened (bt, H*W) block.
    rows2, lin2 = d1.shape[1], d1.shape[2]
    z = mm(d1.reshape(bt * rows2, lin2), w4_ref[...]) + b4_ref[...]
    z = z.reshape(bt, rows2, 2 * w)
    for r in range(rows2):
        o_ref[:, 2 * w * r: 2 * w * (r + 1)] = z[:, r, :]


# ----------------------------------------------------------------------------
# Weight packing: PyTorch-layout params -> banded / expanded matmul operands
# ----------------------------------------------------------------------------
def _pack_params(params, h, w):
    """Lane convention at every level: lane = w * C + c.

    Conv weights become (3*Lin, Lout) band stacks (kernel rows kh = 0,1,2),
    transposed convs become per-dh lane expanders, MaxPool over W becomes a
    pair of 0/1 lane selectors.  Matmul operands are cast to bf16 (exact for
    the 0/1 selectors); biases stay f32.
    """
    f32, bf16 = jnp.float32, jnp.bfloat16

    w1, b1 = params["enc1_w"].astype(f32), params["enc1_b"].astype(f32)
    w2, b2 = params["enc2_w"].astype(f32), params["enc2_b"].astype(f32)
    w3, b3 = params["dec1_w"].astype(f32), params["dec1_b"].astype(f32)
    w4, b4 = params["dec2_w"].astype(f32), params["dec2_b"].astype(f32)
    c1, c2 = w1.shape[0], w2.shape[0]
    wh, wq = w // 2, w // 4

    def shift_eye(n, off):
        # S[i, j] = 1 iff i == j + off  (input col j+off feeds output col j).
        i = jnp.arange(n)[:, None]
        j = jnp.arange(n)[None, :]
        return (i == j + off).astype(f32)

    def expand_eye(n, off):
        # E[i, j] = 1 iff j == 2*i + off  (stride-2 lane expansion).
        i = jnp.arange(n)[:, None]
        j = jnp.arange(2 * n)[None, :]
        return (j == 2 * i + off).astype(f32)

    def pool_sel(width, ch, parity):
        # (width*ch, width//2*ch): out lane wo*ch+c <- in lane (2*wo+parity)*ch+c.
        # Uses // and % so any channel count works (no power-of-two assumption).
        r = jnp.arange(width * ch)[:, None]
        c = jnp.arange((width // 2) * ch)[None, :]
        return ((r % ch == c % ch)
                & (r // ch == 2 * (c // ch) + parity)).astype(f32)

    # encoder conv1: W lanes -> W*c1 lanes, kernel rows stacked -> (3*W, W*c1)
    w1_f = jnp.concatenate([
        sum(jnp.kron(shift_eye(w, kw - 1), w1[:, 0, kh, kw][None, :])
            for kw in range(3)) for kh in range(3)], axis=0)
    b1_row = jnp.tile(b1, w)[None, :]                           # (1, W*c1)
    # encoder conv2: (W/2*c1) -> (W/2*c2), fused bands -> (3*W/2*c1, W/2*c2)
    w2_f = jnp.concatenate([
        sum(jnp.kron(shift_eye(wh, kw - 1), w2[:, :, kh, kw].T)
            for kw in range(3)) for kh in range(3)], axis=0)
    b2_row = jnp.tile(b2, wh)[None, :]                          # (1, W/2*c2)
    # MaxPool lane selectors (even / odd w columns) -- precomputed once.
    sa1, sb1 = pool_sel(w, c1, 0), pool_sel(w, c1, 1)
    sa2, sb2 = pool_sel(wh, c2, 0), pool_sel(wh, c2, 1)
    # decoder deconv1: (W/4*c2) -> (W/2*c3), one lane expander per dh.
    w3_d = jnp.stack([
        sum(jnp.kron(expand_eye(wq, dw), w3[:, :, dh, dw]) for dw in range(2))
        for dh in range(2)])                                    # (2, W/4*c2, W/2*c3)
    b3_row = jnp.tile(b3, wh)[None, :]                          # (1, W/2*c3)
    # decoder deconv2 (c3 -> 1): output lane j = dh*W + w_out -> (W/2*c3, 2*W)
    w4_d = jnp.concatenate([
        sum(jnp.kron(expand_eye(wh, dw), w4[:, 0, dh, dw][:, None])
            for dw in range(2)) for dh in range(2)], axis=1)
    b4_row = jnp.tile(b4, 2 * w)[None, :]                       # (1, 2*W)

    bf = lambda a: a.astype(bf16)
    return (bf(w1_f), b1_row, bf(w2_f), b2_row,
            bf(sa1), bf(sb1), bf(sa2), bf(sb2),
            bf(w3_d), b3_row, bf(w4_d), b4_row)


# ----------------------------------------------------------------------------
# Forward wrapper
# ----------------------------------------------------------------------------
def _pick_batch_tile(n, h, rows_target=256):
    # Bt*H rows feed each MXU matmul.  Target ~256 rows (v6e/v7x MXU height,
    # inside the 128-512 sweet spot for v5e); keep the sublane block dim a
    # multiple of 8 for native tiling; try to keep >= 2 grid steps so the
    # "parallel" batch axis can still split across TensorCores.
    bt = max(1, rows_target // h)
    half = (n + 1) // 2
    if half < bt:
        bt = half
    return max(8, ((bt + 7) // 8) * 8)


def conv_ae_forward(params, x_nchw):
    """Forward pass matching ConvAE. x: (N, 1, H, W) f32 -> (N, 1, H, W) f32."""
    n, cin, h, w = x_nchw.shape
    assert cin == 1 and h % 4 == 0 and w % 4 == 0

    # Channel counts from the weight shapes (not inferred from packed rows).
    c1 = params["enc1_w"].shape[0]        # 16
    c2 = params["enc2_w"].shape[0]        # 4
    c3 = params["dec1_w"].shape[1]        # 16

    bt = _pick_batch_tile(n, h)
    n_pad = pl.cdiv(n, bt) * bt
    x = x_nchw.reshape(n, h, w)
    if n_pad != n:
        x = jnp.concatenate([x, jnp.zeros((n_pad - n, h, w), x.dtype)], axis=0)

    ops = _pack_params(params, h, w)

    def whole(arr):
        nd = arr.ndim
        return pl.BlockSpec(arr.shape, lambda i, _nd=nd: (0,) * _nd)

    # MXU FLOPs actually issued (banded/selector matmuls, zeros included);
    # weights counted once, activations in and out once.
    wh, wq = w // 2, w // 4
    per_img = (3 * 2 * h * w * (w * c1)                    # conv1 (3 bands)
               + 2 * 2 * (h // 2) * (w * c1) * (wh * c1)   # pool1 selectors
               + 2 * (h // 2) * (3 * wh * c1) * (wh * c2)  # conv2 (fused)
               + 2 * 2 * (h // 4) * (wh * c2) * (wq * c2)  # pool2 selectors
               + 2 * 2 * (h // 4) * (wq * c2) * (wh * c3)  # deconv1
               + 2 * (h // 2) * (wh * c3) * (2 * w))       # deconv2
    weight_bytes = sum(int(o.size) * o.dtype.itemsize for o in ops)
    bytes_accessed = 4 * n_pad * h * w * 2 + weight_bytes

    out = pl.pallas_call(
        functools.partial(_fused_ae_kernel, h, w),
        out_shape=jax.ShapeDtypeStruct((n_pad, h * w), jnp.float32),
        grid=(n_pad // bt,),
        in_specs=[pl.BlockSpec((bt, h, w), lambda i: (i, 0, 0))]
        + [whole(o) for o in ops],
        out_specs=pl.BlockSpec((bt, h * w), lambda i: (i, 0)),
        compiler_params=pltpu.CompilerParams(
            dimension_semantics=("parallel",)),
        cost_estimate=pl.CostEstimate(
            flops=int(per_img * n_pad), transcendentals=0,
            bytes_accessed=int(bytes_accessed)),
    )(x, *ops)
    return out[:n].reshape(n, 1, h, w)


# ----------------------------------------------------------------------------
# Parameters (PyTorch-default-style uniform ranges, PyTorch layouts)
# ----------------------------------------------------------------------------
def init_params(key):
    def uniform(k, shape, fan_in):
        bound = 1.0 / jnp.sqrt(jnp.float32(fan_in))
        return jax.random.uniform(k, shape, jnp.float32, -bound, bound)

    ks = jax.random.split(key, 8)
    return {
        # Conv2d(1, 16, 3, padding=1)
        "enc1_w": uniform(ks[0], (16, 1, 3, 3), 1 * 9),
        "enc1_b": uniform(ks[1], (16,), 1 * 9),
        # Conv2d(16, 4, 3, padding=1)
        "enc2_w": uniform(ks[2], (4, 16, 3, 3), 16 * 9),
        "enc2_b": uniform(ks[3], (4,), 16 * 9),
        # ConvTranspose2d(4, 16, 2, stride=2) -> weight (Cin, Cout, 2, 2)
        "dec1_w": uniform(ks[4], (4, 16, 2, 2), 4 * 4),
        "dec1_b": uniform(ks[5], (16,), 4 * 4),
        # ConvTranspose2d(16, 1, 2, stride=2)
        "dec2_w": uniform(ks[6], (16, 1, 2, 2), 16 * 4),
        "dec2_b": uniform(ks[7], (1,), 16 * 4),
    }


# ----------------------------------------------------------------------------
# Pure-XLA reference (same semantics as the PyTorch module) for validation
# ----------------------------------------------------------------------------
def _reference_forward(params, x_nchw):
    dn = ("NCHW", "OIHW", "NCHW")
    act = lax.conv_general_dilated(x_nchw, params["enc1_w"], (1, 1),
                                   ((1, 1), (1, 1)), dimension_numbers=dn)
    act = jnp.maximum(act + params["enc1_b"][None, :, None, None], 0.0)
    act = lax.reduce_window(act, -jnp.inf, lax.max,
                            (1, 1, 2, 2), (1, 1, 2, 2), "VALID")
    act = lax.conv_general_dilated(act, params["enc2_w"], (1, 1),
                                   ((1, 1), (1, 1)), dimension_numbers=dn)
    act = jnp.maximum(act + params["enc2_b"][None, :, None, None], 0.0)
    act = lax.reduce_window(act, -jnp.inf, lax.max,
                            (1, 1, 2, 2), (1, 1, 2, 2), "VALID")

    def deconv2x2(a, w_iohw, b):
        n_, _, hh, ww = a.shape
        co = w_iohw.shape[1]
        t = jnp.einsum("nihw,iodk->nohdwk", a, w_iohw)
        return t.reshape(n_, co, 2 * hh, 2 * ww) + b[None, :, None, None]

    act = jnp.maximum(deconv2x2(act, params["dec1_w"], params["dec1_b"]), 0.0)
    act = deconv2x2(act, params["dec2_w"], params["dec2_b"])
    return act


if __name__ == "__main__":
    key = jax.random.PRNGKey(0)
    k_param, k_x = jax.random.split(key)

    params = init_params(k_param)
    # 16 images -> Bt = 8, grid = (2,): exercises both the per-step image
    # batching and the multi-step ("parallel") grid path.
    x = jax.random.normal(k_x, (16, 1, 16, 16), dtype=jnp.float32)  # NCHW

    fwd = jax.jit(conv_ae_forward)
    out = jax.block_until_ready(fwd(params, x))

    assert out.shape == (16, 1, 16, 16), out.shape
    assert out.dtype == jnp.float32
    assert bool(jnp.all(jnp.isfinite(out)))

    # Numerical check against a pure-XLA f32 reference.  Matmul operands are
    # bf16 on the MXU (f32 accumulate), so end-to-end rounding is ~1e-2 scale;
    # 3e-2 leaves margin while still catching any packing/layout bug.
    ref = jax.jit(_reference_forward)(params, x)
    err = float(jnp.max(jnp.abs(out - ref)))
    assert err < 3e-2, f"max abs error vs reference: {err}"

    print("KERNEL_OK")
</pallas_src>

<mosaic_0001>
module attributes {stable_mosaic.version = 11 : i64} {
  func.func @_fused_ae_kernel(%arg0: i32, %arg1: memref<8x16x16xf32, #tpu.memory_space<vmem>>, %arg2: memref<48x256xbf16, #tpu.memory_space<vmem>>, %arg3: memref<1x256xf32, #tpu.memory_space<vmem>>, %arg4: memref<384x32xbf16, #tpu.memory_space<vmem>>, %arg5: memref<1x32xf32, #tpu.memory_space<vmem>>, %arg6: memref<256x128xbf16, #tpu.memory_space<vmem>>, %arg7: memref<256x128xbf16, #tpu.memory_space<vmem>>, %arg8: memref<32x16xbf16, #tpu.memory_space<vmem>>, %arg9: memref<32x16xbf16, #tpu.memory_space<vmem>>, %arg10: memref<2x16x128xbf16, #tpu.memory_space<vmem>>, %arg11: memref<1x128xf32, #tpu.memory_space<vmem>>, %arg12: memref<128x32xbf16, #tpu.memory_space<vmem>>, %arg13: memref<1x32xf32, #tpu.memory_space<vmem>>, %arg14: memref<8x256xf32, #tpu.memory_space<vmem>>) attributes {dimension_semantics = [#tpu.dimension_semantics<parallel>], iteration_bounds = array<i64: 2>, scalar_prefetch = 0 : i64, scratch_operands = 0 : i64, tpu.core_type = #tpu.core_type<tc>, window_params = [{transform_indices = @transform_0, window_bounds = array<i64: 8, 16, 16>}, {pipeline_mode = #tpu.pipeline_mode<synchronous>, transform_indices = @transform_1, window_bounds = array<i64: 48, 256>}, {pipeline_mode = #tpu.pipeline_mode<synchronous>, transform_indices = @transform_2, window_bounds = array<i64: 1, 256>}, {pipeline_mode = #tpu.pipeline_mode<synchronous>, transform_indices = @transform_3, window_bounds = array<i64: 384, 32>}, {pipeline_mode = #tpu.pipeline_mode<synchronous>, transform_indices = @transform_4, window_bounds = array<i64: 1, 32>}, {pipeline_mode = #tpu.pipeline_mode<synchronous>, transform_indices = @transform_5, window_bounds = array<i64: 256, 128>}, {pipeline_mode = #tpu.pipeline_mode<synchronous>, transform_indices = @transform_6, window_bounds = array<i64: 256, 128>}, {pipeline_mode = #tpu.pipeline_mode<synchronous>, transform_indices = @transform_7, window_bounds = array<i64: 32, 16>}, {pipeline_mode = #tpu.pipeline_mode<synchronous>, transform_indices = @transform_8, window_bounds = array<i64: 32, 16>}, {pipeline_mode = #tpu.pipeline_mode<synchronous>, transform_indices = @transform_9, window_bounds = array<i64: 2, 16, 128>}, {pipeline_mode = #tpu.pipeline_mode<synchronous>, transform_indices = @transform_10, window_bounds = array<i64: 1, 128>}, {pipeline_mode = #tpu.pipeline_mode<synchronous>, transform_indices = @transform_11, window_bounds = array<i64: 128, 32>}, {pipeline_mode = #tpu.pipeline_mode<synchronous>, transform_indices = @transform_12, window_bounds = array<i64: 1, 32>}, {transform_indices = @transform_13, window_bounds = array<i64: 8, 256>}]} {
    %c0 = arith.constant 0 : index
    %c0_0 = arith.constant 0 : index
    %c0_1 = arith.constant 0 : index
    %0 = vector.load %arg1[%c0, %c0_0, %c0_1] : memref<8x16x16xf32, #tpu.memory_space<vmem>>, vector<8x16x16xf32>
    %c0_2 = arith.constant 0 : index
    %c0_3 = arith.constant 0 : index
    %1 = vector.load %arg2[%c0_2, %c0_3] : memref<48x256xbf16, #tpu.memory_space<vmem>>, vector<48x256xbf16>
    %cst = arith.constant 0.000000e+00 : f32
    %2 = vector.broadcast %cst : f32 to vector<8x1x16xf32>
    %3 = vector.extract_strided_slice %0 {offsets = [0, 0, 0], sizes = [8, 15, 16], strides = [1, 1, 1]} : vector<8x16x16xf32> to vector<8x15x16xf32>
    %4 = tpu.concatenate %2, %3 in 1 : vector<8x1x16xf32>, vector<8x15x16xf32> -> vector<8x16x16xf32>
    %5 = vector.extract_strided_slice %0 {offsets = [0, 1, 0], sizes = [8, 15, 16], strides = [1, 1, 1]} : vector<8x16x16xf32> to vector<8x15x16xf32>
    %6 = tpu.concatenate %5, %2 in 1 : vector<8x15x16xf32>, vector<8x1x16xf32> -> vector<8x16x16xf32>
    %7 = vector.shape_cast %4 : vector<8x16x16xf32> to vector<128x16xf32>
    %8 = vector.extract_strided_slice %1 {offsets = [0, 0], sizes = [16, 256], strides = [1, 1]} : vector<48x256xbf16> to vector<16x256xbf16>
    %9 = arith.truncf %7 : vector<128x16xf32> to vector<128x16xbf16>
    %cst_4 = arith.constant dense<0.000000e+00> : vector<128x256xf32>
    %10 = tpu.matmul %9, %8, %cst_4 {dimension_numbers = #tpu.dot_dimension_numbers<[1], [0], [0], [1], [0, 0, 1, 1], [], []>} : vector<128x16xbf16>, vector<16x256xbf16>, vector<128x256xf32> -> vector<128x256xf32>
    %11 = vector.shape_cast %0 : vector<8x16x16xf32> to vector<128x16xf32>
    %12 = vector.extract_strided_slice %1 {offsets = [16, 0], sizes = [16, 256], strides = [1, 1]} : vector<48x256xbf16> to vector<16x256xbf16>
    %13 = arith.truncf %11 : vector<128x16xf32> to vector<128x16xbf16>
    %cst_5 = arith.constant dense<0.000000e+00> : vector<128x256xf32>
    %14 = tpu.matmul %13, %12, %cst_5 {dimension_numbers = #tpu.dot_dimension_numbers<[1], [0], [0], [1], [0, 0, 1, 1], [], []>} : vector<128x16xbf16>, vector<16x256xbf16>, vector<128x256xf32> -> vector<128x256xf32>
    %15 = arith.addf %10, %14 : vector<128x256xf32>
    %16 = vector.shape_cast %6 : vector<8x16x16xf32> to vector<128x16xf32>
    %17 = vector.extract_strided_slice %1 {offsets = [32, 0], sizes = [16, 256], strides = [1, 1]} : vector<48x256xbf16> to vector<16x256xbf16>
    %18 = arith.truncf %16 : vector<128x16xf32> to vector<128x16xbf16>
    %cst_6 = arith.constant dense<0.000000e+00> : vector<128x256xf32>
    %19 = tpu.matmul %18, %17, %cst_6 {dimension_numbers = #tpu.dot_dimension_numbers<[1], [0], [0], [1], [0, 0, 1, 1], [], []>} : vector<128x16xbf16>, vector<16x256xbf16>, vector<128x256xf32> -> vector<128x256xf32>
    %20 = arith.addf %15, %19 : vector<128x256xf32>
    %c0_7 = arith.constant 0 : index
    %c0_8 = arith.constant 0 : index
    %21 = vector.load %arg3[%c0_7, %c0_8] : memref<1x256xf32, #tpu.memory_space<vmem>>, vector<1x256xf32>
    %22 = vector.broadcast %21 : vector<1x256xf32> to vector<128x256xf32>
    %23 = arith.addf %20, %22 : vector<128x256xf32>
    %24 = vector.shape_cast %23 : vector<128x256xf32> to vector<8x16x256xf32>
    %cst_9 = arith.constant 0.000000e+00 : f32
    %25 = vector.broadcast %cst_9 : f32 to vector<8x16x256xf32>
    %26 = arith.maximumf %24, %25 : vector<8x16x256xf32>
    %27 = vector.shape_cast %26 : vector<8x16x256xf32> to vector<8x8x2x256xf32>
    %28 = vector.extract_strided_slice %27 {offsets = [0, 0, 0, 0], sizes = [8, 8, 1, 256], strides = [1, 1, 1, 1]} : vector<8x8x2x256xf32> to vector<8x8x1x256xf32>
    %29 = vector.shape_cast %28 : vector<8x8x1x256xf32> to vector<8x8x256xf32>
    %30 = vector.extract_strided_slice %27 {offsets = [0, 0, 1, 0], sizes = [8, 8, 1, 256], strides = [1, 1, 1, 1]} : vector<8x8x2x256xf32> to vector<8x8x1x256xf32>
    %31 = vector.shape_cast %30 : vector<8x8x1x256xf32> to vector<8x8x256xf32>
    %32 = arith.maximumf %29, %31 : vector<8x8x256xf32>
    %33 = vector.shape_cast %32 : vector<8x8x256xf32> to vector<64x256xf32>
    %c0_10 = arith.constant 0 : index
    %c0_11 = arith.constant 0 : index
    %34 = vector.load %arg6[%c0_10, %c0_11] : memref<256x128xbf16, #tpu.memory_space<vmem>>, vector<256x128xbf16>
    %35 = arith.truncf %33 : vector<64x256xf32> to vector<64x256xbf16>
    %cst_12 = arith.constant dense<0.000000e+00> : vector<64x128xf32>
    %36 = tpu.matmul %35, %34, %cst_12 {dimension_numbers = #tpu.dot_dimension_numbers<[1], [0], [0], [1], [0, 0, 1, 1], [], []>} : vector<64x256xbf16>, vector<256x128xbf16>, vector<64x128xf32> -> vector<64x128xf32>
    %c0_13 = arith.constant 0 : index
    %c0_14 = arith.constant 0 : index
    %37 = vector.load %arg7[%c0_13, %c0_14] : memref<256x128xbf16, #tpu.memory_space<vmem>>, vector<256x128xbf16>
    %38 = arith.truncf %33 : vector<64x256xf32> to vector<64x256xbf16>
    %cst_15 = arith.constant dense<0.000000e+00> : vector<64x128xf32>
    %39 = tpu.matmul %38, %37, %cst_15 {dimension_numbers = #tpu.dot_dimension_numbers<[1], [0], [0], [1], [0, 0, 1, 1], [], []>} : vector<64x256xbf16>, vector<256x128xbf16>, vector<64x128xf32> -> vector<64x128xf32>
    %40 = arith.maximumf %36, %39 : vector<64x128xf32>
    %41 = vector.shape_cast %40 : vector<64x128xf32> to vector<8x8x128xf32>
    %c0_16 = arith.constant 0 : index
    %c0_17 = arith.constant 0 : index
    %42 = vector.load %arg4[%c0_16, %c0_17] : memref<384x32xbf16, #tpu.memory_space<vmem>>, vector<384x32xbf16>
    %cst_18 = arith.constant 0.000000e+00 : f32
    %43 = vector.broadcast %cst_18 : f32 to vector<8x1x128xf32>
    %44 = vector.extract_strided_slice %41 {offsets = [0, 0, 0], sizes = [8, 7, 128], strides = [1, 1, 1]} : vector<8x8x128xf32> to vector<8x7x128xf32>
    %45 = tpu.concatenate %43, %44 in 1 : vector<8x1x128xf32>, vector<8x7x128xf32> -> vector<8x8x128xf32>
    %46 = vector.extract_strided_slice %41 {offsets = [0, 1, 0], sizes = [8, 7, 128], strides = [1, 1, 1]} : vector<8x8x128xf32> to vector<8x7x128xf32>
    %47 = tpu.concatenate %46, %43 in 1 : vector<8x7x128xf32>, vector<8x1x128xf32> -> vector<8x8x128xf32>
    %48 = tpu.concatenate %45, %41, %47 in 2 : vector<8x8x128xf32>, vector<8x8x128xf32>, vector<8x8x128xf32> -> vector<8x8x384xf32>
    %49 = vector.shape_cast %48 : vector<8x8x384xf32> to vector<64x384xf32>
    %50 = arith.truncf %49 : vector<64x384xf32> to vector<64x384xbf16>
    %cst_19 = arith.constant dense<0.000000e+00> : vector<64x32xf32>
    %51 = tpu.matmul %50, %42, %cst_19 {dimension_numbers = #tpu.dot_dimension_numbers<[1], [0], [0], [1], [0, 0, 1, 1], [], []>} : vector<64x384xbf16>, vector<384x32xbf16>, vector<64x32xf32> -> vector<64x32xf32>
    %c0_20 = arith.constant 0 : index
    %c0_21 = arith.constant 0 : index
    %52 = vector.load %arg5[%c0_20, %c0_21] : memref<1x32xf32, #tpu.memory_space<vmem>>, vector<1x32xf32>
    %53 = vector.broadcast %52 : vector<1x32xf32> to vector<64x32xf32>
    %54 = arith.addf %51, %53 : vector<64x32xf32>
    %55 = vector.shape_cast %54 : vector<64x32xf32> to vector<8x8x32xf32>
    %cst_22 = arith.constant 0.000000e+00 : f32
    %56 = vector.broadcast %cst_22 : f32 to vector<8x8x32xf32>
    %57 = arith.maximumf %55, %56 : vector<8x8x32xf32>
    %58 = vector.shape_cast %57 : vector<8x8x32xf32> to vector<8x4x2x32xf32>
    %59 = vector.extract_strided_slice %58 {offsets = [0, 0, 0, 0], sizes = [8, 4, 1, 32], strides = [1, 1, 1, 1]} : vector<8x4x2x32xf32> to vector<8x4x1x32xf32>
    %60 = vector.shape_cast %59 : vector<8x4x1x32xf32> to vector<8x4x32xf32>
    %61 = vector.extract_strided_slice %58 {offsets = [0, 0, 1, 0], sizes = [8, 4, 1, 32], strides = [1, 1, 1, 1]} : vector<8x4x2x32xf32> to vector<8x4x1x32xf32>
    %62 = vector.shape_cast %61 : vector<8x4x1x32xf32> to vector<8x4x32xf32>
    %63 = arith.maximumf %60, %62 : vector<8x4x32xf32>
    %64 = vector.shape_cast %63 : vector<8x4x32xf32> to vector<32x32xf32>
    %c0_23 = arith.constant 0 : index
    %c0_24 = arith.constant 0 : index
    %65 = vector.load %arg8[%c0_23, %c0_24] : memref<32x16xbf16, #tpu.memory_space<vmem>>, vector<32x16xbf16>
    %66 = arith.truncf %64 : vector<32x32xf32> to vector<32x32xbf16>
    %cst_25 = arith.constant dense<0.000000e+00> : vector<32x16xf32>
    %67 = tpu.matmul %66, %65, %cst_25 {dimension_numbers = #tpu.dot_dimension_numbers<[1], [0], [0], [1], [0, 0, 1, 1], [], []>} : vector<32x32xbf16>, vector<32x16xbf16>, vector<32x16xf32> -> vector<32x16xf32>
    %c0_26 = arith.constant 0 : index
    %c0_27 = arith.constant 0 : index
    %68 = vector.load %arg9[%c0_26, %c0_27] : memref<32x16xbf16, #tpu.memory_space<vmem>>, vector<32x16xbf16>
    %69 = arith.truncf %64 : vector<32x32xf32> to vector<32x32xbf16>
    %cst_28 = arith.constant dense<0.000000e+00> : vector<32x16xf32>
    %70 = tpu.matmul %69, %68, %cst_28 {dimension_numbers = #tpu.dot_dimension_numbers<[1], [0], [0], [1], [0, 0, 1, 1], [], []>} : vector<32x32xbf16>, vector<32x16xbf16>, vector<32x16xf32> -> vector<32x16xf32>
    %71 = arith.maximumf %67, %70 : vector<32x16xf32>
    %72 = vector.shape_cast %71 : vector<32x16xf32> to vector<8x4x16xf32>
    %73 = vector.shape_cast %72 : vector<8x4x16xf32> to vector<32x16xf32>
    %c0_29 = arith.constant 0 : index
    %c0_30 = arith.constant 0 : index
    %c0_31 = arith.constant 0 : index
    %74 = vector.load %arg10[%c0_29, %c0_30, %c0_31] : memref<2x16x128xbf16, #tpu.memory_space<vmem>>, vector<1x16x128xbf16>
    %75 = vector.shape_cast %74 : vector<1x16x128xbf16> to vector<16x128xbf16>
    %76 = arith.truncf %73 : vector<32x16xf32> to vector<32x16xbf16>
    %cst_32 = arith.constant dense<0.000000e+00> : vector<32x128xf32>
    %77 = tpu.matmul %76, %75, %cst_32 {dimension_numbers = #tpu.dot_dimension_numbers<[1], [0], [0], [1], [0, 0, 1, 1], [], []>} : vector<32x16xbf16>, vector<16x128xbf16>, vector<32x128xf32> -> vector<32x128xf32>
    %78 = vector.shape_cast %77 : vector<32x128xf32> to vector<8x4x128xf32>
    %c1 = arith.constant 1 : index
    %c0_33 = arith.constant 0 : index
    %c0_34 = arith.constant 0 : index
    %79 = vector.load %arg10[%c1, %c0_33, %c0_34] : memref<2x16x128xbf16, #tpu.memory_space<vmem>>, vector<1x16x128xbf16>
    %80 = vector.shape_cast %79 : vector<1x16x128xbf16> to vector<16x128xbf16>
    %81 = arith.truncf %73 : vector<32x16xf32> to vector<32x16xbf16>
    %cst_35 = arith.constant dense<0.000000e+00> : vector<32x128xf32>
    %82 = tpu.matmul %81, %80, %cst_35 {dimension_numbers = #tpu.dot_dimension_numbers<[1], [0], [0], [1], [0, 0, 1, 1], [], []>} : vector<32x16xbf16>, vector<16x128xbf16>, vector<32x128xf32> -> vector<32x128xf32>
    %83 = vector.shape_cast %82 : vector<32x128xf32> to vector<8x4x128xf32>
    %84 = vector.shape_cast %78 : vector<8x4x128xf32> to vector<8x4x1x128xf32>
    %85 = vector.shape_cast %83 : vector<8x4x128xf32> to vector<8x4x1x128xf32>
    %86 = tpu.concatenate %84, %85 in 2 : vector<8x4x1x128xf32>, vector<8x4x1x128xf32> -> vector<8x4x2x128xf32>
    %87 = vector.shape_cast %86 : vector<8x4x2x128xf32> to vector<8x8x128xf32>
    %c0_36 = arith.constant 0 : index
    %c0_37 = arith.constant 0 : index
    %88 = vector.load %arg11[%c0_36, %c0_37] : memref<1x128xf32, #tpu.memory_space<vmem>>, vector<1x128xf32>
    %89 = vector.shape_cast %88 : vector<1x128xf32> to vector<1x1x128xf32>
    %90 = vector.broadcast %89 : vector<1x1x128xf32> to vector<8x8x128xf32>
    %91 = arith.addf %87, %90 : vector<8x8x128xf32>
    %cst_38 = arith.constant 0.000000e+00 : f32
    %92 = vector.broadcast %cst_38 : f32 to vector<8x8x128xf32>
    %93 = arith.maximumf %91, %92 : vector<8x8x128xf32>
    %94 = vector.shape_cast %93 : vector<8x8x128xf32> to vector<64x128xf32>
    %c0_39 = arith.constant 0 : index
    %c0_40 = arith.constant 0 : index
    %95 = vector.load %arg12[%c0_39, %c0_40] : memref<128x32xbf16, #tpu.memory_space<vmem>>, vector<128x32xbf16>
    %96 = arith.truncf %94 : vector<64x128xf32> to vector<64x128xbf16>
    %cst_41 = arith.constant dense<0.000000e+00> : vector<64x32xf32>
    %97 = tpu.matmul %96, %95, %cst_41 {dimension_numbers = #tpu.dot_dimension_numbers<[1], [0], [0], [1], [0, 0, 1, 1], [], []>} : vector<64x128xbf16>, vector<128x32xbf16>, vector<64x32xf32> -> vector<64x32xf32>
    %c0_42 = arith.constant 0 : index
    %c0_43 = arith.constant 0 : index
    %98 = vector.load %arg13[%c0_42, %c0_43] : memref<1x32xf32, #tpu.memory_space<vmem>>, vector<1x32xf32>
    %99 = vector.broadcast %98 : vector<1x32xf32> to vector<64x32xf32>
    %100 = arith.addf %97, %99 : vector<64x32xf32>
    %101 = vector.shape_cast %100 : vector<64x32xf32> to vector<8x8x32xf32>
    %102 = vector.extract_strided_slice %101 {offsets = [0, 0, 0], sizes = [8, 1, 32], strides = [1, 1, 1]} : vector<8x8x32xf32> to vector<8x1x32xf32>
    %103 = vector.shape_cast %102 : vector<8x1x32xf32> to vector<8x32xf32>
    %c0_44 = arith.constant 0 : index
    %c0_45 = arith.constant 0 : index
    %104 = vector.load %arg14[%c0_44, %c0_45] : memref<8x256xf32, #tpu.memory_space<vmem>>, vector<8x32xf32>
    tpu.vector_store %arg14[%c0_44, %c0_45], %103 {strides = array<i32>} : memref<8x256xf32, #tpu.memory_space<vmem>>, vector<8x32xf32>,
    %105 = vector.extract_strided_slice %101 {offsets = [0, 1, 0], sizes = [8, 1, 32], strides = [1, 1, 1]} : vector<8x8x32xf32> to vector<8x1x32xf32>
    %106 = vector.shape_cast %105 : vector<8x1x32xf32> to vector<8x32xf32>
    %c0_46 = arith.constant 0 : index
    %c32 = arith.constant 32 : index
    %107 = vector.load %arg14[%c0_46, %c32] : memref<8x256xf32, #tpu.memory_space<vmem>>, vector<8x32xf32>
    tpu.vector_store %arg14[%c0_46, %c32], %106 {strides = array<i32>} : memref<8x256xf32, #tpu.memory_space<vmem>>, vector<8x32xf32>,
    %108 = vector.extract_strided_slice %101 {offsets = [0, 2, 0], sizes = [8, 1, 32], strides = [1, 1, 1]} : vector<8x8x32xf32> to vector<8x1x32xf32>
    %109 = vector.shape_cast %108 : vector<8x1x32xf32> to vector<8x32xf32>
    %c0_47 = arith.constant 0 : index
    %c64 = arith.constant 64 : index
    %110 = vector.load %arg14[%c0_47, %c64] : memref<8x256xf32, #tpu.memory_space<vmem>>, vector<8x32xf32>
    tpu.vector_store %arg14[%c0_47, %c64], %109 {strides = array<i32>} : memref<8x256xf32, #tpu.memory_space<vmem>>, vector<8x32xf32>,
    %111 = vector.extract_strided_slice %101 {offsets = [0, 3, 0], sizes = [8, 1, 32], strides = [1, 1, 1]} : vector<8x8x32xf32> to vector<8x1x32xf32>
    %112 = vector.shape_cast %111 : vector<8x1x32xf32> to vector<8x32xf32>
    %c0_48 = arith.constant 0 : index
    %c96 = arith.constant 96 : index
    %113 = vector.load %arg14[%c0_48, %c96] : memref<8x256xf32, #tpu.memory_space<vmem>>, vector<8x32xf32>
    tpu.vector_store %arg14[%c0_48, %c96], %112 {strides = array<i32>} : memref<8x256xf32, #tpu.memory_space<vmem>>, vector<8x32xf32>,
    %114 = vector.extract_strided_slice %101 {offsets = [0, 4, 0], sizes = [8, 1, 32], strides = [1, 1, 1]} : vector<8x8x32xf32> to vector<8x1x32xf32>
    %115 = vector.shape_cast %114 : vector<8x1x32xf32> to vector<8x32xf32>
    %c0_49 = arith.constant 0 : index
    %c128 = arith.constant 128 : index
    %116 = vector.load %arg14[%c0_49, %c128] : memref<8x256xf32, #tpu.memory_space<vmem>>, vector<8x32xf32>
    tpu.vector_store %arg14[%c0_49, %c128], %115 {strides = array<i32>} : memref<8x256xf32, #tpu.memory_space<vmem>>, vector<8x32xf32>,
    %117 = vector.extract_strided_slice %101 {offsets = [0, 5, 0], sizes = [8, 1, 32], strides = [1, 1, 1]} : vector<8x8x32xf32> to vector<8x1x32xf32>
    %118 = vector.shape_cast %117 : vector<8x1x32xf32> to vector<8x32xf32>
    %c0_50 = arith.constant 0 : index
    %c160 = arith.constant 160 : index
    %119 = vector.load %arg14[%c0_50, %c160] : memref<8x256xf32, #tpu.memory_space<vmem>>, vector<8x32xf32>
    tpu.vector_store %arg14[%c0_50, %c160], %118 {strides = array<i32>} : memref<8x256xf32, #tpu.memory_space<vmem>>, vector<8x32xf32>,
    %120 = vector.extract_strided_slice %101 {offsets = [0, 6, 0], sizes = [8, 1, 32], strides = [1, 1, 1]} : vector<8x8x32xf32> to vector<8x1x32xf32>
    %121 = vector.shape_cast %120 : vector<8x1x32xf32> to vector<8x32xf32>
    %c0_51 = arith.constant 0 : index
    %c192 = arith.constant 192 : index
    %122 = vector.load %arg14[%c0_51, %c192] : memref<8x256xf32, #tpu.memory_space<vmem>>, vector<8x32xf32>
    tpu.vector_store %arg14[%c0_51, %c192], %121 {strides = array<i32>} : memref<8x256xf32, #tpu.memory_space<vmem>>, vector<8x32xf32>,
    %123 = vector.extract_strided_slice %101 {offsets = [0, 7, 0], sizes = [8, 1, 32], strides = [1, 1, 1]} : vector<8x8x32xf32> to vector<8x1x32xf32>
    %124 = vector.shape_cast %123 : vector<8x1x32xf32> to vector<8x32xf32>
    %c0_52 = arith.constant 0 : index
    %c224 = arith.constant 224 : index
    %125 = vector.load %arg14[%c0_52, %c224] : memref<8x256xf32, #tpu.memory_space<vmem>>, vector<8x32xf32>
    tpu.vector_store %arg14[%c0_52, %c224], %124 {strides = array<i32>} : memref<8x256xf32, #tpu.memory_space<vmem>>, vector<8x32xf32>,
    return
  }
  func.func @transform_0(%arg0: i32) -> (i32, i32, i32) {
    %c0_i32 = arith.constant 0 : i32
    %c0_i32_0 = arith.constant 0 : i32
    %c0_i32_1 = arith.constant 0 : i32
    return %arg0, %c0_i32, %c0_i32_0 : i32, i32, i32
  }
  func.func @transform_1(%arg0: i32) -> (i32, i32) {
    %c0_i32 = arith.constant 0 : i32
    %c0_i32_0 = arith.constant 0 : i32
    %c0_i32_1 = arith.constant 0 : i32
    return %c0_i32, %c0_i32_0 : i32, i32
  }
  func.func @transform_2(%arg0: i32) -> (i32, i32) {
    %c0_i32 = arith.constant 0 : i32
    %c0_i32_0 = arith.constant 0 : i32
    %c0_i32_1 = arith.constant 0 : i32
    return %c0_i32, %c0_i32_0 : i32, i32
  }
  func.func @transform_3(%arg0: i32) -> (i32, i32) {
    %c0_i32 = arith.constant 0 : i32
    %c0_i32_0 = arith.constant 0 : i32
    %c0_i32_1 = arith.constant 0 : i32
    return %c0_i32, %c0_i32_0 : i32, i32
  }
  func.func @transform_4(%arg0: i32) -> (i32, i32) {
    %c0_i32 = arith.constant 0 : i32
    %c0_i32_0 = arith.constant 0 : i32
    %c0_i32_1 = arith.constant 0 : i32
    return %c0_i32, %c0_i32_0 : i32, i32
  }
  func.func @transform_5(%arg0: i32) -> (i32, i32) {
    %c0_i32 = arith.constant 0 : i32
    %c0_i32_0 = arith.constant 0 : i32
    %c0_i32_1 = arith.constant 0 : i32
    return %c0_i32, %c0_i32_0 : i32, i32
  }
  func.func @transform_6(%arg0: i32) -> (i32, i32) {
    %c0_i32 = arith.constant 0 : i32
    %c0_i32_0 = arith.constant 0 : i32
    %c0_i32_1 = arith.constant 0 : i32
    return %c0_i32, %c0_i32_0 : i32, i32
  }
  func.func @transform_7(%arg0: i32) -> (i32, i32) {
    %c0_i32 = arith.constant 0 : i32
    %c0_i32_0 = arith.constant 0 : i32
    %c0_i32_1 = arith.constant 0 : i32
    return %c0_i32, %c0_i32_0 : i32, i32
  }
  func.func @transform_8(%arg0: i32) -> (i32, i32) {
    %c0_i32 = arith.constant 0 : i32
    %c0_i32_0 = arith.constant 0 : i32
    %c0_i32_1 = arith.constant 0 : i32
    return %c0_i32, %c0_i32_0 : i32, i32
  }
  func.func @transform_9(%arg0: i32) -> (i32, i32, i32) {
    %c0_i32 = arith.constant 0 : i32
    %c0_i32_0 = arith.constant 0 : i32
    %c0_i32_1 = arith.constant 0 : i32
    %c0_i32_2 = arith.constant 0 : i32
    return %c0_i32, %c0_i32_0, %c0_i32_1 : i32, i32, i32
  }
  func.func @transform_10(%arg0: i32) -> (i32, i32) {
    %c0_i32 = arith.constant 0 : i32
    %c0_i32_0 = arith.constant 0 : i32
    %c0_i32_1 = arith.constant 0 : i32
    return %c0_i32, %c0_i32_0 : i32, i32
  }
  func.func @transform_11(%arg0: i32) -> (i32, i32) {
    %c0_i32 = arith.constant 0 : i32
    %c0_i32_0 = arith.constant 0 : i32
    %c0_i32_1 = arith.constant 0 : i32
    return %c0_i32, %c0_i32_0 : i32, i32
  }
  func.func @transform_12(%arg0: i32) -> (i32, i32) {
    %c0_i32 = arith.constant 0 : i32
    %c0_i32_0 = arith.constant 0 : i32
    %c0_i32_1 = arith.constant 0 : i32
    return %c0_i32, %c0_i32_0 : i32, i32
  }
  func.func @transform_13(%arg0: i32) -> (i32, i32) {
    %c0_i32 = arith.constant 0 : i32
    %c0_i32_0 = arith.constant 0 : i32
    return %arg0, %c0_i32 : i32, i32
  }
}

</mosaic_0001>

<llo_original>
// kernel: tile.24
$region0: #{tile.24}
  %s0 = inlined_call_operand.vmem [shape: f32[16,16], index: 0, kind: input, shape index: {}]
  %s1 = inlined_call_operand.vmem [shape: f32[1,256], index: 1, kind: output, shape index: {}]
  $region1: #{tile.24} parent=0
    #allocation0 [shape = 'u8[8192]{0}', space=vmem, size = 0x2000, scoped, tag = 'scoped mem for output reshape']
    %s2 = smov 3
    %v3 = vld [vmem:[%s0] ss:$8 sm:%s2]
    %vm4 = vcmask 130048
    %5 = vst.msk [vmem:[#allocation0] ss:$8 sm:$0x3] %vm4, %v3
    %s6 = scalar_lea.vmem %s0, 7
    %s7 = smov 3
    %v8 = vld [vmem:[%s6] ss:$8 sm:%s7]
    %9 = vrot.lane.b32.xlu0 %v8, 112
    %v10 = vpop.permute.xlu0 %9
    %vm11 = vcmask 1048448
    %12 = vst.msk [vmem:[#allocation0] ss:$8 sm:$0x3] %vm11, %v10
    %s13 = scalar_lea.vmem %s0, 6
    %s14 = smov 3
    %v15 = vld [vmem:[%s13] ss:$8 sm:%s14]
    %16 = vrot.lane.b32.xlu0 %v15, 96
    %v17 = vpop.permute.xlu0 %16
    %vm18 = vcmask 917248
    %19 = vst.msk [vmem:[#allocation0] ss:$8 sm:$0x3] %vm18, %v17
    %s20 = scalar_lea.vmem %s0, 5
    %s21 = smov 3
    %v22 = vld [vmem:[%s20] ss:$8 sm:%s21]
    %23 = vrot.lane.b32.xlu0 %v22, 80
    %v24 = vpop.permute.xlu0 %23
    %vm25 = vcmask 786048
    %26 = vst.msk [vmem:[#allocation0] ss:$8 sm:$0x3] %vm25, %v24
    %s27 = scalar_lea.vmem %s0, 4
    %s28 = smov 3
    %v29 = vld [vmem:[%s27] ss:$8 sm:%s28]
    %30 = vrot.lane.b32.xlu0 %v29, 64
    %v31 = vpop.permute.xlu0 %30
    %vm32 = vcmask 654848
    %33 = vst.msk [vmem:[#allocation0] ss:$8 sm:$0x3] %vm32, %v31
    %s34 = scalar_lea.vmem %s0, 3
    %s35 = smov 3
    %v36 = vld [vmem:[%s34] ss:$8 sm:%s35]
    %37 = vrot.lane.b32.xlu0 %v36, 48
    %v38 = vpop.permute.xlu0 %37
    %vm39 = vcmask 523648
    %40 = vst.msk [vmem:[#allocation0] ss:$8 sm:$0x3] %vm39, %v38
    %s41 = scalar_lea.vmem %s0, 2
    %s42 = smov 3
    %v43 = vld [vmem:[%s41] ss:$8 sm:%s42]
    %44 = vrot.lane.b32.xlu0 %v43, 32
    %v45 = vpop.permute.xlu0 %44
    %vm46 = vcmask 392448
    %47 = vst.msk [vmem:[#allocation0] ss:$8 sm:$0x3] %vm46, %v45
    %s48 = scalar_lea.vmem %s0, 1
    %s49 = smov 3
    %v50 = vld [vmem:[%s48] ss:$8 sm:%s49]
    %51 = vrot.lane.b32.xlu0 %v50, 16
    %v52 = vpop.permute.xlu0 %51
    %vm53 = vcmask 261248
    %54 = vst.msk [vmem:[#allocation0] ss:$8 sm:$0x3] %vm53, %v52
    %s56 = ssub.s32 2, 1
    %v57 = vld [vmem:[#allocation0] sm:%s56]
    %s59 = ssub.s32 2, 1
    %60 = vst [vmem:[%s1] sm:%s59] %v57
    %s61 = scalar_lea.vmem [#allocation0], 8
    %v62 = vld [vmem:[%s61] sm:%s56]
    %s64 = ssub.s32 2, 1
    %s65 = scalar_lea.vmem %s1, 1
    %66 = vst [vmem:[%s65] sm:%s64] %v62

// kernel: tile.28
$region0: #{tile.28}
  #allocation0 [shape = 's32[1]{0}', space=sflag, size = 0x4, scoped, tag = 'scoped memory for tile.28']
  %s0 = inlined_call_operand.vmem [shape: f32[4], index: 0, kind: input, shape index: {}]
  %s1 = inlined_call_operand.vmem [shape: f32[8,4], index: 1, kind: output, shape index: {}]
  // Predicated region
  $region2: #{tile.28} parent=0 // pred_check
    _
  $region3: #{tile.28} parent=0 // pred_check_branch
    %3 = sbr.rel (0) target = $region5
  $region4: #{tile.28} parent=0 // pred_region
    _
  $region5: #{tile.28} parent=0 // pred_fallthru
    _
  %v4 = vld [vmem:[%s0] ss:$0 sm:$0xff]
  %5 = vst [vmem:[%s1] sm:$0xff] %v4

// kernel: tile.29
$region0: #{tile.29}
  %s0 = inlined_call_operand.vmem [shape: f32[8,4], index: 0, kind: input, shape index: {}]
  %s1 = inlined_call_operand.vmem [shape: f32[1,32], index: 1, kind: output, shape index: {}]
  $region1: #{tile.29} parent=0
    #allocation0 [shape = 'u8[4096]{0}', space=vmem, size = 0x1000, scoped, tag = 'scoped mem for output reshape']
    %v2 = vld [vmem:[%s0] sm:$0x1]
    %vm3 = vcmask 31744
    %4 = vst.msk [vmem:[#allocation0] sm:$0x1] %vm3, %v2
    %s5 = scalar_lea.vmem %s0, 7
    %v6 = vld [vmem:[%s5] sm:$0x1]
    %7 = vrot.lane.b32.xlu0 %v6, 28
    %v8 = vpop.permute.xlu0 %7
    %vm9 = vcmask 261344
    %10 = vst.msk [vmem:[#allocation0] sm:$0x1] %vm9, %v8
    %s11 = scalar_lea.vmem %s0, 6
    %v12 = vld [vmem:[%s11] sm:$0x1]
    %13 = vrot.lane.b32.xlu0 %v12, 24
    %v14 = vpop.permute.xlu0 %13
    %vm15 = vcmask 228544
    %16 = vst.msk [vmem:[#allocation0] sm:$0x1] %vm15, %v14
    %s17 = scalar_lea.vmem %s0, 5
    %v18 = vld [vmem:[%s17] sm:$0x1]
    %19 = vrot.lane.b32.xlu0 %v18, 20
    %v20 = vpop.permute.xlu0 %19
    %vm21 = vcmask 195744
    %22 = vst.msk [vmem:[#allocation0] sm:$0x1] %vm21, %v20
    %s23 = scalar_lea.vmem %s0, 4
    %v24 = vld [vmem:[%s23] sm:$0x1]
    %25 = vrot.lane.b32.xlu0 %v24, 16
    %v26 = vpop.permute.xlu0 %25
    %vm27 = vcmask 162944
    %28 = vst.msk [vmem:[#allocation0] sm:$0x1] %vm27, %v26
    %s29 = scalar_lea.vmem %s0, 3
    %v30 = vld [vmem:[%s29] sm:$0x1]
    %31 = vrot.lane.b32.xlu0 %v30, 12
    %v32 = vpop.permute.xlu0 %31
    %vm33 = vcmask 130144
    %34 = vst.msk [vmem:[#allocation0] sm:$0x1] %vm33, %v32
    %s35 = scalar_lea.vmem %s0, 2
    %v36 = vld [vmem:[%s35] sm:$0x1]
    %37 = vrot.lane.b32.xlu0 %v36, 8
    %v38 = vpop.permute.xlu0 %37
    %vm39 = vcmask 97344
    %40 = vst.msk [vmem:[#allocation0] sm:$0x1] %vm39, %v38
    %s41 = scalar_lea.vmem %s0, 1
    %v42 = vld [vmem:[%s41] sm:$0x1]
    %43 = vrot.lane.b32.xlu0 %v42, 4
    %v44 = vpop.permute.xlu0 %43
    %vm45 = vcmask 64544
    %46 = vst.msk [vmem:[#allocation0] sm:$0x1] %vm45, %v44
    %s48 = ssub.s32 2, 1
    %v49 = vld [vmem:[#allocation0] sm:%s48]
    %s51 = ssub.s32 2, 1
    %52 = vst [vmem:[%s1] sm:%s51] %v49

// kernel: tile.34
$region0: #{tile.34}
  %s0 = inlined_call_operand.vmem [shape: f32[8,16], index: 0, kind: input, shape index: {}]
  %s1 = inlined_call_operand.vmem [shape: f32[1,128], index: 1, kind: output, shape index: {}]
  $region1: #{tile.34} parent=0
    #allocation0 [shape = 'u8[4096]{0}', space=vmem, size = 0x1000, scoped, tag = 'scoped mem for output reshape']
    %v2 = vld [vmem:[%s0] sm:$0x1]
    %vm3 = vcmask 130048
    %4 = vst.msk [vmem:[#allocation0] sm:$0x1] %vm3, %v2
    %s5 = scalar_lea.vmem %s0, 7
    %v6 = vld [vmem:[%s5] sm:$0x1]
    %7 = vrot.lane.b32.xlu0 %v6, 112
    %v8 = vpop.permute.xlu0 %7
    %vm9 = vcmask 1048448
    %10 = vst.msk [vmem:[#allocation0] sm:$0x1] %vm9, %v8
    %s11 = scalar_lea.vmem %s0, 6
    %v12 = vld [vmem:[%s11] sm:$0x1]
    %13 = vrot.lane.b32.xlu0 %v12, 96
    %v14 = vpop.permute.xlu0 %13
    %vm15 = vcmask 917248
    %16 = vst.msk [vmem:[#allocation0] sm:$0x1] %vm15, %v14
    %s17 = scalar_lea.vmem %s0, 5
    %v18 = vld [vmem:[%s17] sm:$0x1]
    %19 = vrot.lane.b32.xlu0 %v18, 80
    %v20 = vpop.permute.xlu0 %19
    %vm21 = vcmask 786048
    %22 = vst.msk [vmem:[#allocation0] sm:$0x1] %vm21, %v20
    %s23 = scalar_lea.vmem %s0, 4
    %v24 = vld [vmem:[%s23] sm:$0x1]
    %25 = vrot.lane.b32.xlu0 %v24, 64
    %v26 = vpop.permute.xlu0 %25
    %vm27 = vcmask 654848
    %28 = vst.msk [vmem:[#allocation0] sm:$0x1] %vm27, %v26
    %s29 = scalar_lea.vmem %s0, 3
    %v30 = vld [vmem:[%s29] sm:$0x1]
    %31 = vrot.lane.b32.xlu0 %v30, 48
    %v32 = vpop.permute.xlu0 %31
    %vm33 = vcmask 523648
    %34 = vst.msk [vmem:[#allocation0] sm:$0x1] %vm33, %v32
    %s35 = scalar_lea.vmem %s0, 2
    %v36 = vld [vmem:[%s35] sm:$0x1]
    %37 = vrot.lane.b32.xlu0 %v36, 32
    %v38 = vpop.permute.xlu0 %37
    %vm39 = vcmask 392448
    %40 = vst.msk [vmem:[#allocation0] sm:$0x1] %vm39, %v38
    %s41 = scalar_lea.vmem %s0, 1
    %v42 = vld [vmem:[%s41] sm:$0x1]
    %43 = vrot.lane.b32.xlu0 %v42, 16
    %v44 = vpop.permute.xlu0 %43
    %vm45 = vcmask 261248
    %46 = vst.msk [vmem:[#allocation0] sm:$0x1] %vm45, %v44
    %s48 = ssub.s32 2, 1
    %v49 = vld [vmem:[#allocation0] sm:%s48]
    %s51 = ssub.s32 2, 1
    %52 = vst [vmem:[%s1] sm:%s51] %v49

// kernel: conv_ae_forward.1
$region0: #{conv_ae_forward.1}
  #allocation0 [shape = 'u32[]', space=smem, size = 0x4, offset = 0x4, fixed_abs, tag = 'smem constant byte address 0x4 - core index']
  #allocation1 [shape = 'u32[72,128]{1,0:T(1,128)}', space=vmem, size = 0x9000, scoped, tag = 'internal scratch']
  %s0 = inlined_call_operand.vmem [shape: f32[16,16,16], index: 0, kind: input, shape index: {}]
  %s1 = inlined_call_operand.vmem [shape: bf16[48,256], index: 1, kind: input, shape index: {}]
  %s2 = inlined_call_operand.vmem [shape: f32[1,256], index: 2, kind: input, shape index: {}]
  %s3 = inlined_call_operand.vmem [shape: bf16[384,32], index: 3, kind: input, shape index: {}]
  %s4 = inlined_call_operand.vmem [shape: f32[1,32], index: 4, kind: input, shape index: {}]
  %s5 = inlined_call_operand.vmem [shape: bf16[256,128], index: 5, kind: input, shape index: {}]
  %s6 = inlined_call_operand.vmem [shape: bf16[256,128], index: 6, kind: input, shape index: {}]
  %s7 = inlined_call_operand.vmem [shape: bf16[32,16], index: 7, kind: input, shape index: {}]
  %s8 = inlined_call_operand.vmem [shape: bf16[32,16], index: 8, kind: input, shape index: {}]
  %s9 = inlined_call_operand.vmem [shape: bf16[2,16,128], index: 9, kind: input, shape index: {}]
  %s10 = inlined_call_operand.vmem [shape: f32[1,128], index: 10, kind: input, shape index: {}]
  %s11 = inlined_call_operand.vmem [shape: bf16[128,32], index: 11, kind: input, shape index: {}]
  %s12 = inlined_call_operand.vmem [shape: f32[1,32], index: 12, kind: input, shape index: {}]
  %s13 = inlined_call_operand.vmem [shape: f32[16,256], index: 13, kind: output, shape index: {}]
  %s14 = sld [smem:[#allocation0]]
  $region85: #{conv_ae_forward.1} parent=0
    _
  %s16 = ssub.s32 1, %s14
  %s17 = scalar_select 0, %s16, %s14
  loop: start=0, step=1, limit=4
  $region2: #{conv_ae_forward.1} parent=0 // loop_pre_header
    _
  $region3: #{conv_ae_forward.1} parent=0 // loop_header
    %s19 = sphi 0, %s23
    %p20 = scmp.ge.s32.totalorder %s19, 4
    %s29 = sphi 0, %s31
    %s32 = sphi 0, %s29
    %s33 = sphi 0, %s32
    %s49 = sphi 0, %s33
    %s53 = sphi 0, %s53
    %s55 = sphi 0, %s53
    %s56 = sphi 0, %s55
    %s70 = sphi 0, %s56
    %s74 = sphi 0, %s74
    %s76 = sphi 0, %s74
    %s77 = sphi 0, %s76
    %s91 = sphi 0, %s77
    %s95 = sphi 0, %s95
    %s97 = sphi 0, %s95
    %s98 = sphi 0, %s97
    %s112 = sphi 0, %s98
    %s116 = sphi 0, %s116
    %s118 = sphi 0, %s116
    %s119 = sphi 0, %s118
    %s133 = sphi 0, %s119
    %s137 = sphi 0, %s137
    %s139 = sphi 0, %s137
    %s140 = sphi 0, %s139
    %s154 = sphi 0, %s140
    %s158 = sphi 0, %s158
    %s160 = sphi 0, %s158
    %s161 = sphi 0, %s160
    %s175 = sphi 0, %s161
    %s179 = sphi 0, %s179
    %s181 = sphi 0, %s179
    %s182 = sphi 0, %s181
    %s196 = sphi 0, %s182
    %s200 = sphi 0, %s200
    %s202 = sphi 0, %s200
    %s203 = sphi 0, %s202
    %s217 = sphi 0, %s203
    %s221 = sphi 0, %s221
    %s223 = sphi 0, %s221
    %s224 = sphi 0, %s223
    %s238 = sphi 0, %s224
    %s242 = sphi 0, %s242
    %s244 = sphi 0, %s242
    %s245 = sphi 0, %s244
    %s259 = sphi 0, %s245
    %s263 = sphi 0, %s263
    %s265 = sphi 0, %s263
    %s266 = sphi 0, %s265
    %s280 = sphi 0, %s266
    %s284 = sphi 0, %s284
    %s286 = sphi 0, %s284
    %s287 = sphi 0, %s286
    %s301 = sphi 0, %s287
    %s307 = sphi 0, %s309
    %s310 = sphi 0, %s307
    %s311 = sphi 0, %s310
    %s327 = sphi 0, %s311
  $region4: #{conv_ae_forward.1} parent=0 // loop_header_branch
    %22 = sbr.rel (%p20) target = $region8
  $region5: #{conv_ae_forward.1} parent=0 // loop_body
    %s24 = ssub.s32 %s19, 1
    %s25 = ssub.s32 %s19, 2
    %s26 = sadd.s32 %s19, 1
    %s27 = ssub.s32 %s19, %s26
    %p28 = scmp.eq.s32.totalorder %s27, 0
    %s30 = sadd.s32 %s29, 1
    %s31 = scalar_select %p28, %s29, %s30
    %p34 = pneg %p28
    %p35 = scmp.eq.s32.totalorder %s19, 1
    %p36 = por %p34, %p35
    %p37 = scmp.ne.s32.totalorder %s29, %s32
    %p38 = scmp.eq.s32.totalorder %s19, 0
    %p39 = por %p37, %p38
    %p40 = scmp.ne.s32.totalorder %s29, %s32
    %p41 = scmp.eq.s32.totalorder %s24, 1
    %p42 = por %p40, %p41
    %p43 = scmp.ne.s32.totalorder %s32, %s33
    %p44 = scmp.eq.s32.totalorder %s24, 0
    %p45 = por %p43, %p44
    %p46 = scmp.ne.s32.totalorder %s32, %s33
    %p47 = scmp.eq.s32.totalorder %s25, 1
    %p48 = por %p46, %p47
    %p50 = scmp.ne.s32.totalorder %s33, %s49
    %p51 = scmp.eq.s32.totalorder %s25, 0
    %p52 = por %p50, %p51
    %s54 = sadd.s32 %s53, 1
    %p57 = scmp.eq.s32.totalorder %s19, 1
    %p58 = scmp.ne.s32.totalorder %s53, %s55
    %p59 = scmp.eq.s32.totalorder %s19, 0
    %p60 = por %p58, %p59
    %p61 = scmp.ne.s32.totalorder %s53, %s55
    %p62 = scmp.eq.s32.totalorder %s24, 1
    %p63 = por %p61, %p62
    %p64 = scmp.ne.s32.totalorder %s55, %s56
    %p65 = scmp.eq.s32.totalorder %s24, 0
    %p66 = por %p64, %p65
    %p67 = scmp.ne.s32.totalorder %s55, %s56
    %p68 = scmp.eq.s32.totalorder %s25, 1
    %p69 = por %p67, %p68
    %p71 = scmp.ne.s32.totalorder %s56, %s70
    %p72 = scmp.eq.s32.totalorder %s25, 0
    %p73 = por %p71, %p72
    %s75 = sadd.s32 %s74, 1
    %p78 = scmp.eq.s32.totalorder %s19, 1
    %p79 = scmp.ne.s32.totalorder %s74, %s76
    %p80 = scmp.eq.s32.totalorder %s19, 0
    %p81 = por %p79, %p80
    %p82 = scmp.ne.s32.totalorder %s74, %s76
    %p83 = scmp.eq.s32.totalorder %s24, 1
    %p84 = por %p82, %p83
    %p85 = scmp.ne.s32.totalorder %s76, %s77
    %p86 = scmp.eq.s32.totalorder %s24, 0
    %p87 = por %p85, %p86
    %p88 = scmp.ne.s32.totalorder %s76, %s77
    %p89 = scmp.eq.s32.totalorder %s25, 1
    %p90 = por %p88, %p89
    %p92 = scmp.ne.s32.totalorder %s77, %s91
    %p93 = scmp.eq.s32.totalorder %s25, 0
    %p94 = por %p92, %p93
    %s96 = sadd.s32 %s95, 1
    %p99 = scmp.eq.s32.totalorder %s19, 1
    %p100 = scmp.ne.s32.totalorder %s95, %s97
    %p101 = scmp.eq.s32.totalorder %s19, 0
    %p102 = por %p100, %p101
    %p103 = scmp.ne.s32.totalorder %s95, %s97
    %p104 = scmp.eq.s32.totalorder %s24, 1
    %p105 = por %p103, %p104
    %p106 = scmp.ne.s32.totalorder %s97, %s98
    %p107 = scmp.eq.s32.totalorder %s24, 0
    %p108 = por %p106, %p107
    %p109 = scmp.ne.s32.totalorder %s97, %s98
    %p110 = scmp.eq.s32.totalorder %s25, 1
    %p111 = por %p109, %p110
    %p113 = scmp.ne.s32.totalorder %s98, %s112
    %p114 = scmp.eq.s32.totalorder %s25, 0
    %p115 = por %p113, %p114
    %s117 = sadd.s32 %s116, 1
    %p120 = scmp.eq.s32.totalorder %s19, 1
    %p121 = scmp.ne.s32.totalorder %s116, %s118
    %p122 = scmp.eq.s32.totalorder %s19, 0
    %p123 = por %p121, %p122
    %p124 = scmp.ne.s32.totalorder %s116, %s118
    %p125 = scmp.eq.s32.totalorder %s24, 1
    %p126 = por %p124, %p125
    %p127 = scmp.ne.s32.totalorder %s118, %s119
    %p128 = scmp.eq.s32.totalorder %s24, 0
    %p129 = por %p127, %p128
    %p130 = scmp.ne.s32.totalorder %s118, %s119
    %p131 = scmp.eq.s32.totalorder %s25, 1
    %p132 = por %p130, %p131
    %p134 = scmp.ne.s32.totalorder %s119, %s133
    %p135 = scmp.eq.s32.totalorder %s25, 0
    %p136 = por %p134, %p135
    %s138 = sadd.s32 %s137, 1
    %p141 = scmp.eq.s32.totalorder %s19, 1
    %p142 = scmp.ne.s32.totalorder %s137, %s139
    %p143 = scmp.eq.s32.totalorder %s19, 0
    %p144 = por %p142, %p143
    %p145 = scmp.ne.s32.totalorder %s137, %s139
    %p146 = scmp.eq.s32.totalorder %s24, 1
    %p147 = por %p145, %p146
    %p148 = scmp.ne.s32.totalorder %s139, %s140
    %p149 = scmp.eq.s32.totalorder %s24, 0
    %p150 = por %p148, %p149
    %p151 = scmp.ne.s32.totalorder %s139, %s140
    %p152 = scmp.eq.s32.totalorder %s25, 1
    %p153 = por %p151, %p152
    %p155 = scmp.ne.s32.totalorder %s140, %s154
    %p156 = scmp.eq.s32.totalorder %s25, 0
    %p157 = por %p155, %p156
    %s159 = sadd.s32 %s158, 1
    %p162 = scmp.eq.s32.totalorder %s19, 1
    %p163 = scmp.ne.s32.totalorder %s158, %s160
    %p164 = scmp.eq.s32.totalorder %s19, 0
    %p165 = por %p163, %p164
    %p166 = scmp.ne.s32.totalorder %s158, %s160
    %p167 = scmp.eq.s32.totalorder %s24, 1
    %p168 = por %p166, %p167
    %p169 = scmp.ne.s32.totalorder %s160, %s161
    %p170 = scmp.eq.s32.totalorder %s24, 0
    %p171 = por %p169, %p170
    %p172 = scmp.ne.s32.totalorder %s160, %s161
    %p173 = scmp.eq.s32.totalorder %s25, 1
    %p174 = por %p172, %p173
    %p176 = scmp.ne.s32.totalorder %s161, %s175
    %p177 = scmp.eq.s32.totalorder %s25, 0
    %p178 = por %p176, %p177
    %s180 = sadd.s32 %s179, 1
    %p183 = scmp.eq.s32.totalorder %s19, 1
    %p184 = scmp.ne.s32.totalorder %s179, %s181
    %p185 = scmp.eq.s32.totalorder %s19, 0
    %p186 = por %p184, %p185
    %p187 = scmp.ne.s32.totalorder %s179, %s181
    %p188 = scmp.eq.s32.totalorder %s24, 1
    %p189 = por %p187, %p188
    %p190 = scmp.ne.s32.totalorder %s181, %s182
    %p191 = scmp.eq.s32.totalorder %s24, 0
    %p192 = por %p190, %p191
    %p193 = scmp.ne.s32.totalorder %s181, %s182
    %p194 = scmp.eq.s32.totalorder %s25, 1
    %p195 = por %p193, %p194
    %p197 = scmp.ne.s32.totalorder %s182, %s196
    %p198 = scmp.eq.s32.totalorder %s25, 0
    %p199 = por %p197, %p198
    %s201 = sadd.s32 %s200, 1
    %p204 = scmp.eq.s32.totalorder %s19, 1
    %p205 = scmp.ne.s32.totalorder %s200, %s202
    %p206 = scmp.eq.s32.totalorder %s19, 0
    %p207 = por %p205, %p206
    %p208 = scmp.ne.s32.totalorder %s200, %s202
    %p209 = scmp.eq.s32.totalorder %s24, 1
    %p210 = por %p208, %p209
    %p211 = scmp.ne.s32.totalorder %s202, %s203
    %p212 = scmp.eq.s32.totalorder %s24, 0
    %p213 = por %p211, %p212
    %p214 = scmp.ne.s32.totalorder %s202, %s203
    %p215 = scmp.eq.s32.totalorder %s25, 1
    %p216 = por %p214, %p215
    %p218 = scmp.ne.s32.totalorder %s203, %s217
    %p219 = scmp.eq.s32.totalorder %s25, 0
    %p220 = por %p218, %p219
    %s222 = sadd.s32 %s221, 1
    %p225 = scmp.eq.s32.totalorder %s19, 1
    %p226 = scmp.ne.s32.totalorder %s221, %s223
    %p227 = scmp.eq.s32.totalorder %s19, 0
    %p228 = por %p226, %p227
    %p229 = scmp.ne.s32.totalorder %s221, %s223
    %p230 = scmp.eq.s32.totalorder %s24, 1
    %p231 = por %p229, %p230
    %p232 = scmp.ne.s32.totalorder %s223, %s224
    %p233 = scmp.eq.s32.totalorder %s24, 0
    %p234 = por %p232, %p233
    %p235 = scmp.ne.s32.totalorder %s223, %s224
    %p236 = scmp.eq.s32.totalorder %s25, 1
    %p237 = por %p235, %p236
    %p239 = scmp.ne.s32.totalorder %s224, %s238
    %p240 = scmp.eq.s32.totalorder %s25, 0
    %p241 = por %p239, %p240
    %s243 = sadd.s32 %s242, 1
    %p246 = scmp.eq.s32.totalorder %s19, 1
    %p247 = scmp.ne.s32.totalorder %s242, %s244
    %p248 = scmp.eq.s32.totalorder %s19, 0
    %p249 = por %p247, %p248
    %p250 = scmp.ne.s32.totalorder %s242, %s244
    %p251 = scmp.eq.s32.totalorder %s24, 1
    %p252 = por %p250, %p251
    %p253 = scmp.ne.s32.totalorder %s244, %s245
    %p254 = scmp.eq.s32.totalorder %s24, 0
    %p255 = por %p253, %p254
    %p256 = scmp.ne.s32.totalorder %s244, %s245
    %p257 = scmp.eq.s32.totalorder %s25, 1
    %p258 = por %p256, %p257
    %p260 = scmp.ne.s32.totalorder %s245, %s259
    %p261 = scmp.eq.s32.totalorder %s25, 0
    %p262 = por %p260, %p261
    %s264 = sadd.s32 %s263, 1
    %p267 = scmp.eq.s32.totalorder %s19, 1
    %p268 = scmp.ne.s32.totalorder %s263, %s265
    %p269 = scmp.eq.s32.totalorder %s19, 0
    %p270 = por %p268, %p269
    %p271 = scmp.ne.s32.totalorder %s263, %s265
    %p272 = scmp.eq.s32.totalorder %s24, 1
    %p273 = por %p271, %p272
    %p274 = scmp.ne.s32.totalorder %s265, %s266
    %p275 = scmp.eq.s32.totalorder %s24, 0
    %p276 = por %p274, %p275
    %p277 = scmp.ne.s32.totalorder %s265, %s266
    %p278 = scmp.eq.s32.totalorder %s25, 1
    %p279 = por %p277, %p278
    %p281 = scmp.ne.s32.totalorder %s266, %s280
    %p282 = scmp.eq.s32.totalorder %s25, 0
    %p283 = por %p281, %p282
    %s285 = sadd.s32 %s284, 1
    %p288 = scmp.eq.s32.totalorder %s19, 1
    %p289 = scmp.ne.s32.totalorder %s284, %s286
    %p290 = scmp.eq.s32.totalorder %s19, 0
    %p291 = por %p289, %p290
    %p292 = scmp.ne.s32.totalorder %s284, %s286
    %p293 = scmp.eq.s32.totalorder %s24, 1
    %p294 = por %p292, %p293
    %p295 = scmp.ne.s32.totalorder %s286, %s287
    %p296 = scmp.eq.s32.totalorder %s24, 0
    %p297 = por %p295, %p296
    %p298 = scmp.ne.s32.totalorder %s286, %s287
    %p299 = scmp.eq.s32.totalorder %s25, 1
    %p300 = por %p298, %p299
    %p302 = scmp.ne.s32.totalorder %s287, %s301
    %p303 = scmp.eq.s32.totalorder %s25, 0
    %p304 = por %p302, %p303
    %s305 = ssub.s32 %s19, %s26
    %p306 = scmp.eq.s32.totalorder %s305, 0
    %s308 = sadd.s32 %s307, 1
    %s309 = scalar_select %p306, %s307, %s308
    %p312 = pneg %p306
    %p313 = scmp.eq.s32.totalorder %s19, 1
    %p314 = por %p312, %p313
    %p315 = scmp.ne.s32.totalorder %s307, %s310
    %p316 = scmp.eq.s32.totalorder %s19, 0
    %p317 = por %p315, %p316
    %p318 = scmp.ne.s32.totalorder %s307, %s310
    %p319 = scmp.eq.s32.totalorder %s24, 1
    %p320 = por %p318, %p319
    %p321 = scmp.ne.s32.totalorder %s310, %s311
    %p322 = scmp.eq.s32.totalorder %s24, 0
    %p323 = por %p321, %p322
    %p324 = scmp.ne.s32.totalorder %s310, %s311
    %p325 = scmp.eq.s32.totalorder %s25, 1
    %p326 = por %p324, %p325
    %p328 = scmp.ne.s32.totalorder %s311, %s327
    %p329 = scmp.eq.s32.totalorder %s25, 0
    %p330 = por %p328, %p329
    %p331 = scmp.le.s32.totalorder 1, %s19
    %p332 = scmp.lt.s32.totalorder %s19, 3
    %p333 = pnand %p331, %p332
    %p334 = pneg %p333
    // Predicated region
    $region9: #{conv_ae_forward.1} parent=5 // pred_check
      _
    $region10: #{conv_ae_forward.1} parent=5 // pred_check_branch
      %336 = sbr.rel (%p333) target = $region12
    $region11: #{conv_ae_forward.1} parent=5 // pred_region
      %s337 = ssub.s32 %s19, 1
      // Predicated region
      $region13: #{conv_ae_forward.1} parent=11 // pred_check
        %p338 = pneg %p66
      $region14: #{conv_ae_forward.1} parent=11 // pred_check_branch
        %340 = sbr.rel (%p338) target = $region16
      $region15: #{conv_ae_forward.1} parent=11 // pred_region
        _
      $region16: #{conv_ae_forward.1} parent=11 // pred_fallthru
        _
      // Predicated region
      $region17: #{conv_ae_forward.1} parent=11 // pred_check
        %p341 = pneg %p87
      $region18: #{conv_ae_forward.1} parent=11 // pred_check_branch
        %343 = sbr.rel (%p341) target = $region20
      $region19: #{conv_ae_forward.1} parent=11 // pred_region
        _
      $region20: #{conv_ae_forward.1} parent=11 // pred_fallthru
        _
      // Predicated region
      $region21: #{conv_ae_forward.1} parent=11 // pred_check
        %p344 = pneg %p108
      $region22: #{conv_ae_forward.1} parent=11 // pred_check_branch
        %346 = sbr.rel (%p344) target = $region24
      $region23: #{conv_ae_forward.1} parent=11 // pred_region
        _
      $region24: #{conv_ae_forward.1} parent=11 // pred_fallthru
        _
      // Predicated region
      $region25: #{conv_ae_forward.1} parent=11 // pred_check
        %p347 = pneg %p129
      $region26: #{conv_ae_forward.1} parent=11 // pred_check_branch
        %349 = sbr.rel (%p347) target = $region28
      $region27: #{conv_ae_forward.1} parent=11 // pred_region
        _
      $region28: #{conv_ae_forward.1} parent=11 // pred_fallthru
        _
      // Predicated region
      $region29: #{conv_ae_forward.1} parent=11 // pred_check
        %p350 = pneg %p150
      $region30: #{conv_ae_forward.1} parent=11 // pred_check_branch
        %352 = sbr.rel (%p350) target = $region32
      $region31: #{conv_ae_forward.1} parent=11 // pred_region
        _
      $region32: #{conv_ae_forward.1} parent=11 // pred_fallthru
        _
      // Predicated region
      $region33: #{conv_ae_forward.1} parent=11 // pred_check
        %p353 = pneg %p171
      $region34: #{conv_ae_forward.1} parent=11 // pred_check_branch
        %355 = sbr.rel (%p353) target = $region36
      $region35: #{conv_ae_forward.1} parent=11 // pred_region
        _
      $region36: #{conv_ae_forward.1} parent=11 // pred_fallthru
        _
      // Predicated region
      $region37: #{conv_ae_forward.1} parent=11 // pred_check
        %p356 = pneg %p192
      $region38: #{conv_ae_forward.1} parent=11 // pred_check_branch
        %358 = sbr.rel (%p356) target = $region40
      $region39: #{conv_ae_forward.1} parent=11 // pred_region
        _
      $region40: #{conv_ae_forward.1} parent=11 // pred_fallthru
        _
      // Predicated region
      $region41: #{conv_ae_forward.1} parent=11 // pred_check
        %p359 = pneg %p213
      $region42: #{conv_ae_forward.1} parent=11 // pred_check_branch
        %361 = sbr.rel (%p359) target = $region44
      $region43: #{conv_ae_forward.1} parent=11 // pred_region
        _
      $region44: #{conv_ae_forward.1} parent=11 // pred_fallthru
        _
      // Predicated region
      $region45: #{conv_ae_forward.1} parent=11 // pred_check
        %p362 = pneg %p234
      $region46: #{conv_ae_forward.1} parent=11 // pred_check_branch
        %364 = sbr.rel (%p362) target = $region48
      $region47: #{conv_ae_forward.1} parent=11 // pred_region
        _
      $region48: #{conv_ae_forward.1} parent=11 // pred_fallthru
        _
      // Predicated region
      $region49: #{conv_ae_forward.1} parent=11 // pred_check
        %p365 = pneg %p255
      $region50: #{conv_ae_forward.1} parent=11 // pred_check_branch
        %367 = sbr.rel (%p365) target = $region52
      $region51: #{conv_ae_forward.1} parent=11 // pred_region
        _
      $region52: #{conv_ae_forward.1} parent=11 // pred_fallthru
        _
      // Predicated region
      $region53: #{conv_ae_forward.1} parent=11 // pred_check
        %p368 = pneg %p276
      $region54: #{conv_ae_forward.1} parent=11 // pred_check_branch
        %370 = sbr.rel (%p368) target = $region56
      $region55: #{conv_ae_forward.1} parent=11 // pred_region
        _
      $region56: #{conv_ae_forward.1} parent=11 // pred_fallthru
        _
      // Predicated region
      $region57: #{conv_ae_forward.1} parent=11 // pred_check
        %p371 = pneg %p297
      $region58: #{conv_ae_forward.1} parent=11 // pred_check_branch
        %373 = sbr.rel (%p371) target = $region60
      $region59: #{conv_ae_forward.1} parent=11 // pred_region
        _
      $region60: #{conv_ae_forward.1} parent=11 // pred_fallthru
        _
    $region12: #{conv_ae_forward.1} parent=5 // pred_fallthru
      _
    %p374 = scmp.lt.s32.totalorder %s19, 2
    // Predicated region
    $region61: #{conv_ae_forward.1} parent=5 // pred_check
      %p375 = pneg %p374
    $region62: #{conv_ae_forward.1} parent=5 // pred_check_branch
      %377 = sbr.rel (%p375) target = $region64
    $region63: #{conv_ae_forward.1} parent=5 // pred_region
      // Predicated region
      $region65: #{conv_ae_forward.1} parent=63 // pred_check
        %p378 = pneg %p39
      $region66: #{conv_ae_forward.1} parent=63 // pred_check_branch
        %380 = sbr.rel (%p378) target = $region68
      $region67: #{conv_ae_forward.1} parent=63 // pred_region
        %s381 = smul.u32 8, %s19
        %p382 = scmp.lt.s32.totalorder %s381, 15
        %s383 = scalar_select %p382, %s381, 15
        %s384 = smul.addr %s383, 2
        %s385 = smul.addr %s384, 8
        %s386 = scalar_lea.vmem %s0, %s385
        %s387 = smul.u32 8, %s19
      $region68: #{conv_ae_forward.1} parent=63 // pred_fallthru
        _
    $region64: #{conv_ae_forward.1} parent=5 // pred_fallthru
      _
    %p388 = scmp.le.s32.totalorder 1, %s19
    %p389 = scmp.lt.s32.totalorder %s19, 3
    %p390 = pnand %p388, %p389
    %p391 = pneg %p390
    // Predicated region
    $region69: #{conv_ae_forward.1} parent=5 // pred_check
      _
    $region70: #{conv_ae_forward.1} parent=5 // pred_check_branch
      %393 = sbr.rel (%p390) target = $region72
    $region71: #{conv_ae_forward.1} parent=5 // pred_region
      %s394 = ssub.s32 %s19, 1
      %s395 = smul.u32 8, %s24
      %p396 = scmp.lt.s32.totalorder %s395, 15
      %s397 = scalar_select %p396, %s395, 15
      %s398 = smul.addr %s397, 2
      %s399 = smul.addr %s398, 8
      %s400 = scalar_lea.vmem %s0, %s399
      %p401 = pneg %p45
      %p402 = pneg %p42
      %p403 = pneg %p66
      %p404 = pneg %p63
      %p405 = pneg %p87
      %p406 = pneg %p84
      %p407 = pneg %p108
      %p408 = pneg %p105
      %p409 = pneg %p129
      %p410 = pneg %p126
      %p411 = pneg %p150
      %p412 = pneg %p147
      %p413 = pneg %p171
      %p414 = pneg %p168
      %p415 = pneg %p192
      %p416 = pneg %p189
      %p417 = pneg %p213
      %p418 = pneg %p210
      %p419 = pneg %p234
      %p420 = pneg %p231
      %p421 = pneg %p255
      %p422 = pneg %p252
      %p423 = pneg %p276
      %p424 = pneg %p273
      %p425 = pneg %p297
      %p426 = pneg %p294
      %p427 = pneg %p323
      %p428 = pneg %p320
      %p429 = scmp.lt.s32.totalorder %s24, 1
      %s430 = scalar_select %p429, %s24, 1
      %s431 = smul.addr %s430, 2
      %s432 = smul.addr %s431, 8
      %s433 = scalar_lea.vmem %s13, %s432
      %s434 = smul.u32 8, %s24
      %p435 = scmp.lt.s32.totalorder %s434, 15
      %s436 = scalar_select %p435, %s434, 15
      %s437 = smul.addr %s436, 2
      %s438 = smul.addr %s437, 8
      %s439 = scalar_lea.vmem %s0, %s438
      %s440 = smul.u32 8, %s24
      %p441 = scmp.lt.s32.totalorder %s24, 1
      %s442 = scalar_select %p441, %s24, 1
      %s443 = smul.addr %s442, 2
      %s444 = smul.addr %s443, 8
      %s445 = scalar_lea.vmem %s13, %s444
      %v447 = vld [vmem:[%s439] sm:$0xff]
      %v448 = vld [vmem:[%s439 + $0x8] sm:$0xff]
      %v449 = vld [vmem:[%s439 + $0x10] sm:$0xff]
      %v450 = vld [vmem:[%s439 + $0x18] sm:$0xff]
      %v451 = vld [vmem:[%s439 + $0x20] sm:$0xff]
      %v452 = vld [vmem:[%s439 + $0x28] sm:$0xff]
      %v453 = vld [vmem:[%s439 + $0x30] sm:$0xff]
      %v454 = vld [vmem:[%s439 + $0x38] sm:$0xff]
      %v455 = vld [vmem:[%s439 + $0x40] sm:$0xff]
      %v456 = vld [vmem:[%s439 + $0x48] sm:$0xff]
      %v457 = vld [vmem:[%s439 + $0x50] sm:$0xff]
      %v458 = vld [vmem:[%s439 + $0x58] sm:$0xff]
      %v459 = vld [vmem:[%s439 + $0x60] sm:$0xff]
      %v460 = vld [vmem:[%s439 + $0x68] sm:$0xff]
      %v461 = vld [vmem:[%s439 + $0x70] sm:$0xff]
      %v462 = vld [vmem:[%s439 + $0x78] sm:$0xff]
      %v463 = vld [vmem:[%s1] sm:$0xff]
      %v464 = vld [vmem:[%s1 + $0x8] sm:$0xff]
      %v465 = vld [vmem:[%s1 + $0x10] sm:$0xff]
      %v466 = vld [vmem:[%s1 + $0x18] sm:$0xff]
      %v467 = vld [vmem:[%s1 + $0x20] sm:$0xff]
      %v468 = vld [vmem:[%s1 + $0x28] sm:$0xff]
      %vm485 = vcmask 1040384
      %v486 = vrot.slane %v447, 7
      %v487 = vrot.slane %v448, 7
      %v488 = vsel %vm485, %v486, %v487
      %v489 = vrot.slane %v449, 7
      %v490 = vrot.slane %v450, 7
      %v491 = vsel %vm485, %v489, %v490
      %v492 = vrot.slane %v451, 7
      %v493 = vrot.slane %v452, 7
      %v494 = vsel %vm485, %v492, %v493
      %v495 = vrot.slane %v453, 7
      %v496 = vrot.slane %v454, 7
      %v497 = vsel %vm485, %v495, %v496
      %v498 = vrot.slane %v455, 7
      %v499 = vrot.slane %v456, 7
      %v500 = vsel %vm485, %v498, %v499
      %v501 = vrot.slane %v457, 7
      %v502 = vrot.slane %v458, 7
      %v503 = vsel %vm485, %v501, %v502
      %v504 = vrot.slane %v459, 7
      %v505 = vrot.slane %v460, 7
      %v506 = vsel %vm485, %v504, %v505
      %v507 = vrot.slane %v461, 7
      %v508 = vrot.slane %v462, 7
      %v509 = vsel %vm485, %v507, %v508
      %v526 = vsel %vm485, 0.0, %v486
      %v527 = vsel %vm485, 0.0, %v489
      %v528 = vsel %vm485, 0.0, %v492
      %v529 = vsel %vm485, 0.0, %v495
      %v530 = vsel %vm485, 0.0, %v498
      %v531 = vsel %vm485, 0.0, %v501
      %v532 = vsel %vm485, 0.0, %v504
      %v533 = vsel %vm485, 0.0, %v507
      %vm534 = vcmask 1046528
      %v535 = vrot.slane %v447, 1
      %v536 = vrot.slane %v448, 1
      %v537 = vsel %vm534, %v535, %v536
      %v538 = vrot.slane %v449, 1
      %v539 = vrot.slane %v450, 1
      %v540 = vsel %vm534, %v538, %v539
      %v541 = vrot.slane %v451, 1
      %v542 = vrot.slane %v452, 1
      %v543 = vsel %vm534, %v541, %v542
      %v544 = vrot.slane %v453, 1
      %v545 = vrot.slane %v454, 1
      %v546 = vsel %vm534, %v544, %v545
      %v547 = vrot.slane %v455, 1
      %v548 = vrot.slane %v456, 1
      %v549 = vsel %vm534, %v547, %v548
      %v550 = vrot.slane %v457, 1
      %v551 = vrot.slane %v458, 1
      %v552 = vsel %vm534, %v550, %v551
      %v553 = vrot.slane %v459, 1
      %v554 = vrot.slane %v460, 1
      %v555 = vsel %vm534, %v553, %v554
      %v556 = vrot.slane %v461, 1
      %v557 = vrot.slane %v462, 1
      %v558 = vsel %vm534, %v556, %v557
      %v575 = vsel %vm534, %v536, 0.0
      %v576 = vsel %vm534, %v539, 0.0
      %v577 = vsel %vm534, %v542, 0.0
      %v578 = vsel %vm534, %v545, 0.0
      %v579 = vsel %vm534, %v548, 0.0
      %v580 = vsel %vm534, %v551, 0.0
      %v581 = vsel %vm534, %v554, 0.0
      %v582 = vsel %vm534, %v557, 0.0
      %v583 = vpack.c.bf16 %v488, %v526
      %v584 = vpack.c.bf16 %v491, %v527
      %v585 = vpack.c.bf16 %v494, %v528
      %v586 = vpack.c.bf16 %v497, %v529
      %v587 = vpack.c.bf16 %v500, %v530
      %v588 = vpack.c.bf16 %v503, %v531
      %v589 = vpack.c.bf16 %v506, %v532
      %v590 = vpack.c.bf16 %v509, %v533
      %v591 = vpack.c.bf16 %v448, %v447
      %v592 = vpack.c.bf16 %v450, %v449
      %v593 = vpack.c.bf16 %v452, %v451
      %v594 = vpack.c.bf16 %v454, %v453
      %v595 = vpack.c.bf16 %v456, %v455
      %v596 = vpack.c.bf16 %v458, %v457
      %v597 = vpack.c.bf16 %v460, %v459
      %v598 = vpack.c.bf16 %v462, %v461
      %v601 = vunpack.c.l.b16 %v465
      %v602 = vunpack.c.h.b16 %v465
      %v603 = vunpack.c.l.b16 %v466
      %v604 = vunpack.c.h.b16 %v466
      %v605 = vpack.c.b16 %v603, %v601
      %v606 = vpack.c.b16 %v604, %v602
      %vm609 = vcmask 130048
      %v611 = vsel %vm609, %v591, 0
      %v614 = vsel %vm609, %v592, 0
      %v617 = vsel %vm609, %v593, 0
      %v620 = vsel %vm609, %v594, 0
      %v623 = vsel %vm609, %v595, 0
      %v626 = vsel %vm609, %v596, 0
      %v629 = vsel %vm609, %v597, 0
      %v632 = vsel %vm609, %v598, 0
      %634 = vmatpush.bf16.msra.mxu0 0
      %635 = vmatpush.bf16.msra.mxu0 0
      %636 = vmatpush.bf16.msra.mxu0 0
      %637 = vmatpush.bf16.msra.mxu0 0
      %638 = vmatpush.bf16.msra.mxu0 0
      %639 = vmatpush.bf16.msra.mxu0 0
      %640 = vmatpush.bf16.msra.mxu0 0
      %641 = vmatpush.bf16.msra.mxu0 %v605
      %642 = vmatmul.bf16.gmra.mxu0 %v611
      %v643 = vpop.f32.mrf.mxu0
      %v644 = vadd.f32 0.0, %v643
      %v645 = vpop.f32.mrf.mxu0
      %v646 = vadd.f32 0.0, %v645
      %647 = vmatmul.bf16.gmra.mxu0 %v614
      %v648 = vpop.f32.mrf.mxu0
      %v649 = vadd.f32 0.0, %v648
      %v650 = vpop.f32.mrf.mxu0
      %v651 = vadd.f32 0.0, %v650
      %652 = vmatmul.bf16.gmra.mxu0 %v617
      %v653 = vpop.f32.mrf.mxu0
      %v654 = vadd.f32 0.0, %v653
      %v655 = vpop.f32.mrf.mxu0
      %v656 = vadd.f32 0.0, %v655
      %657 = vmatmul.bf16.gmra.mxu0 %v620
      %v658 = vpop.f32.mrf.mxu0
      %v659 = vadd.f32 0.0, %v658
      %v660 = vpop.f32.mrf.mxu0
      %v661 = vadd.f32 0.0, %v660
      %662 = vmatmul.bf16.gmra.mxu0 %v623
      %v663 = vpop.f32.mrf.mxu0
      %v664 = vadd.f32 0.0, %v663
      %v665 = vpop.f32.mrf.mxu0
      %v666 = vadd.f32 0.0, %v665
      %667 = vmatmul.bf16.gmra.mxu0 %v626
      %v668 = vpop.f32.mrf.mxu0
      %v669 = vadd.f32 0.0, %v668
      %v670 = vpop.f32.mrf.mxu0
      %v671 = vadd.f32 0.0, %v670
      %672 = vmatmul.bf16.gmra.mxu0 %v629
      %v673 = vpop.f32.mrf.mxu0
      %v674 = vadd.f32 0.0, %v673
      %v675 = vpop.f32.mrf.mxu0
      %v676 = vadd.f32 0.0, %v675
      %677 = vmatmul.bf16.gmra.mxu0 %v632
      %v678 = vpop.f32.mrf.mxu0
      %v679 = vadd.f32 0.0, %v678
      %v680 = vpop.f32.mrf.mxu0
      %v681 = vadd.f32 0.0, %v680
      %682 = vdwg.mxu0
      %683 = vmatpush.bf16.msra.mxu0 0
      %684 = vmatpush.bf16.msra.mxu0 0
      %685 = vmatpush.bf16.msra.mxu0 0
      %686 = vmatpush.bf16.msra.mxu0 0
      %687 = vmatpush.bf16.msra.mxu0 0
      %688 = vmatpush.bf16.msra.mxu0 0
      %689 = vmatpush.bf16.msra.mxu0 0
      %690 = vmatpush.bf16.msra.mxu0 %v606
      %691 = vmatmul.bf16.gmra.mxu0 %v611
      %v692 = vpop.f32.mrf.mxu0
      %v693 = vadd.f32 0.0, %v692
      %v694 = vpop.f32.mrf.mxu0
      %v695 = vadd.f32 0.0, %v694
      %696 = vmatmul.bf16.gmra.mxu0 %v614
      %v697 = vpop.f32.mrf.mxu0
      %v698 = vadd.f32 0.0, %v697
      %v699 = vpop.f32.mrf.mxu0
      %v700 = vadd.f32 0.0, %v699
      %701 = vmatmul.bf16.gmra.mxu0 %v617
      %v702 = vpop.f32.mrf.mxu0
      %v703 = vadd.f32 0.0, %v702
      %v704 = vpop.f32.mrf.mxu0
      %v705 = vadd.f32 0.0, %v704
      %706 = vmatmul.bf16.gmra.mxu0 %v620
      %v707 = vpop.f32.mrf.mxu0
      %v708 = vadd.f32 0.0, %v707
      %v709 = vpop.f32.mrf.mxu0
      %v710 = vadd.f32 0.0, %v709
      %711 = vmatmul.bf16.gmra.mxu0 %v623
      %v712 = vpop.f32.mrf.mxu0
      %v713 = vadd.f32 0.0, %v712
      %v714 = vpop.f32.mrf.mxu0
      %v715 = vadd.f32 0.0, %v714
      %716 = vmatmul.bf16.gmra.mxu0 %v626
      %v717 = vpop.f32.mrf.mxu0
      %v718 = vadd.f32 0.0, %v717
      %v719 = vpop.f32.mrf.mxu0
      %v720 = vadd.f32 0.0, %v719
      %721 = vmatmul.bf16.gmra.mxu0 %v629
      %v722 = vpop.f32.mrf.mxu0
      %v723 = vadd.f32 0.0, %v722
      %v724 = vpop.f32.mrf.mxu0
      %v725 = vadd.f32 0.0, %v724
      %726 = vmatmul.bf16.gmra.mxu0 %v632
      %v727 = vpop.f32.mrf.mxu0
      %v728 = vadd.f32 0.0, %v727
      %v729 = vpop.f32.mrf.mxu0
      %v730 = vadd.f32 0.0, %v729
      %731 = vdwg.mxu0
      %v734 = vunpack.c.l.b16 %v463
      %v735 = vunpack.c.h.b16 %v463
      %v736 = vunpack.c.l.b16 %v464
      %v737 = vunpack.c.h.b16 %v464
      %v738 = vpack.c.b16 %v736, %v734
      %v739 = vpack.c.b16 %v737, %v735
      %v743 = vsel %vm609, %v583, 0
      %v746 = vsel %vm609, %v584, 0
      %v749 = vsel %vm609, %v585, 0
      %v752 = vsel %vm609, %v586, 0
      %v755 = vsel %vm609, %v587, 0
      %v758 = vsel %vm609, %v588, 0
      %v761 = vsel %vm609, %v589, 0
      %v764 = vsel %vm609, %v590, 0
      %766 = vmatpush.bf16.msra.mxu0 0
      %767 = vmatpush.bf16.msra.mxu0 0
      %768 = vmatpush.bf16.msra.mxu0 0
      %769 = vmatpush.bf16.msra.mxu0 0
      %770 = vmatpush.bf16.msra.mxu0 0
      %771 = vmatpush.bf16.msra.mxu0 0
      %772 = vmatpush.bf16.msra.mxu0 0
      %773 = vmatpush.bf16.msra.mxu0 %v738
      %774 = vmatmul.bf16.gmra.mxu0 %v743
      %v775 = vpop.f32.mrf.mxu0
      %v776 = vadd.f32 %v644, %v775
      %v777 = vpop.f32.mrf.mxu0
      %v778 = vadd.f32 %v646, %v777
      %779 = vmatmul.bf16.gmra.mxu0 %v746
      %v780 = vpop.f32.mrf.mxu0
      %v781 = vadd.f32 %v649, %v780
      %v782 = vpop.f32.mrf.mxu0
      %v783 = vadd.f32 %v651, %v782
      %784 = vmatmul.bf16.gmra.mxu0 %v749
      %v785 = vpop.f32.mrf.mxu0
      %v786 = vadd.f32 %v654, %v785
      %v787 = vpop.f32.mrf.mxu0
      %v788 = vadd.f32 %v656, %v787
      %789 = vmatmul.bf16.gmra.mxu0 %v752
      %v790 = vpop.f32.mrf.mxu0
      %v791 = vadd.f32 %v659, %v790
      %v792 = vpop.f32.mrf.mxu0
      %v793 = vadd.f32 %v661, %v792
      %794 = vmatmul.bf16.gmra.mxu0 %v755
      %v795 = vpop.f32.mrf.mxu0
      %v796 = vadd.f32 %v664, %v795
      %v797 = vpop.f32.mrf.mxu0
      %v798 = vadd.f32 %v666, %v797
      %799 = vmatmul.bf16.gmra.mxu0 %v758
      %v800 = vpop.f32.mrf.mxu0
      %v801 = vadd.f32 %v669, %v800
      %v802 = vpop.f32.mrf.mxu0
      %v803 = vadd.f32 %v671, %v802
      %804 = vmatmul.bf16.gmra.mxu0 %v761
      %v805 = vpop.f32.mrf.mxu0
      %v806 = vadd.f32 %v674, %v805
      %v807 = vpop.f32.mrf.mxu0
      %v808 = vadd.f32 %v676, %v807
      %809 = vmatmul.bf16.gmra.mxu0 %v764
      %v810 = vpop.f32.mrf.mxu0
      %v811 = vadd.f32 %v679, %v810
      %v812 = vpop.f32.mrf.mxu0
      %v813 = vadd.f32 %v681, %v812
      %814 = vdwg.mxu0
      %815 = vmatpush.bf16.msra.mxu0 0
      %816 = vmatpush.bf16.msra.mxu0 0
      %817 = vmatpush.bf16.msra.mxu0 0
      %818 = vmatpush.bf16.msra.mxu0 0
      %819 = vmatpush.bf16.msra.mxu0 0
      %820 = vmatpush.bf16.msra.mxu0 0
      %821 = vmatpush.bf16.msra.mxu0 0
      %822 = vmatpush.bf16.msra.mxu0 %v739
      %823 = vmatmul.bf16.gmra.mxu0 %v743
      %v824 = vpop.f32.mrf.mxu0
      %v825 = vadd.f32 %v693, %v824
      %v826 = vpop.f32.mrf.mxu0
      %v827 = vadd.f32 %v695, %v826
      %828 = vmatmul.bf16.gmra.mxu0 %v746
      %v829 = vpop.f32.mrf.mxu0
      %v830 = vadd.f32 %v698, %v829
      %v831 = vpop.f32.mrf.mxu0
      %v832 = vadd.f32 %v700, %v831
      %833 = vmatmul.bf16.gmra.mxu0 %v749
      %v834 = vpop.f32.mrf.mxu0
      %v835 = vadd.f32 %v703, %v834
      %v836 = vpop.f32.mrf.mxu0
      %v837 = vadd.f32 %v705, %v836
      %838 = vmatmul.bf16.gmra.mxu0 %v752
      %v839 = vpop.f32.mrf.mxu0
      %v840 = vadd.f32 %v708, %v839
      %v841 = vpop.f32.mrf.mxu0
      %v842 = vadd.f32 %v710, %v841
      %843 = vmatmul.bf16.gmra.mxu0 %v755
      %v844 = vpop.f32.mrf.mxu0
      %v845 = vadd.f32 %v713, %v844
      %v846 = vpop.f32.mrf.mxu0
      %v847 = vadd.f32 %v715, %v846
      %848 = vmatmul.bf16.gmra.mxu0 %v758
      %v849 = vpop.f32.mrf.mxu0
      %v850 = vadd.f32 %v718, %v849
      %v851 = vpop.f32.mrf.mxu0
      %v852 = vadd.f32 %v720, %v851
      %853 = vmatmul.bf16.gmra.mxu0 %v761
      %v854 = vpop.f32.mrf.mxu0
      %v855 = vadd.f32 %v723, %v854
      %v856 = vpop.f32.mrf.mxu0
      %v857 = vadd.f32 %v725, %v856
      %858 = vmatmul.bf16.gmra.mxu0 %v764
      %v859 = vpop.f32.mrf.mxu0
      %v860 = vadd.f32 %v728, %v859
      %v861 = vpop.f32.mrf.mxu0
      %v862 = vadd.f32 %v730, %v861
      %863 = vdwg.mxu0
      %v864 = vpack.c.bf16 %v575, %v537
      %v865 = vpack.c.bf16 %v576, %v540
      %v866 = vpack.c.bf16 %v577, %v543
      %v867 = vpack.c.bf16 %v578, %v546
      %v868 = vpack.c.bf16 %v579, %v549
      %v869 = vpack.c.bf16 %v580, %v552
      %v870 = vpack.c.bf16 %v581, %v555
      %v871 = vpack.c.bf16 %v582, %v558
      %v874 = vunpack.c.l.b16 %v467
      %v875 = vunpack.c.h.b16 %v467
      %v876 = vunpack.c.l.b16 %v468
      %v877 = vunpack.c.h.b16 %v468
      %v878 = vpack.c.b16 %v876, %v874
      %v879 = vpack.c.b16 %v877, %v875
      %v883 = vsel %vm609, %v864, 0
      %v886 = vsel %vm609, %v865, 0
      %v889 = vsel %vm609, %v866, 0
      %v892 = vsel %vm609, %v867, 0
      %v895 = vsel %vm609, %v868, 0
      %v898 = vsel %vm609, %v869, 0
      %v901 = vsel %vm609, %v870, 0
      %v904 = vsel %vm609, %v871, 0
      %906 = vmatpush.bf16.msra.mxu0 0
      %907 = vmatpush.bf16.msra.mxu0 0
      %908 = vmatpush.bf16.msra.mxu0 0
      %909 = vmatpush.bf16.msra.mxu0 0
      %910 = vmatpush.bf16.msra.mxu0 0
      %911 = vmatpush.bf16.msra.mxu0 0
      %912 = vmatpush.bf16.msra.mxu0 0
      %913 = vmatpush.bf16.msra.mxu0 %v878
      %914 = vmatmul.bf16.gmra.mxu0 %v883
      %v915 = vpop.f32.mrf.mxu0
      %v916 = vadd.f32 0.0, %v915
      %v917 = vpop.f32.mrf.mxu0
      %v918 = vadd.f32 0.0, %v917
      %919 = vmatmul.bf16.gmra.mxu0 %v886
      %v920 = vpop.f32.mrf.mxu0
      %v921 = vadd.f32 0.0, %v920
      %v922 = vpop.f32.mrf.mxu0
      %v923 = vadd.f32 0.0, %v922
      %924 = vmatmul.bf16.gmra.mxu0 %v889
      %v925 = vpop.f32.mrf.mxu0
      %v926 = vadd.f32 0.0, %v925
      %v927 = vpop.f32.mrf.mxu0
      %v928 = vadd.f32 0.0, %v927
      %929 = vmatmul.bf16.gmra.mxu0 %v892
      %v930 = vpop.f32.mrf.mxu0
      %v931 = vadd.f32 0.0, %v930
      %v932 = vpop.f32.mrf.mxu0
      %v933 = vadd.f32 0.0, %v932
      %934 = vmatmul.bf16.gmra.mxu0 %v895
      %v935 = vpop.f32.mrf.mxu0
      %v936 = vadd.f32 0.0, %v935
      %v937 = vpop.f32.mrf.mxu0
      %v938 = vadd.f32 0.0, %v937
      %939 = vmatmul.bf16.gmra.mxu0 %v898
      %v940 = vpop.f32.mrf.mxu0
      %v941 = vadd.f32 0.0, %v940
      %v942 = vpop.f32.mrf.mxu0
      %v943 = vadd.f32 0.0, %v942
      %944 = vmatmul.bf16.gmra.mxu0 %v901
      %v945 = vpop.f32.mrf.mxu0
      %v946 = vadd.f32 0.0, %v945
      %v947 = vpop.f32.mrf.mxu0
      %v948 = vadd.f32 0.0, %v947
      %949 = vmatmul.bf16.gmra.mxu0 %v904
      %v950 = vpop.f32.mrf.mxu0
      %v951 = vadd.f32 0.0, %v950
      %v952 = vpop.f32.mrf.mxu0
      %v953 = vadd.f32 0.0, %v952
      %954 = vdwg.mxu0
      %955 = vmatpush.bf16.msra.mxu0 0
      %956 = vmatpush.bf16.msra.mxu0 0
      %957 = vmatpush.bf16.msra.mxu0 0
      %958 = vmatpush.bf16.msra.mxu0 0
      %959 = vmatpush.bf16.msra.mxu0 0
      %960 = vmatpush.bf16.msra.mxu0 0
      %961 = vmatpush.bf16.msra.mxu0 0
      %962 = vmatpush.bf16.msra.mxu0 %v879
      %963 = vmatmul.bf16.gmra.mxu0 %v883
      %v964 = vpop.f32.mrf.mxu0
      %v965 = vadd.f32 0.0, %v964
      %v966 = vpop.f32.mrf.mxu0
      %v967 = vadd.f32 0.0, %v966
      %968 = vmatmul.bf16.gmra.mxu0 %v886
      %v969 = vpop.f32.mrf.mxu0
      %v970 = vadd.f32 0.0, %v969
      %v971 = vpop.f32.mrf.mxu0
      %v972 = vadd.f32 0.0, %v971
      %973 = vmatmul.bf16.gmra.mxu0 %v889
      %v974 = vpop.f32.mrf.mxu0
      %v975 = vadd.f32 0.0, %v974
      %v976 = vpop.f32.mrf.mxu0
      %v977 = vadd.f32 0.0, %v976
      %978 = vmatmul.bf16.gmra.mxu0 %v892
      %v979 = vpop.f32.mrf.mxu0
      %v980 = vadd.f32 0.0, %v979
      %v981 = vpop.f32.mrf.mxu0
      %v982 = vadd.f32 0.0, %v981
      %983 = vmatmul.bf16.gmra.mxu0 %v895
      %v984 = vpop.f32.mrf.mxu0
      %v985 = vadd.f32 0.0, %v984
      %v986 = vpop.f32.mrf.mxu0
      %v987 = vadd.f32 0.0, %v986
      %988 = vmatmul.bf16.gmra.mxu0 %v898
      %v989 = vpop.f32.mrf.mxu0
      %v990 = vadd.f32 0.0, %v989
      %v991 = vpop.f32.mrf.mxu0
      %v992 = vadd.f32 0.0, %v991
      %993 = vmatmul.bf16.gmra.mxu0 %v901
      %v994 = vpop.f32.mrf.mxu0
      %v995 = vadd.f32 0.0, %v994
      %v996 = vpop.f32.mrf.mxu0
      %v997 = vadd.f32 0.0, %v996
      %998 = vmatmul.bf16.gmra.mxu0 %v904
      %v999 = vpop.f32.mrf.mxu0
      %v1000 = vadd.f32 0.0, %v999
      %v1001 = vpop.f32.mrf.mxu0
      %v1002 = vadd.f32 0.0, %v1001
      %1003 = vdwg.mxu0
      %v1004 = vadd.f32 %v776, %v916
      %v1005 = vadd.f32 %v825, %v965
      %v1006 = vadd.f32 %v778, %v918
      %v1007 = vadd.f32 %v827, %v967
      %v1008 = vadd.f32 %v781, %v921
      %v1009 = vadd.f32 %v830, %v970
      %v1010 = vadd.f32 %v783, %v923
      %v1011 = vadd.f32 %v832, %v972
      %v1012 = vadd.f32 %v786, %v926
      %v1013 = vadd.f32 %v835, %v975
      %v1014 = vadd.f32 %v788, %v928
      %v1015 = vadd.f32 %v837, %v977
      %v1016 = vadd.f32 %v791, %v931
      %v1017 = vadd.f32 %v840, %v980
      %v1018 = vadd.f32 %v793, %v933
      %v1019 = vadd.f32 %v842, %v982
      %v1020 = vadd.f32 %v796, %v936
      %v1021 = vadd.f32 %v845, %v985
      %v1022 = vadd.f32 %v798, %v938
      %v1023 = vadd.f32 %v847, %v987
      %v1024 = vadd.f32 %v801, %v941
      %v1025 = vadd.f32 %v850, %v990
      %v1026 = vadd.f32 %v803, %v943
      %v1027 = vadd.f32 %v852, %v992
      %v1028 = vadd.f32 %v806, %v946
      %v1029 = vadd.f32 %v855, %v995
      %v1030 = vadd.f32 %v808, %v948
      %v1031 = vadd.f32 %v857, %v997
      %v1032 = vadd.f32 %v811, %v951
      %v1033 = vadd.f32 %v860, %v1000
      %v1034 = vadd.f32 %v813, %v953
      %v1035 = vadd.f32 %v862, %v1002
      %v1036 = vld [vmem:[%s2] sm:$0x3]
      %v1038 = vperm.slane %v1036, 0
      %v1039 = vperm.slane %v1036, 1
      %v1042 = vadd.f32 %v1004, %v1038
      %v1043 = vadd.f32 %v1005, %v1039
      %v1044 = vadd.f32 %v1006, %v1038
      %v1045 = vadd.f32 %v1007, %v1039
      %v1046 = vadd.f32 %v1008, %v1038
      %v1047 = vadd.f32 %v1009, %v1039
      %v1048 = vadd.f32 %v1010, %v1038
      %v1049 = vadd.f32 %v1011, %v1039
      %v1050 = vadd.f32 %v1012, %v1038
      %v1051 = vadd.f32 %v1013, %v1039
      %v1052 = vadd.f32 %v1014, %v1038
      %v1053 = vadd.f32 %v1015, %v1039
      %v1054 = vadd.f32 %v1016, %v1038
      %v1055 = vadd.f32 %v1017, %v1039
      %v1056 = vadd.f32 %v1018, %v1038
      %v1057 = vadd.f32 %v1019, %v1039
      %v1058 = vadd.f32 %v1020, %v1038
      %v1059 = vadd.f32 %v1021, %v1039
      %v1060 = vadd.f32 %v1022, %v1038
      %v1061 = vadd.f32 %v1023, %v1039
      %v1062 = vadd.f32 %v1024, %v1038
      %v1063 = vadd.f32 %v1025, %v1039
      %v1064 = vadd.f32 %v1026, %v1038
      %v1065 = vadd.f32 %v1027, %v1039
      %v1066 = vadd.f32 %v1028, %v1038
      %v1067 = vadd.f32 %v1029, %v1039
      %v1068 = vadd.f32 %v1030, %v1038
      %v1069 = vadd.f32 %v1031, %v1039
      %v1070 = vadd.f32 %v1032, %v1038
      %v1071 = vadd.f32 %v1033, %v1039
      %v1072 = vadd.f32 %v1034, %v1038
      %v1073 = vadd.f32 %v1035, %v1039
      %v1074 = vmax.f32 %v1042, 0.0
      %v1075 = vmax.f32 %v1043, 0.0
      %v1076 = vmax.f32 %v1044, 0.0
      %v1077 = vmax.f32 %v1045, 0.0
      %v1078 = vmax.f32 %v1046, 0.0
      %v1079 = vmax.f32 %v1047, 0.0
      %v1080 = vmax.f32 %v1048, 0.0
      %v1081 = vmax.f32 %v1049, 0.0
      %v1082 = vmax.f32 %v1050, 0.0
      %v1083 = vmax.f32 %v1051, 0.0
      %v1084 = vmax.f32 %v1052, 0.0
      %v1085 = vmax.f32 %v1053, 0.0
      %v1086 = vmax.f32 %v1054, 0.0
      %v1087 = vmax.f32 %v1055, 0.0
      %v1088 = vmax.f32 %v1056, 0.0
      %v1089 = vmax.f32 %v1057, 0.0
      %v1090 = vmax.f32 %v1058, 0.0
      %v1091 = vmax.f32 %v1059, 0.0
      %v1092 = vmax.f32 %v1060, 0.0
      %v1093 = vmax.f32 %v1061, 0.0
      %v1094 = vmax.f32 %v1062, 0.0
      %v1095 = vmax.f32 %v1063, 0.0
      %v1096 = vmax.f32 %v1064, 0.0
      %v1097 = vmax.f32 %v1065, 0.0
      %v1098 = vmax.f32 %v1066, 0.0
      %v1099 = vmax.f32 %v1067, 0.0
      %v1100 = vmax.f32 %v1068, 0.0
      %v1101 = vmax.f32 %v1069, 0.0
      %v1102 = vmax.f32 %v1070, 0.0
      %v1103 = vmax.f32 %v1071, 0.0
      %v1104 = vmax.f32 %v1072, 0.0
      %v1105 = vmax.f32 %v1073, 0.0
      %v1138 = vrot.slane %v1075, 6
      %v1139 = vrot.slane %v1077, 6
      %v1140 = vrot.slane %v1079, 6
      %v1141 = vrot.slane %v1081, 6
      %v1142 = vrot.slane %v1083, 6
      %v1143 = vrot.slane %v1085, 6
      %v1144 = vrot.slane %v1087, 6
      %v1145 = vrot.slane %v1089, 6
      %v1146 = vrot.slane %v1091, 6
      %v1147 = vrot.slane %v1093, 6
      %v1148 = vrot.slane %v1095, 6
      %v1149 = vrot.slane %v1097, 6
      %v1150 = vrot.slane %v1099, 6
      %v1151 = vrot.slane %v1101, 6
      %v1152 = vrot.slane %v1103, 6
      %v1153 = vrot.slane %v1105, 6
      %vm1154 = vcmask 1041408
      %v1155 = vsel %vm1154, %v1074, %v1138
      %vm1156 = vcmask 1043458
      %v1157 = vsel %vm1156, %v1074, %v1138
      %v1158 = vrot.slane %v1157, 2
      %vm1159 = vcmask 1045508
      %v1160 = vsel %vm1159, %v1074, %v1138
      %v1161 = vrot.slane %v1160, 4
      %vm1162 = vcmask 1045504
      %v1163 = vsel %vm1162, %v1138, %v1074
      %v1164 = vrot.slane %v1163, 6
      %v1165 = vsel %vm1154, %v1076, %v1139
      %v1166 = vsel %vm1156, %v1076, %v1139
      %v1167 = vrot.slane %v1166, 2
      %v1168 = vsel %vm1159, %v1076, %v1139
      %v1169 = vrot.slane %v1168, 4
      %v1170 = vsel %vm1162, %v1139, %v1076
      %v1171 = vrot.slane %v1170, 6
      %v1172 = vsel %vm1154, %v1078, %v1140
      %v1173 = vsel %vm1156, %v1078, %v1140
      %v1174 = vrot.slane %v1173, 2
      %v1175 = vsel %vm1159, %v1078, %v1140
      %v1176 = vrot.slane %v1175, 4
      %v1177 = vsel %vm1162, %v1140, %v1078
      %v1178 = vrot.slane %v1177, 6
      %v1179 = vsel %vm1154, %v1080, %v1141
      %v1180 = vsel %vm1156, %v1080, %v1141
      %v1181 = vrot.slane %v1180, 2
      %v1182 = vsel %vm1159, %v1080, %v1141
      %v1183 = vrot.slane %v1182, 4
      %v1184 = vsel %vm1162, %v1141, %v1080
      %v1185 = vrot.slane %v1184, 6
      %v1186 = vsel %vm1154, %v1082, %v1142
      %v1187 = vsel %vm1156, %v1082, %v1142
      %v1188 = vrot.slane %v1187, 2
      %v1189 = vsel %vm1159, %v1082, %v1142
      %v1190 = vrot.slane %v1189, 4
      %v1191 = vsel %vm1162, %v1142, %v1082
      %v1192 = vrot.slane %v1191, 6
      %v1193 = vsel %vm1154, %v1084, %v1143
      %v1194 = vsel %vm1156, %v1084, %v1143
      %v1195 = vrot.slane %v1194, 2
      %v1196 = vsel %vm1159, %v1084, %v1143
      %v1197 = vrot.slane %v1196, 4
      %v1198 = vsel %vm1162, %v1143, %v1084
      %v1199 = vrot.slane %v1198, 6
      %v1200 = vsel %vm1154, %v1086, %v1144
      %v1201 = vsel %vm1156, %v1086, %v1144
      %v1202 = vrot.slane %v1201, 2
      %v1203 = vsel %vm1159, %v1086, %v1144
      %v1204 = vrot.slane %v1203, 4
      %v1205 = vsel %vm1162, %v1144, %v1086
      %v1206 = vrot.slane %v1205, 6
      %v1207 = vsel %vm1154, %v1088, %v1145
      %v1208 = vsel %vm1156, %v1088, %v1145
      %v1209 = vrot.slane %v1208, 2
      %v1210 = vsel %vm1159, %v1088, %v1145
      %v1211 = vrot.slane %v1210, 4
      %v1212 = vsel %vm1162, %v1145, %v1088
      %v1213 = vrot.slane %v1212, 6
      %v1214 = vsel %vm1154, %v1090, %v1146
      %v1215 = vsel %vm1156, %v1090, %v1146
      %v1216 = vrot.slane %v1215, 2
      %v1217 = vsel %vm1159, %v1090, %v1146
      %v1218 = vrot.slane %v1217, 4
      %v1219 = vsel %vm1162, %v1146, %v1090
      %v1220 = vrot.slane %v1219, 6
      %v1221 = vsel %vm1154, %v1092, %v1147
      %v1222 = vsel %vm1156, %v1092, %v1147
      %v1223 = vrot.slane %v1222, 2
      %v1224 = vsel %vm1159, %v1092, %v1147
      %v1225 = vrot.slane %v1224, 4
      %v1226 = vsel %vm1162, %v1147, %v1092
      %v1227 = vrot.slane %v1226, 6
      %v1228 = vsel %vm1154, %v1094, %v1148
      %v1229 = vsel %vm1156, %v1094, %v1148
      %v1230 = vrot.slane %v1229, 2
      %v1231 = vsel %vm1159, %v1094, %v1148
      %v1232 = vrot.slane %v1231, 4
      %v1233 = vsel %vm1162, %v1148, %v1094
      %v1234 = vrot.slane %v1233, 6
      %v1235 = vsel %vm1154, %v1096, %v1149
      %v1236 = vsel %vm1156, %v1096, %v1149
      %v1237 = vrot.slane %v1236, 2
      %v1238 = vsel %vm1159, %v1096, %v1149
      %v1239 = vrot.slane %v1238, 4
      %v1240 = vsel %vm1162, %v1149, %v1096
      %v1241 = vrot.slane %v1240, 6
      %v1242 = vsel %vm1154, %v1098, %v1150
      %v1243 = vsel %vm1156, %v1098, %v1150
      %v1244 = vrot.slane %v1243, 2
      %v1245 = vsel %vm1159, %v1098, %v1150
      %v1246 = vrot.slane %v1245, 4
      %v1247 = vsel %vm1162, %v1150, %v1098
      %v1248 = vrot.slane %v1247, 6
      %v1249 = vsel %vm1154, %v1100, %v1151
      %v1250 = vsel %vm1156, %v1100, %v1151
      %v1251 = vrot.slane %v1250, 2
      %v1252 = vsel %vm1159, %v1100, %v1151
      %v1253 = vrot.slane %v1252, 4
      %v1254 = vsel %vm1162, %v1151, %v1100
      %v1255 = vrot.slane %v1254, 6
      %v1256 = vsel %vm1154, %v1102, %v1152
      %v1257 = vsel %vm1156, %v1102, %v1152
      %v1258 = vrot.slane %v1257, 2
      %v1259 = vsel %vm1159, %v1102, %v1152
      %v1260 = vrot.slane %v1259, 4
      %v1261 = vsel %vm1162, %v1152, %v1102
      %v1262 = vrot.slane %v1261, 6
      %v1263 = vsel %vm1154, %v1104, %v1153
      %v1264 = vsel %vm1156, %v1104, %v1153
      %v1265 = vrot.slane %v1264, 2
      %v1266 = vsel %vm1159, %v1104, %v1153
      %v1267 = vrot.slane %v1266, 4
      %v1268 = vsel %vm1162, %v1153, %v1104
      %v1269 = vrot.slane %v1268, 6
      %v1334 = vrot.slane %v1155, 7
      %v1335 = vrot.slane %v1334, 2
      %v1336 = vrot.slane %v1158, 7
      %v1337 = vrot.slane %v1336, 2
      %v1338 = vrot.slane %v1161, 7
      %v1339 = vrot.slane %v1338, 2
      %v1340 = vrot.slane %v1164, 7
      %v1341 = vrot.slane %v1340, 2
      %v1342 = vrot.slane %v1165, 7
      %v1343 = vrot.slane %v1342, 2
      %v1344 = vrot.slane %v1167, 7
      %v1345 = vrot.slane %v1344, 2
      %v1346 = vrot.slane %v1169, 7
      %v1347 = vrot.slane %v1346, 2
      %v1348 = vrot.slane %v1171, 7
      %v1349 = vrot.slane %v1348, 2
      %v1350 = vrot.slane %v1172, 7
      %v1351 = vrot.slane %v1350, 2
      %v1352 = vrot.slane %v1174, 7
      %v1353 = vrot.slane %v1352, 2
      %v1354 = vrot.slane %v1176, 7
      %v1355 = vrot.slane %v1354, 2
      %v1356 = vrot.slane %v1178, 7
      %v1357 = vrot.slane %v1356, 2
      %v1358 = vrot.slane %v1179, 7
      %v1359 = vrot.slane %v1358, 2
      %v1360 = vrot.slane %v1181, 7
      %v1361 = vrot.slane %v1360, 2
      %v1362 = vrot.slane %v1183, 7
      %v1363 = vrot.slane %v1362, 2
      %v1364 = vrot.slane %v1185, 7
      %v1365 = vrot.slane %v1364, 2
      %v1366 = vrot.slane %v1186, 7
      %v1367 = vrot.slane %v1366, 2
      %v1368 = vrot.slane %v1188, 7
      %v1369 = vrot.slane %v1368, 2
      %v1370 = vrot.slane %v1190, 7
      %v1371 = vrot.slane %v1370, 2
      %v1372 = vrot.slane %v1192, 7
      %v1373 = vrot.slane %v1372, 2
      %v1374 = vrot.slane %v1193, 7
      %v1375 = vrot.slane %v1374, 2
      %v1376 = vrot.slane %v1195, 7
      %v1377 = vrot.slane %v1376, 2
      %v1378 = vrot.slane %v1197, 7
      %v1379 = vrot.slane %v1378, 2
      %v1380 = vrot.slane %v1199, 7
      %v1381 = vrot.slane %v1380, 2
      %v1382 = vrot.slane %v1200, 7
      %v1383 = vrot.slane %v1382, 2
      %v1384 = vrot.slane %v1202, 7
      %v1385 = vrot.slane %v1384, 2
      %v1386 = vrot.slane %v1204, 7
      %v1387 = vrot.slane %v1386, 2
      %v1388 = vrot.slane %v1206, 7
      %v1389 = vrot.slane %v1388, 2
      %v1390 = vrot.slane %v1207, 7
      %v1391 = vrot.slane %v1390, 2
      %v1392 = vrot.slane %v1209, 7
      %v1393 = vrot.slane %v1392, 2
      %v1394 = vrot.slane %v1211, 7
      %v1395 = vrot.slane %v1394, 2
      %v1396 = vrot.slane %v1213, 7
      %v1397 = vrot.slane %v1396, 2
      %v1398 = vrot.slane %v1214, 7
      %v1399 = vrot.slane %v1398, 2
      %v1400 = vrot.slane %v1216, 7
      %v1401 = vrot.slane %v1400, 2
      %v1402 = vrot.slane %v1218, 7
      %v1403 = vrot.slane %v1402, 2
      %v1404 = vrot.slane %v1220, 7
      %v1405 = vrot.slane %v1404, 2
      %v1406 = vrot.slane %v1221, 7
      %v1407 = vrot.slane %v1406, 2
      %v1408 = vrot.slane %v1223, 7
      %v1409 = vrot.slane %v1408, 2
      %v1410 = vrot.slane %v1225, 7
      %v1411 = vrot.slane %v1410, 2
      %v1412 = vrot.slane %v1227, 7
      %v1413 = vrot.slane %v1412, 2
      %v1414 = vrot.slane %v1228, 7
      %v1415 = vrot.slane %v1414, 2
      %v1416 = vrot.slane %v1230, 7
      %v1417 = vrot.slane %v1416, 2
      %v1418 = vrot.slane %v1232, 7
      %v1419 = vrot.slane %v1418, 2
      %v1420 = vrot.slane %v1234, 7
      %v1421 = vrot.slane %v1420, 2
      %v1422 = vrot.slane %v1235, 7
      %v1423 = vrot.slane %v1422, 2
      %v1424 = vrot.slane %v1237, 7
      %v1425 = vrot.slane %v1424, 2
      %v1426 = vrot.slane %v1239, 7
      %v1427 = vrot.slane %v1426, 2
      %v1428 = vrot.slane %v1241, 7
      %v1429 = vrot.slane %v1428, 2
      %v1430 = vrot.slane %v1242, 7
      %v1431 = vrot.slane %v1430, 2
      %v1432 = vrot.slane %v1244, 7
      %v1433 = vrot.slane %v1432, 2
      %v1434 = vrot.slane %v1246, 7
      %v1435 = vrot.slane %v1434, 2
      %v1436 = vrot.slane %v1248, 7
      %v1437 = vrot.slane %v1436, 2
      %v1438 = vrot.slane %v1249, 7
      %v1439 = vrot.slane %v1438, 2
      %v1440 = vrot.slane %v1251, 7
      %v1441 = vrot.slane %v1440, 2
      %v1442 = vrot.slane %v1253, 7
      %v1443 = vrot.slane %v1442, 2
      %v1444 = vrot.slane %v1255, 7
      %v1445 = vrot.slane %v1444, 2
      %v1446 = vrot.slane %v1256, 7
      %v1447 = vrot.slane %v1446, 2
      %v1448 = vrot.slane %v1258, 7
      %v1449 = vrot.slane %v1448, 2
      %v1450 = vrot.slane %v1260, 7
      %v1451 = vrot.slane %v1450, 2
      %v1452 = vrot.slane %v1262, 7
      %v1453 = vrot.slane %v1452, 2
      %v1454 = vrot.slane %v1263, 7
      %v1455 = vrot.slane %v1454, 2
      %v1456 = vrot.slane %v1265, 7
      %v1457 = vrot.slane %v1456, 2
      %v1458 = vrot.slane %v1267, 7
      %v1459 = vrot.slane %v1458, 2
      %v1460 = vrot.slane %v1269, 7
      %v1461 = vrot.slane %v1460, 2
      %v1526 = vmax.f32 %v1155, %v1335
      %v1527 = vmax.f32 %v1158, %v1337
      %v1528 = vmax.f32 %v1161, %v1339
      %v1529 = vmax.f32 %v1164, %v1341
      %v1530 = vmax.f32 %v1165, %v1343
      %v1531 = vmax.f32 %v1167, %v1345
      %v1532 = vmax.f32 %v1169, %v1347
      %v1533 = vmax.f32 %v1171, %v1349
      %v1534 = vmax.f32 %v1172, %v1351
      %v1535 = vmax.f32 %v1174, %v1353
      %v1536 = vmax.f32 %v1176, %v1355
      %v1537 = vmax.f32 %v1178, %v1357
      %v1538 = vmax.f32 %v1179, %v1359
      %v1539 = vmax.f32 %v1181, %v1361
      %v1540 = vmax.f32 %v1183, %v1363
      %v1541 = vmax.f32 %v1185, %v1365
      %v1542 = vmax.f32 %v1186, %v1367
      %v1543 = vmax.f32 %v1188, %v1369
      %v1544 = vmax.f32 %v1190, %v1371
      %v1545 = vmax.f32 %v1192, %v1373
      %v1546 = vmax.f32 %v1193, %v1375
      %v1547 = vmax.f32 %v1195, %v1377
      %v1548 = vmax.f32 %v1197, %v1379
      %v1549 = vmax.f32 %v1199, %v1381
      %v1550 = vmax.f32 %v1200, %v1383
      %v1551 = vmax.f32 %v1202, %v1385
      %v1552 = vmax.f32 %v1204, %v1387
      %v1553 = vmax.f32 %v1206, %v1389
      %v1554 = vmax.f32 %v1207, %v1391
      %v1555 = vmax.f32 %v1209, %v1393
      %v1556 = vmax.f32 %v1211, %v1395
      %v1557 = vmax.f32 %v1213, %v1397
      %v1558 = vmax.f32 %v1214, %v1399
      %v1559 = vmax.f32 %v1216, %v1401
      %v1560 = vmax.f32 %v1218, %v1403
      %v1561 = vmax.f32 %v1220, %v1405
      %v1562 = vmax.f32 %v1221, %v1407
      %v1563 = vmax.f32 %v1223, %v1409
      %v1564 = vmax.f32 %v1225, %v1411
      %v1565 = vmax.f32 %v1227, %v1413
      %v1566 = vmax.f32 %v1228, %v1415
      %v1567 = vmax.f32 %v1230, %v1417
      %v1568 = vmax.f32 %v1232, %v1419
      %v1569 = vmax.f32 %v1234, %v1421
      %v1570 = vmax.f32 %v1235, %v1423
      %v1571 = vmax.f32 %v1237, %v1425
      %v1572 = vmax.f32 %v1239, %v1427
      %v1573 = vmax.f32 %v1241, %v1429
      %v1574 = vmax.f32 %v1242, %v1431
      %v1575 = vmax.f32 %v1244, %v1433
      %v1576 = vmax.f32 %v1246, %v1435
      %v1577 = vmax.f32 %v1248, %v1437
      %v1578 = vmax.f32 %v1249, %v1439
      %v1579 = vmax.f32 %v1251, %v1441
      %v1580 = vmax.f32 %v1253, %v1443
      %v1581 = vmax.f32 %v1255, %v1445
      %v1582 = vmax.f32 %v1256, %v1447
      %v1583 = vmax.f32 %v1258, %v1449
      %v1584 = vmax.f32 %v1260, %v1451
      %v1585 = vmax.f32 %v1262, %v1453
      %v1586 = vmax.f32 %v1263, %v1455
      %v1587 = vmax.f32 %v1265, %v1457
      %v1588 = vmax.f32 %v1267, %v1459
      %v1589 = vmax.f32 %v1269, %v1461
      %v1590 = vld [vmem:[%s5] sm:$0xf]
      %v1591 = vld [vmem:[%s5 + $0x4] sm:$0xf]
      %v1592 = vld [vmem:[%s5 + $0x8] sm:$0xf]
      %v1593 = vld [vmem:[%s5 + $0xc] sm:$0xf]
      %v1594 = vld [vmem:[%s5 + $0x10] sm:$0xf]
      %v1595 = vld [vmem:[%s5 + $0x14] sm:$0xf]
      %v1596 = vld [vmem:[%s5 + $0x18] sm:$0xf]
      %v1597 = vld [vmem:[%s5 + $0x1c] sm:$0xf]
      %v1598 = vld [vmem:[%s5 + $0x20] sm:$0xf]
      %v1599 = vld [vmem:[%s5 + $0x24] sm:$0xf]
      %v1600 = vld [vmem:[%s5 + $0x28] sm:$0xf]
      %v1601 = vld [vmem:[%s5 + $0x2c] sm:$0xf]
      %v1602 = vld [vmem:[%s5 + $0x30] sm:$0xf]
      %v1603 = vld [vmem:[%s5 + $0x34] sm:$0xf]
      %v1604 = vld [vmem:[%s5 + $0x38] sm:$0xf]
      %v1605 = vld [vmem:[%s5 + $0x3c] sm:$0xf]
      %v1606 = vld [vmem:[%s5 + $0x40] sm:$0xf]
      %v1607 = vld [vmem:[%s5 + $0x44] sm:$0xf]
      %v1608 = vld [vmem:[%s5 + $0x48] sm:$0xf]
      %v1609 = vld [vmem:[%s5 + $0x4c] sm:$0xf]
      %v1610 = vld [vmem:[%s5 + $0x50] sm:$0xf]
      %v1611 = vld [vmem:[%s5 + $0x54] sm:$0xf]
      %v1612 = vld [vmem:[%s5 + $0x58] sm:$0xf]
      %v1613 = vld [vmem:[%s5 + $0x5c] sm:$0xf]
      %v1614 = vld [vmem:[%s5 + $0x60] sm:$0xf]
      %v1615 = vld [vmem:[%s5 + $0x64] sm:$0xf]
      %v1616 = vld [vmem:[%s5 + $0x68] sm:$0xf]
      %v1617 = vld [vmem:[%s5 + $0x6c] sm:$0xf]
      %v1618 = vld [vmem:[%s5 + $0x70] sm:$0xf]
      %v1619 = vld [vmem:[%s5 + $0x74] sm:$0xf]
      %v1620 = vld [vmem:[%s5 + $0x78] sm:$0xf]
      %v1621 = vld [vmem:[%s5 + $0x7c] sm:$0xf]
      %v1686 = vperm.slane %v1526, 0
      %v1687 = vperm.slane %v1526, 2
      %v1688 = vperm.slane %v1527, 0
      %v1689 = vperm.slane %v1527, 2
      %v1690 = vperm.slane %v1528, 0
      %v1691 = vperm.slane %v1528, 2
      %v1692 = vperm.slane %v1529, 0
      %v1693 = vperm.slane %v1529, 2
      %v1694 = vperm.slane %v1530, 0
      %v1695 = vperm.slane %v1530, 2
      %v1696 = vperm.slane %v1531, 0
      %v1697 = vperm.slane %v1531, 2
      %v1698 = vperm.slane %v1532, 0
      %v1699 = vperm.slane %v1532, 2
      %v1700 = vperm.slane %v1533, 0
      %v1701 = vperm.slane %v1533, 2
      %v1702 = vperm.slane %v1534, 0
      %v1703 = vperm.slane %v1534, 2
      %v1704 = vperm.slane %v1535, 0
      %v1705 = vperm.slane %v1535, 2
      %v1706 = vperm.slane %v1536, 0
      %v1707 = vperm.slane %v1536, 2
      %v1708 = vperm.slane %v1537, 0
      %v1709 = vperm.slane %v1537, 2
      %v1710 = vperm.slane %v1538, 0
      %v1711 = vperm.slane %v1538, 2
      %v1712 = vperm.slane %v1539, 0
      %v1713 = vperm.slane %v1539, 2
      %v1714 = vperm.slane %v1540, 0
      %v1715 = vperm.slane %v1540, 2
      %v1716 = vperm.slane %v1541, 0
      %v1717 = vperm.slane %v1541, 2
      %v1718 = vperm.slane %v1542, 0
      %v1719 = vperm.slane %v1542, 2
      %v1720 = vperm.slane %v1543, 0
      %v1721 = vperm.slane %v1543, 2
      %v1722 = vperm.slane %v1544, 0
      %v1723 = vperm.slane %v1544, 2
      %v1724 = vperm.slane %v1545, 0
      %v1725 = vperm.slane %v1545, 2
      %v1726 = vperm.slane %v1546, 0
      %v1727 = vperm.slane %v1546, 2
      %v1728 = vperm.slane %v1547, 0
      %v1729 = vperm.slane %v1547, 2
      %v1730 = vperm.slane %v1548, 0
      %v1731 = vperm.slane %v1548, 2
      %v1732 = vperm.slane %v1549, 0
      %v1733 = vperm.slane %v1549, 2
      %v1734 = vperm.slane %v1550, 0
      %v1735 = vperm.slane %v1550, 2
      %v1736 = vperm.slane %v1551, 0
      %v1737 = vperm.slane %v1551, 2
      %v1738 = vperm.slane %v1552, 0
      %v1739 = vperm.slane %v1552, 2
      %v1740 = vperm.slane %v1553, 0
      %v1741 = vperm.slane %v1553, 2
      %v1742 = vperm.slane %v1554, 0
      %v1743 = vperm.slane %v1554, 2
      %v1744 = vperm.slane %v1555, 0
      %v1745 = vperm.slane %v1555, 2
      %v1746 = vperm.slane %v1556, 0
      %v1747 = vperm.slane %v1556, 2
      %v1748 = vperm.slane %v1557, 0
      %v1749 = vperm.slane %v1557, 2
      %v1750 = vperm.slane %v1558, 0
      %v1751 = vperm.slane %v1558, 2
      %v1752 = vperm.slane %v1559, 0
      %v1753 = vperm.slane %v1559, 2
      %v1754 = vperm.slane %v1560, 0
      %v1755 = vperm.slane %v1560, 2
      %v1756 = vperm.slane %v1561, 0
      %v1757 = vperm.slane %v1561, 2
      %v1758 = vperm.slane %v1562, 0
      %v1759 = vperm.slane %v1562, 2
      %v1760 = vperm.slane %v1563, 0
      %v1761 = vperm.slane %v1563, 2
      %v1762 = vperm.slane %v1564, 0
      %v1763 = vperm.slane %v1564, 2
      %v1764 = vperm.slane %v1565, 0
      %v1765 = vperm.slane %v1565, 2
      %v1766 = vperm.slane %v1566, 0
      %v1767 = vperm.slane %v1566, 2
      %v1768 = vperm.slane %v1567, 0
      %v1769 = vperm.slane %v1567, 2
      %v1770 = vperm.slane %v1568, 0
      %v1771 = vperm.slane %v1568, 2
      %v1772 = vperm.slane %v1569, 0
      %v1773 = vperm.slane %v1569, 2
      %v1774 = vperm.slane %v1570, 0
      %v1775 = vperm.slane %v1570, 2
      %v1776 = vperm.slane %v1571, 0
      %v1777 = vperm.slane %v1571, 2
      %v1778 = vperm.slane %v1572, 0
      %v1779 = vperm.slane %v1572, 2
      %v1780 = vperm.slane %v1573, 0
      %v1781 = vperm.slane %v1573, 2
      %v1782 = vperm.slane %v1574, 0
      %v1783 = vperm.slane %v1574, 2
      %v1784 = vperm.slane %v1575, 0
      %v1785 = vperm.slane %v1575, 2
      %v1786 = vperm.slane %v1576, 0
      %v1787 = vperm.slane %v1576, 2
      %v1788 = vperm.slane %v1577, 0
      %v1789 = vperm.slane %v1577, 2
      %v1790 = vperm.slane %v1578, 0
      %v1791 = vperm.slane %v1578, 2
      %v1792 = vperm.slane %v1579, 0
      %v1793 = vperm.slane %v1579, 2
      %v1794 = vperm.slane %v1580, 0
      %v1795 = vperm.slane %v1580, 2
      %v1796 = vperm.slane %v1581, 0
      %v1797 = vperm.slane %v1581, 2
      %v1798 = vperm.slane %v1582, 0
      %v1799 = vperm.slane %v1582, 2
      %v1800 = vperm.slane %v1583, 0
      %v1801 = vperm.slane %v1583, 2
      %v1802 = vperm.slane %v1584, 0
      %v1803 = vperm.slane %v1584, 2
      %v1804 = vperm.slane %v1585, 0
      %v1805 = vperm.slane %v1585, 2
      %v1806 = vperm.slane %v1586, 0
      %v1807 = vperm.slane %v1586, 2
      %v1808 = vperm.slane %v1587, 0
      %v1809 = vperm.slane %v1587, 2
      %v1810 = vperm.slane %v1588, 0
      %v1811 = vperm.slane %v1588, 2
      %v1812 = vperm.slane %v1589, 0
      %v1813 = vperm.slane %v1589, 2
      %v1942 = vpack.c.bf16 %v1686, %v1686
      %v1943 = vpack.c.bf16 %v1687, %v1687
      %v1944 = vpack.c.bf16 %v1688, %v1688
      %v1945 = vpack.c.bf16 %v1689, %v1689
      %v1946 = vpack.c.bf16 %v1690, %v1690
      %v1947 = vpack.c.bf16 %v1691, %v1691
      %v1948 = vpack.c.bf16 %v1692, %v1692
      %v1949 = vpack.c.bf16 %v1693, %v1693
      %v1950 = vpack.c.bf16 %v1694, %v1694
      %v1951 = vpack.c.bf16 %v1695, %v1695
      %v1952 = vpack.c.bf16 %v1696, %v1696
      %v1953 = vpack.c.bf16 %v1697, %v1697
      %v1954 = vpack.c.bf16 %v1698, %v1698
      %v1955 = vpack.c.bf16 %v1699, %v1699
      %v1956 = vpack.c.bf16 %v1700, %v1700
      %v1957 = vpack.c.bf16 %v1701, %v1701
      %v1958 = vpack.c.bf16 %v1702, %v1702
      %v1959 = vpack.c.bf16 %v1703, %v1703
      %v1960 = vpack.c.bf16 %v1704, %v1704
      %v1961 = vpack.c.bf16 %v1705, %v1705
      %v1962 = vpack.c.bf16 %v1706, %v1706
      %v1963 = vpack.c.bf16 %v1707, %v1707
      %v1964 = vpack.c.bf16 %v1708, %v1708
      %v1965 = vpack.c.bf16 %v1709, %v1709
      %v1966 = vpack.c.bf16 %v1710, %v1710
      %v1967 = vpack.c.bf16 %v1711, %v1711
      %v1968 = vpack.c.bf16 %v1712, %v1712
      %v1969 = vpack.c.bf16 %v1713, %v1713
      %v1970 = vpack.c.bf16 %v1714, %v1714
      %v1971 = vpack.c.bf16 %v1715, %v1715
      %v1972 = vpack.c.bf16 %v1716, %v1716
      %v1973 = vpack.c.bf16 %v1717, %v1717
      %v1974 = vpack.c.bf16 %v1718, %v1718
      %v1975 = vpack.c.bf16 %v1719, %v1719
      %v1976 = vpack.c.bf16 %v1720, %v1720
      %v1977 = vpack.c.bf16 %v1721, %v1721
      %v1978 = vpack.c.bf16 %v1722, %v1722
      %v1979 = vpack.c.bf16 %v1723, %v1723
      %v1980 = vpack.c.bf16 %v1724, %v1724
      %v1981 = vpack.c.bf16 %v1725, %v1725
      %v1982 = vpack.c.bf16 %v1726, %v1726
      %v1983 = vpack.c.bf16 %v1727, %v1727
      %v1984 = vpack.c.bf16 %v1728, %v1728
      %v1985 = vpack.c.bf16 %v1729, %v1729
      %v1986 = vpack.c.bf16 %v1730, %v1730
      %v1987 = vpack.c.bf16 %v1731, %v1731
      %v1988 = vpack.c.bf16 %v1732, %v1732
      %v1989 = vpack.c.bf16 %v1733, %v1733
      %v1990 = vpack.c.bf16 %v1734, %v1734
      %v1991 = vpack.c.bf16 %v1735, %v1735
      %v1992 = vpack.c.bf16 %v1736, %v1736
      %v1993 = vpack.c.bf16 %v1737, %v1737
      %v1994 = vpack.c.bf16 %v1738, %v1738
      %v1995 = vpack.c.bf16 %v1739, %v1739
      %v1996 = vpack.c.bf16 %v1740, %v1740
      %v1997 = vpack.c.bf16 %v1741, %v1741
      %v1998 = vpack.c.bf16 %v1742, %v1742
      %v1999 = vpack.c.bf16 %v1743, %v1743
      %v2000 = vpack.c.bf16 %v1744, %v1744
      %v2001 = vpack.c.bf16 %v1745, %v1745
      %v2002 = vpack.c.bf16 %v1746, %v1746
      %v2003 = vpack.c.bf16 %v1747, %v1747
      %v2004 = vpack.c.bf16 %v1748, %v1748
      %v2005 = vpack.c.bf16 %v1749, %v1749
      %v2006 = vpack.c.bf16 %v1750, %v1750
      %v2007 = vpack.c.bf16 %v1751, %v1751
      %v2008 = vpack.c.bf16 %v1752, %v1752
      %v2009 = vpack.c.bf16 %v1753, %v1753
      %v2010 = vpack.c.bf16 %v1754, %v1754
      %v2011 = vpack.c.bf16 %v1755, %v1755
      %v2012 = vpack.c.bf16 %v1756, %v1756
      %v2013 = vpack.c.bf16 %v1757, %v1757
      %v2014 = vpack.c.bf16 %v1758, %v1758
      %v2015 = vpack.c.bf16 %v1759, %v1759
      %v2016 = vpack.c.bf16 %v1760, %v1760
      %v2017 = vpack.c.bf16 %v1761, %v1761
      %v2018 = vpack.c.bf16 %v1762, %v1762
      %v2019 = vpack.c.bf16 %v1763, %v1763
      %v2020 = vpack.c.bf16 %v1764, %v1764
      %v2021 = vpack.c.bf16 %v1765, %v1765
      %v2022 = vpack.c.bf16 %v1766, %v1766
      %v2023 = vpack.c.bf16 %v1767, %v1767
      %v2024 = vpack.c.bf16 %v1768, %v1768
      %v2025 = vpack.c.bf16 %v1769, %v1769
      %v2026 = vpack.c.bf16 %v1770, %v1770
      %v2027 = vpack.c.bf16 %v1771, %v1771
      %v2028 = vpack.c.bf16 %v1772, %v1772
      %v2029 = vpack.c.bf16 %v1773, %v1773
      %v2030 = vpack.c.bf16 %v1774, %v1774
      %v2031 = vpack.c.bf16 %v1775, %v1775
      %v2032 = vpack.c.bf16 %v1776, %v1776
      %v2033 = vpack.c.bf16 %v1777, %v1777
      %v2034 = vpack.c.bf16 %v1778, %v1778
      %v2035 = vpack.c.bf16 %v1779, %v1779
      %v2036 = vpack.c.bf16 %v1780, %v1780
      %v2037 = vpack.c.bf16 %v1781, %v1781
      %v2038 = vpack.c.bf16 %v1782, %v1782
      %v2039 = vpack.c.bf16 %v1783, %v1783
      %v2040 = vpack.c.bf16 %v1784, %v1784
      %v2041 = vpack.c.bf16 %v1785, %v1785
      %v2042 = vpack.c.bf16 %v1786, %v1786
      %v2043 = vpack.c.bf16 %v1787, %v1787
      %v2044 = vpack.c.bf16 %v1788, %v1788
      %v2045 = vpack.c.bf16 %v1789, %v1789
      %v2046 = vpack.c.bf16 %v1790, %v1790
      %v2047 = vpack.c.bf16 %v1791, %v1791
      %v2048 = vpack.c.bf16 %v1792, %v1792
      %v2049 = vpack.c.bf16 %v1793, %v1793
      %v2050 = vpack.c.bf16 %v1794, %v1794
      %v2051 = vpack.c.bf16 %v1795, %v1795
      %v2052 = vpack.c.bf16 %v1796, %v1796
      %v2053 = vpack.c.bf16 %v1797, %v1797
      %v2054 = vpack.c.bf16 %v1798, %v1798
      %v2055 = vpack.c.bf16 %v1799, %v1799
      %v2056 = vpack.c.bf16 %v1800, %v1800
      %v2057 = vpack.c.bf16 %v1801, %v1801
      %v2058 = vpack.c.bf16 %v1802, %v1802
      %v2059 = vpack.c.bf16 %v1803, %v1803
      %v2060 = vpack.c.bf16 %v1804, %v1804
      %v2061 = vpack.c.bf16 %v1805, %v1805
      %v2062 = vpack.c.bf16 %v1806, %v1806
      %v2063 = vpack.c.bf16 %v1807, %v1807
      %v2064 = vpack.c.bf16 %v1808, %v1808
      %v2065 = vpack.c.bf16 %v1809, %v1809
      %v2066 = vpack.c.bf16 %v1810, %v1810
      %v2067 = vpack.c.bf16 %v1811, %v1811
      %v2068 = vpack.c.bf16 %v1812, %v1812
      %v2069 = vpack.c.bf16 %v1813, %v1813
      %v2198 = vunpack.c.l.b16 %v1942
      %v2199 = vunpack.c.l.b16 %v1943
      %v2200 = vunpack.c.l.b16 %v1944
      %v2201 = vunpack.c.l.b16 %v1945
      %v2202 = vunpack.c.l.b16 %v1946
      %v2203 = vunpack.c.l.b16 %v1947
      %v2204 = vunpack.c.l.b16 %v1948
      %v2205 = vunpack.c.l.b16 %v1949
      %v2206 = vunpack.c.l.b16 %v1950
      %v2207 = vunpack.c.l.b16 %v1951
      %v2208 = vunpack.c.l.b16 %v1952
      %v2209 = vunpack.c.l.b16 %v1953
      %v2210 = vunpack.c.l.b16 %v1954
      %v2211 = vunpack.c.l.b16 %v1955
      %v2212 = vunpack.c.l.b16 %v1956
      %v2213 = vunpack.c.l.b16 %v1957
      %v2214 = vunpack.c.l.b16 %v1958
      %v2215 = vunpack.c.l.b16 %v1959
      %v2216 = vunpack.c.l.b16 %v1960
      %v2217 = vunpack.c.l.b16 %v1961
      %v2218 = vunpack.c.l.b16 %v1962
      %v2219 = vunpack.c.l.b16 %v1963
      %v2220 = vunpack.c.l.b16 %v1964
      %v2221 = vunpack.c.l.b16 %v1965
      %v2222 = vunpack.c.l.b16 %v1966
      %v2223 = vunpack.c.l.b16 %v1967
      %v2224 = vunpack.c.l.b16 %v1968
      %v2225 = vunpack.c.l.b16 %v1969
      %v2226 = vunpack.c.l.b16 %v1970
      %v2227 = vunpack.c.l.b16 %v1971
      %v2228 = vunpack.c.l.b16 %v1972
      %v2229 = vunpack.c.l.b16 %v1973
      %v2230 = vunpack.c.l.b16 %v1974
      %v2231 = vunpack.c.l.b16 %v1975
      %v2232 = vunpack.c.l.b16 %v1976
      %v2233 = vunpack.c.l.b16 %v1977
      %v2234 = vunpack.c.l.b16 %v1978
      %v2235 = vunpack.c.l.b16 %v1979
      %v2236 = vunpack.c.l.b16 %v1980
      %v2237 = vunpack.c.l.b16 %v1981
      %v2238 = vunpack.c.l.b16 %v1982
      %v2239 = vunpack.c.l.b16 %v1983
      %v2240 = vunpack.c.l.b16 %v1984
      %v2241 = vunpack.c.l.b16 %v1985
      %v2242 = vunpack.c.l.b16 %v1986
      %v2243 = vunpack.c.l.b16 %v1987
      %v2244 = vunpack.c.l.b16 %v1988
      %v2245 = vunpack.c.l.b16 %v1989
      %v2246 = vunpack.c.l.b16 %v1990
      %v2247 = vunpack.c.l.b16 %v1991
      %v2248 = vunpack.c.l.b16 %v1992
      %v2249 = vunpack.c.l.b16 %v1993
      %v2250 = vunpack.c.l.b16 %v1994
      %v2251 = vunpack.c.l.b16 %v1995
      %v2252 = vunpack.c.l.b16 %v1996
      %v2253 = vunpack.c.l.b16 %v1997
      %v2254 = vunpack.c.l.b16 %v1998
      %v2255 = vunpack.c.l.b16 %v1999
      %v2256 = vunpack.c.l.b16 %v2000
      %v2257 = vunpack.c.l.b16 %v2001
      %v2258 = vunpack.c.l.b16 %v2002
      %v2259 = vunpack.c.l.b16 %v2003
      %v2260 = vunpack.c.l.b16 %v2004
      %v2261 = vunpack.c.l.b16 %v2005
      %v2262 = vunpack.c.l.b16 %v2006
      %v2263 = vunpack.c.l.b16 %v2007
      %v2264 = vunpack.c.l.b16 %v2008
      %v2265 = vunpack.c.l.b16 %v2009
      %v2266 = vunpack.c.l.b16 %v2010
      %v2267 = vunpack.c.l.b16 %v2011
      %v2268 = vunpack.c.l.b16 %v2012
      %v2269 = vunpack.c.l.b16 %v2013
      %v2270 = vunpack.c.l.b16 %v2014
      %v2271 = vunpack.c.l.b16 %v2015
      %v2272 = vunpack.c.l.b16 %v2016
      %v2273 = vunpack.c.l.b16 %v2017
      %v2274 = vunpack.c.l.b16 %v2018
      %v2275 = vunpack.c.l.b16 %v2019
      %v2276 = vunpack.c.l.b16 %v2020
      %v2277 = vunpack.c.l.b16 %v2021
      %v2278 = vunpack.c.l.b16 %v2022
      %v2279 = vunpack.c.l.b16 %v2023
      %v2280 = vunpack.c.l.b16 %v2024
      %v2281 = vunpack.c.l.b16 %v2025
      %v2282 = vunpack.c.l.b16 %v2026
      %v2283 = vunpack.c.l.b16 %v2027
      %v2284 = vunpack.c.l.b16 %v2028
      %v2285 = vunpack.c.l.b16 %v2029
      %v2286 = vunpack.c.l.b16 %v2030
      %v2287 = vunpack.c.l.b16 %v2031
      %v2288 = vunpack.c.l.b16 %v2032
      %v2289 = vunpack.c.l.b16 %v2033
      %v2290 = vunpack.c.l.b16 %v2034
      %v2291 = vunpack.c.l.b16 %v2035
      %v2292 = vunpack.c.l.b16 %v2036
      %v2293 = vunpack.c.l.b16 %v2037
      %v2294 = vunpack.c.l.b16 %v2038
      %v2295 = vunpack.c.l.b16 %v2039
      %v2296 = vunpack.c.l.b16 %v2040
      %v2297 = vunpack.c.l.b16 %v2041
      %v2298 = vunpack.c.l.b16 %v2042
      %v2299 = vunpack.c.l.b16 %v2043
      %v2300 = vunpack.c.l.b16 %v2044
      %v2301 = vunpack.c.l.b16 %v2045
      %v2302 = vunpack.c.l.b16 %v2046
      %v2303 = vunpack.c.l.b16 %v2047
      %v2304 = vunpack.c.l.b16 %v2048
      %v2305 = vunpack.c.l.b16 %v2049
      %v2306 = vunpack.c.l.b16 %v2050
      %v2307 = vunpack.c.l.b16 %v2051
      %v2308 = vunpack.c.l.b16 %v2052
      %v2309 = vunpack.c.l.b16 %v2053
      %v2310 = vunpack.c.l.b16 %v2054
      %v2311 = vunpack.c.l.b16 %v2055
      %v2312 = vunpack.c.l.b16 %v2056
      %v2313 = vunpack.c.l.b16 %v2057
      %v2314 = vunpack.c.l.b16 %v2058
      %v2315 = vunpack.c.l.b16 %v2059
      %v2316 = vunpack.c.l.b16 %v2060
      %v2317 = vunpack.c.l.b16 %v2061
      %v2318 = vunpack.c.l.b16 %v2062
      %v2319 = vunpack.c.l.b16 %v2063
      %v2320 = vunpack.c.l.b16 %v2064
      %v2321 = vunpack.c.l.b16 %v2065
      %v2322 = vunpack.c.l.b16 %v2066
      %v2323 = vunpack.c.l.b16 %v2067
      %v2324 = vunpack.c.l.b16 %v2068
      %v2325 = vunpack.c.l.b16 %v2069
      %v2326 = vrot.slane %v2200, 7
      %vm2327 = vcmask 1041409
      %v2328 = vsel %vm2327, %v2326, %v2198
      %v2329 = vrot.slane %v2202, 6
      %vm2330 = vcmask 1042434
      %v2331 = vsel %vm2330, %v2329, %v2328
      %v2332 = vrot.slane %v2204, 5
      %vm2333 = vcmask 1043459
      %v2334 = vsel %vm2333, %v2332, %v2331
      %v2335 = vrot.slane %v2206, 4
      %vm2336 = vcmask 1044484
      %v2337 = vsel %vm2336, %v2335, %v2334
      %v2338 = vrot.slane %v2208, 3
      %vm2339 = vcmask 1045509
      %v2340 = vsel %vm2339, %v2338, %v2337
      %v2341 = vrot.slane %v2210, 2
      %vm2342 = vcmask 1046534
      %v2343 = vsel %vm2342, %v2341, %v2340
      %v2344 = vrot.slane %v2212, 1
      %vm2345 = vcmask 1047559
      %v2346 = vsel %vm2345, %v2344, %v2343
      %v2347 = vrot.slane %v2201, 7
      %v2348 = vsel %vm2327, %v2347, %v2199
      %v2349 = vrot.slane %v2203, 6
      %v2350 = vsel %vm2330, %v2349, %v2348
      %v2351 = vrot.slane %v2205, 5
      %v2352 = vsel %vm2333, %v2351, %v2350
      %v2353 = vrot.slane %v2207, 4
      %v2354 = vsel %vm2336, %v2353, %v2352
      %v2355 = vrot.slane %v2209, 3
      %v2356 = vsel %vm2339, %v2355, %v2354
      %v2357 = vrot.slane %v2211, 2
      %v2358 = vsel %vm2342, %v2357, %v2356
      %v2359 = vrot.slane %v2213, 1
      %v2360 = vsel %vm2345, %v2359, %v2358
      %v2361 = vrot.slane %v2216, 7
      %v2362 = vsel %vm2327, %v2361, %v2214
      %v2363 = vrot.slane %v2218, 6
      %v2364 = vsel %vm2330, %v2363, %v2362
      %v2365 = vrot.slane %v2220, 5
      %v2366 = vsel %vm2333, %v2365, %v2364
      %v2367 = vrot.slane %v2222, 4
      %v2368 = vsel %vm2336, %v2367, %v2366
      %v2369 = vrot.slane %v2224, 3
      %v2370 = vsel %vm2339, %v2369, %v2368
      %v2371 = vrot.slane %v2226, 2
      %v2372 = vsel %vm2342, %v2371, %v2370
      %v2373 = vrot.slane %v2228, 1
      %v2374 = vsel %vm2345, %v2373, %v2372
      %v2375 = vrot.slane %v2217, 7
      %v2376 = vsel %vm2327, %v2375, %v2215
      %v2377 = vrot.slane %v2219, 6
      %v2378 = vsel %vm2330, %v2377, %v2376
      %v2379 = vrot.slane %v2221, 5
      %v2380 = vsel %vm2333, %v2379, %v2378
      %v2381 = vrot.slane %v2223, 4
      %v2382 = vsel %vm2336, %v2381, %v2380
      %v2383 = vrot.slane %v2225, 3
      %v2384 = vsel %vm2339, %v2383, %v2382
      %v2385 = vrot.slane %v2227, 2
      %v2386 = vsel %vm2342, %v2385, %v2384
      %v2387 = vrot.slane %v2229, 1
      %v2388 = vsel %vm2345, %v2387, %v2386
      %v2389 = vrot.slane %v2232, 7
      %v2390 = vsel %vm2327, %v2389, %v2230
      %v2391 = vrot.slane %v2234, 6
      %v2392 = vsel %vm2330, %v2391, %v2390
      %v2393 = vrot.slane %v2236, 5
      %v2394 = vsel %vm2333, %v2393, %v2392
      %v2395 = vrot.slane %v2238, 4
      %v2396 = vsel %vm2336, %v2395, %v2394
      %v2397 = vrot.slane %v2240, 3
      %v2398 = vsel %vm2339, %v2397, %v2396
      %v2399 = vrot.slane %v2242, 2
      %v2400 = vsel %vm2342, %v2399, %v2398
      %v2401 = vrot.slane %v2244, 1
      %v2402 = vsel %vm2345, %v2401, %v2400
      %v2403 = vrot.slane %v2233, 7
      %v2404 = vsel %vm2327, %v2403, %v2231
      %v2405 = vrot.slane %v2235, 6
      %v2406 = vsel %vm2330, %v2405, %v2404
      %v2407 = vrot.slane %v2237, 5
      %v2408 = vsel %vm2333, %v2407, %v2406
      %v2409 = vrot.slane %v2239, 4
      %v2410 = vsel %vm2336, %v2409, %v2408
      %v2411 = vrot.slane %v2241, 3
      %v2412 = vsel %vm2339, %v2411, %v2410
      %v2413 = vrot.slane %v2243, 2
      %v2414 = vsel %vm2342, %v2413, %v2412
      %v2415 = vrot.slane %v2245, 1
      %v2416 = vsel %vm2345, %v2415, %v2414
      %v2417 = vrot.slane %v2248, 7
      %v2418 = vsel %vm2327, %v2417, %v2246
      %v2419 = vrot.slane %v2250, 6
      %v2420 = vsel %vm2330, %v2419, %v2418
      %v2421 = vrot.slane %v2252, 5
      %v2422 = vsel %vm2333, %v2421, %v2420
      %v2423 = vrot.slane %v2254, 4
      %v2424 = vsel %vm2336, %v2423, %v2422
      %v2425 = vrot.slane %v2256, 3
      %v2426 = vsel %vm2339, %v2425, %v2424
      %v2427 = vrot.slane %v2258, 2
      %v2428 = vsel %vm2342, %v2427, %v2426
      %v2429 = vrot.slane %v2260, 1
      %v2430 = vsel %vm2345, %v2429, %v2428
      %v2431 = vrot.slane %v2249, 7
      %v2432 = vsel %vm2327, %v2431, %v2247
      %v2433 = vrot.slane %v2251, 6
      %v2434 = vsel %vm2330, %v2433, %v2432
      %v2435 = vrot.slane %v2253, 5
      %v2436 = vsel %vm2333, %v2435, %v2434
      %v2437 = vrot.slane %v2255, 4
      %v2438 = vsel %vm2336, %v2437, %v2436
      %v2439 = vrot.slane %v2257, 3
      %v2440 = vsel %vm2339, %v2439, %v2438
      %v2441 = vrot.slane %v2259, 2
      %v2442 = vsel %vm2342, %v2441, %v2440
      %v2443 = vrot.slane %v2261, 1
      %v2444 = vsel %vm2345, %v2443, %v2442
      %v2445 = vrot.slane %v2264, 7
      %v2446 = vsel %vm2327, %v2445, %v2262
      %v2447 = vrot.slane %v2266, 6
      %v2448 = vsel %vm2330, %v2447, %v2446
      %v2449 = vrot.slane %v2268, 5
      %v2450 = vsel %vm2333, %v2449, %v2448
      %v2451 = vrot.slane %v2270, 4
      %v2452 = vsel %vm2336, %v2451, %v2450
      %v2453 = vrot.slane %v2272, 3
      %v2454 = vsel %vm2339, %v2453, %v2452
      %v2455 = vrot.slane %v2274, 2
      %v2456 = vsel %vm2342, %v2455, %v2454
      %v2457 = vrot.slane %v2276, 1
      %v2458 = vsel %vm2345, %v2457, %v2456
      %v2459 = vrot.slane %v2265, 7
      %v2460 = vsel %vm2327, %v2459, %v2263
      %v2461 = vrot.slane %v2267, 6
      %v2462 = vsel %vm2330, %v2461, %v2460
      %v2463 = vrot.slane %v2269, 5
      %v2464 = vsel %vm2333, %v2463, %v2462
      %v2465 = vrot.slane %v2271, 4
      %v2466 = vsel %vm2336, %v2465, %v2464
      %v2467 = vrot.slane %v2273, 3
      %v2468 = vsel %vm2339, %v2467, %v2466
      %v2469 = vrot.slane %v2275, 2
      %v2470 = vsel %vm2342, %v2469, %v2468
      %v2471 = vrot.slane %v2277, 1
      %v2472 = vsel %vm2345, %v2471, %v2470
      %v2473 = vrot.slane %v2280, 7
      %v2474 = vsel %vm2327, %v2473, %v2278
      %v2475 = vrot.slane %v2282, 6
      %v2476 = vsel %vm2330, %v2475, %v2474
      %v2477 = vrot.slane %v2284, 5
      %v2478 = vsel %vm2333, %v2477, %v2476
      %v2479 = vrot.slane %v2286, 4
      %v2480 = vsel %vm2336, %v2479, %v2478
      %v2481 = vrot.slane %v2288, 3
      %v2482 = vsel %vm2339, %v2481, %v2480
      %v2483 = vrot.slane %v2290, 2
      %v2484 = vsel %vm2342, %v2483, %v2482
      %v2485 = vrot.slane %v2292, 1
      %v2486 = vsel %vm2345, %v2485, %v2484
      %v2487 = vrot.slane %v2281, 7
      %v2488 = vsel %vm2327, %v2487, %v2279
      %v2489 = vrot.slane %v2283, 6
      %v2490 = vsel %vm2330, %v2489, %v2488
      %v2491 = vrot.slane %v2285, 5
      %v2492 = vsel %vm2333, %v2491, %v2490
      %v2493 = vrot.slane %v2287, 4
      %v2494 = vsel %vm2336, %v2493, %v2492
      %v2495 = vrot.slane %v2289, 3
      %v2496 = vsel %vm2339, %v2495, %v2494
      %v2497 = vrot.slane %v2291, 2
      %v2498 = vsel %vm2342, %v2497, %v2496
      %v2499 = vrot.slane %v2293, 1
      %v2500 = vsel %vm2345, %v2499, %v2498
      %v2501 = vrot.slane %v2296, 7
      %v2502 = vsel %vm2327, %v2501, %v2294
      %v2503 = vrot.slane %v2298, 6
      %v2504 = vsel %vm2330, %v2503, %v2502
      %v2505 = vrot.slane %v2300, 5
      %v2506 = vsel %vm2333, %v2505, %v2504
      %v2507 = vrot.slane %v2302, 4
      %v2508 = vsel %vm2336, %v2507, %v2506
      %v2509 = vrot.slane %v2304, 3
      %v2510 = vsel %vm2339, %v2509, %v2508
      %v2511 = vrot.slane %v2306, 2
      %v2512 = vsel %vm2342, %v2511, %v2510
      %v2513 = vrot.slane %v2308, 1
      %v2514 = vsel %vm2345, %v2513, %v2512
      %v2515 = vrot.slane %v2297, 7
      %v2516 = vsel %vm2327, %v2515, %v2295
      %v2517 = vrot.slane %v2299, 6
      %v2518 = vsel %vm2330, %v2517, %v2516
      %v2519 = vrot.slane %v2301, 5
      %v2520 = vsel %vm2333, %v2519, %v2518
      %v2521 = vrot.slane %v2303, 4
      %v2522 = vsel %vm2336, %v2521, %v2520
      %v2523 = vrot.slane %v2305, 3
      %v2524 = vsel %vm2339, %v2523, %v2522
      %v2525 = vrot.slane %v2307, 2
      %v2526 = vsel %vm2342, %v2525, %v2524
      %v2527 = vrot.slane %v2309, 1
      %v2528 = vsel %vm2345, %v2527, %v2526
      %v2529 = vrot.slane %v2312, 7
      %v2530 = vsel %vm2327, %v2529, %v2310
      %v2531 = vrot.slane %v2314, 6
      %v2532 = vsel %vm2330, %v2531, %v2530
      %v2533 = vrot.slane %v2316, 5
      %v2534 = vsel %vm2333, %v2533, %v2532
      %v2535 = vrot.slane %v2318, 4
      %v2536 = vsel %vm2336, %v2535, %v2534
      %v2537 = vrot.slane %v2320, 3
      %v2538 = vsel %vm2339, %v2537, %v2536
      %v2539 = vrot.slane %v2322, 2
      %v2540 = vsel %vm2342, %v2539, %v2538
      %v2541 = vrot.slane %v2324, 1
      %v2542 = vsel %vm2345, %v2541, %v2540
      %v2543 = vrot.slane %v2313, 7
      %v2544 = vsel %vm2327, %v2543, %v2311
      %v2545 = vrot.slane %v2315, 6
      %v2546 = vsel %vm2330, %v2545, %v2544
      %v2547 = vrot.slane %v2317, 5
      %v2548 = vsel %vm2333, %v2547, %v2546
      %v2549 = vrot.slane %v2319, 4
      %v2550 = vsel %vm2336, %v2549, %v2548
      %v2551 = vrot.slane %v2321, 3
      %v2552 = vsel %vm2339, %v2551, %v2550
      %v2553 = vrot.slane %v2323, 2
      %v2554 = vsel %vm2342, %v2553, %v2552
      %v2555 = vrot.slane %v2325, 1
      %v2556 = vsel %vm2345, %v2555, %v2554
      %v2557 = vpack.c.b16 %v2374, %v2346
      %v2558 = vpack.c.b16 %v2388, %v2360
      %v2559 = vpack.c.b16 %v2430, %v2402
      %v2560 = vpack.c.b16 %v2444, %v2416
      %v2561 = vpack.c.b16 %v2486, %v2458
      %v2562 = vpack.c.b16 %v2500, %v2472
      %v2563 = vpack.c.b16 %v2542, %v2514
      %v2564 = vpack.c.b16 %v2556, %v2528
      %v2605 = vunpack.c.l.b16 %v1590
      %v2606 = vunpack.c.l.b16 %v1591
      %v2607 = vunpack.c.l.b16 %v1592
      %v2608 = vunpack.c.l.b16 %v1593
      %v2609 = vunpack.c.l.b16 %v1594
      %v2610 = vunpack.c.l.b16 %v1595
      %v2611 = vunpack.c.l.b16 %v1596
      %v2612 = vunpack.c.l.b16 %v1597
      %v2613 = vunpack.c.l.b16 %v1598
      %v2614 = vunpack.c.l.b16 %v1599
      %v2615 = vunpack.c.l.b16 %v1600
      %v2616 = vunpack.c.l.b16 %v1601
      %v2617 = vunpack.c.l.b16 %v1602
      %v2618 = vunpack.c.l.b16 %v1603
      %v2619 = vunpack.c.l.b16 %v1604
      %v2620 = vunpack.c.l.b16 %v1605
      %v2621 = vunpack.c.l.b16 %v1606
      %v2622 = vunpack.c.l.b16 %v1607
      %v2623 = vunpack.c.l.b16 %v1608
      %v2624 = vunpack.c.l.b16 %v1609
      %v2625 = vunpack.c.l.b16 %v1610
      %v2626 = vunpack.c.l.b16 %v1611
      %v2627 = vunpack.c.l.b16 %v1612
      %v2628 = vunpack.c.l.b16 %v1613
      %v2629 = vunpack.c.l.b16 %v1614
      %v2630 = vunpack.c.l.b16 %v1615
      %v2631 = vunpack.c.l.b16 %v1616
      %v2632 = vunpack.c.l.b16 %v1617
      %v2633 = vunpack.c.l.b16 %v1618
      %v2634 = vunpack.c.l.b16 %v1619
      %v2635 = vunpack.c.l.b16 %v1620
      %v2636 = vunpack.c.l.b16 %v1621
      %v2637 = vpack.c.b16 %v2606, %v2605
      %v2638 = vpack.c.b16 %v2608, %v2607
      %v2639 = vpack.c.b16 %v2610, %v2609
      %v2640 = vpack.c.b16 %v2612, %v2611
      %v2641 = vpack.c.b16 %v2614, %v2613
      %v2642 = vpack.c.b16 %v2616, %v2615
      %v2643 = vpack.c.b16 %v2618, %v2617
      %v2644 = vpack.c.b16 %v2620, %v2619
      %v2645 = vpack.c.b16 %v2622, %v2621
      %v2646 = vpack.c.b16 %v2624, %v2623
      %v2647 = vpack.c.b16 %v2626, %v2625
      %v2648 = vpack.c.b16 %v2628, %v2627
      %v2649 = vpack.c.b16 %v2630, %v2629
      %v2650 = vpack.c.b16 %v2632, %v2631
      %v2651 = vpack.c.b16 %v2634, %v2633
      %v2652 = vpack.c.b16 %v2636, %v2635
      %2669 = vmatpush.bf16.msra.mxu0 %v2644
      %2670 = vmatpush.bf16.msra.mxu0 %v2643
      %2671 = vmatpush.bf16.msra.mxu0 %v2642
      %2672 = vmatpush.bf16.msra.mxu0 %v2641
      %2673 = vmatpush.bf16.msra.mxu0 %v2640
      %2674 = vmatpush.bf16.msra.mxu0 %v2639
      %2675 = vmatpush.bf16.msra.mxu0 %v2638
      %2676 = vmatpush.bf16.msra.mxu0 %v2637
      %2677 = vmatmul.bf16.gmra.mxu0 %v2557
      %v2678 = vpop.f32.mrf.mxu0
      %v2679 = vadd.f32 0.0, %v2678
      %v2680 = vpop.f32.mrf.mxu0
      %v2681 = vadd.f32 0.0, %v2680
      %2682 = vmatmul.bf16.gmra.mxu0 %v2559
      %v2683 = vpop.f32.mrf.mxu0
      %v2684 = vadd.f32 0.0, %v2683
      %v2685 = vpop.f32.mrf.mxu0
      %v2686 = vadd.f32 0.0, %v2685
      %2687 = vmatmul.bf16.gmra.mxu0 %v2561
      %v2688 = vpop.f32.mrf.mxu0
      %v2689 = vadd.f32 0.0, %v2688
      %v2690 = vpop.f32.mrf.mxu0
      %v2691 = vadd.f32 0.0, %v2690
      %2692 = vmatmul.bf16.gmra.mxu0 %v2563
      %v2693 = vpop.f32.mrf.mxu0
      %v2694 = vadd.f32 0.0, %v2693
      %v2695 = vpop.f32.mrf.mxu0
      %v2696 = vadd.f32 0.0, %v2695
      %2697 = vdwg.mxu0
      %2698 = vmatpush.bf16.msra.mxu0 %v2652
      %2699 = vmatpush.bf16.msra.mxu0 %v2651
      %2700 = vmatpush.bf16.msra.mxu0 %v2650
      %2701 = vmatpush.bf16.msra.mxu0 %v2649
      %2702 = vmatpush.bf16.msra.mxu0 %v2648
      %2703 = vmatpush.bf16.msra.mxu0 %v2647
      %2704 = vmatpush.bf16.msra.mxu0 %v2646
      %2705 = vmatpush.bf16.msra.mxu0 %v2645
      %2706 = vmatmul.bf16.gmra.mxu0 %v2558
      %v2707 = vpop.f32.mrf.mxu0
      %v2708 = vadd.f32 %v2679, %v2707
      %v2709 = vpop.f32.mrf.mxu0
      %v2710 = vadd.f32 %v2681, %v2709
      %2711 = vmatmul.bf16.gmra.mxu0 %v2560
      %v2712 = vpop.f32.mrf.mxu0
      %v2713 = vadd.f32 %v2684, %v2712
      %v2714 = vpop.f32.mrf.mxu0
      %v2715 = vadd.f32 %v2686, %v2714
      %2716 = vmatmul.bf16.gmra.mxu0 %v2562
      %v2717 = vpop.f32.mrf.mxu0
      %v2718 = vadd.f32 %v2689, %v2717
      %v2719 = vpop.f32.mrf.mxu0
      %v2720 = vadd.f32 %v2691, %v2719
      %2721 = vmatmul.bf16.gmra.mxu0 %v2564
      %v2722 = vpop.f32.mrf.mxu0
      %v2723 = vadd.f32 %v2694, %v2722
      %v2724 = vpop.f32.mrf.mxu0
      %v2725 = vadd.f32 %v2696, %v2724
      %2726 = vdwg.mxu0
      %v2727 = vld [vmem:[%s6] sm:$0xf]
      %v2728 = vld [vmem:[%s6 + $0x4] sm:$0xf]
      %v2729 = vld [vmem:[%s6 + $0x8] sm:$0xf]
      %v2730 = vld [vmem:[%s6 + $0xc] sm:$0xf]
      %v2731 = vld [vmem:[%s6 + $0x10] sm:$0xf]
      %v2732 = vld [vmem:[%s6 + $0x14] sm:$0xf]
      %v2733 = vld [vmem:[%s6 + $0x18] sm:$0xf]
      %v2734 = vld [vmem:[%s6 + $0x1c] sm:$0xf]
      %v2735 = vld [vmem:[%s6 + $0x20] sm:$0xf]
      %v2736 = vld [vmem:[%s6 + $0x24] sm:$0xf]
      %v2737 = vld [vmem:[%s6 + $0x28] sm:$0xf]
      %v2738 = vld [vmem:[%s6 + $0x2c] sm:$0xf]
      %v2739 = vld [vmem:[%s6 + $0x30] sm:$0xf]
      %v2740 = vld [vmem:[%s6 + $0x34] sm:$0xf]
      %v2741 = vld [vmem:[%s6 + $0x38] sm:$0xf]
      %v2742 = vld [vmem:[%s6 + $0x3c] sm:$0xf]
      %v2743 = vld [vmem:[%s6 + $0x40] sm:$0xf]
      %v2744 = vld [vmem:[%s6 + $0x44] sm:$0xf]
      %v2745 = vld [vmem:[%s6 + $0x48] sm:$0xf]
      %v2746 = vld [vmem:[%s6 + $0x4c] sm:$0xf]
      %v2747 = vld [vmem:[%s6 + $0x50] sm:$0xf]
      %v2748 = vld [vmem:[%s6 + $0x54] sm:$0xf]
      %v2749 = vld [vmem:[%s6 + $0x58] sm:$0xf]
      %v2750 = vld [vmem:[%s6 + $0x5c] sm:$0xf]
      %v2751 = vld [vmem:[%s6 + $0x60] sm:$0xf]
      %v2752 = vld [vmem:[%s6 + $0x64] sm:$0xf]
      %v2753 = vld [vmem:[%s6 + $0x68] sm:$0xf]
      %v2754 = vld [vmem:[%s6 + $0x6c] sm:$0xf]
      %v2755 = vld [vmem:[%s6 + $0x70] sm:$0xf]
      %v2756 = vld [vmem:[%s6 + $0x74] sm:$0xf]
      %v2757 = vld [vmem:[%s6 + $0x78] sm:$0xf]
      %v2758 = vld [vmem:[%s6 + $0x7c] sm:$0xf]
      %v2791 = vunpack.c.l.b16 %v2727
      %v2792 = vunpack.c.l.b16 %v2728
      %v2793 = vunpack.c.l.b16 %v2729
      %v2794 = vunpack.c.l.b16 %v2730
      %v2795 = vunpack.c.l.b16 %v2731
      %v2796 = vunpack.c.l.b16 %v2732
      %v2797 = vunpack.c.l.b16 %v2733
      %v2798 = vunpack.c.l.b16 %v2734
      %v2799 = vunpack.c.l.b16 %v2735
      %v2800 = vunpack.c.l.b16 %v2736
      %v2801 = vunpack.c.l.b16 %v2737
      %v2802 = vunpack.c.l.b16 %v2738
      %v2803 = vunpack.c.l.b16 %v2739
      %v2804 = vunpack.c.l.b16 %v2740
      %v2805 = vunpack.c.l.b16 %v2741
      %v2806 = vunpack.c.l.b16 %v2742
      %v2807 = vunpack.c.l.b16 %v2743
      %v2808 = vunpack.c.l.b16 %v2744
      %v2809 = vunpack.c.l.b16 %v2745
      %v2810 = vunpack.c.l.b16 %v2746
      %v2811 = vunpack.c.l.b16 %v2747
      %v2812 = vunpack.c.l.b16 %v2748
      %v2813 = vunpack.c.l.b16 %v2749
      %v2814 = vunpack.c.l.b16 %v2750
      %v2815 = vunpack.c.l.b16 %v2751
      %v2816 = vunpack.c.l.b16 %v2752
      %v2817 = vunpack.c.l.b16 %v2753
      %v2818 = vunpack.c.l.b16 %v2754
      %v2819 = vunpack.c.l.b16 %v2755
      %v2820 = vunpack.c.l.b16 %v2756
      %v2821 = vunpack.c.l.b16 %v2757
      %v2822 = vunpack.c.l.b16 %v2758
      %v2823 = vpack.c.b16 %v2792, %v2791
      %v2824 = vpack.c.b16 %v2794, %v2793
      %v2825 = vpack.c.b16 %v2796, %v2795
      %v2826 = vpack.c.b16 %v2798, %v2797
      %v2827 = vpack.c.b16 %v2800, %v2799
      %v2828 = vpack.c.b16 %v2802, %v2801
      %v2829 = vpack.c.b16 %v2804, %v2803
      %v2830 = vpack.c.b16 %v2806, %v2805
      %v2831 = vpack.c.b16 %v2808, %v2807
      %v2832 = vpack.c.b16 %v2810, %v2809
      %v2833 = vpack.c.b16 %v2812, %v2811
      %v2834 = vpack.c.b16 %v2814, %v2813
      %v2835 = vpack.c.b16 %v2816, %v2815
      %v2836 = vpack.c.b16 %v2818, %v2817
      %v2837 = vpack.c.b16 %v2820, %v2819
      %v2838 = vpack.c.b16 %v2822, %v2821
      %2855 = vmatpush.bf16.msra.mxu0 %v2830
      %2856 = vmatpush.bf16.msra.mxu0 %v2829
      %2857 = vmatpush.bf16.msra.mxu0 %v2828
      %2858 = vmatpush.bf16.msra.mxu0 %v2827
      %2859 = vmatpush.bf16.msra.mxu0 %v2826
      %2860 = vmatpush.bf16.msra.mxu0 %v2825
      %2861 = vmatpush.bf16.msra.mxu0 %v2824
      %2862 = vmatpush.bf16.msra.mxu0 %v2823
      %2863 = vmatmul.bf16.gmra.mxu0 %v2557
      %v2864 = vpop.f32.mrf.mxu0
      %v2865 = vadd.f32 0.0, %v2864
      %v2866 = vpop.f32.mrf.mxu0
      %v2867 = vadd.f32 0.0, %v2866
      %2868 = vmatmul.bf16.gmra.mxu0 %v2559
      %v2869 = vpop.f32.mrf.mxu0
      %v2870 = vadd.f32 0.0, %v2869
      %v2871 = vpop.f32.mrf.mxu0
      %v2872 = vadd.f32 0.0, %v2871
      %2873 = vmatmul.bf16.gmra.mxu0 %v2561
      %v2874 = vpop.f32.mrf.mxu0
      %v2875 = vadd.f32 0.0, %v2874
      %v2876 = vpop.f32.mrf.mxu0
      %v2877 = vadd.f32 0.0, %v2876
      %2878 = vmatmul.bf16.gmra.mxu0 %v2563
      %v2879 = vpop.f32.mrf.mxu0
      %v2880 = vadd.f32 0.0, %v2879
      %v2881 = vpop.f32.mrf.mxu0
      %v2882 = vadd.f32 0.0, %v2881
      %2883 = vdwg.mxu0
      %2884 = vmatpush.bf16.msra.mxu0 %v2838
      %2885 = vmatpush.bf16.msra.mxu0 %v2837
      %2886 = vmatpush.bf16.msra.mxu0 %v2836
      %2887 = vmatpush.bf16.msra.mxu0 %v2835
      %2888 = vmatpush.bf16.msra.mxu0 %v2834
      %2889 = vmatpush.bf16.msra.mxu0 %v2833
      %2890 = vmatpush.bf16.msra.mxu0 %v2832
      %2891 = vmatpush.bf16.msra.mxu0 %v2831
      %2892 = vmatmul.bf16.gmra.mxu0 %v2558
      %v2893 = vpop.f32.mrf.mxu0
      %v2894 = vadd.f32 %v2865, %v2893
      %v2895 = vpop.f32.mrf.mxu0
      %v2896 = vadd.f32 %v2867, %v2895
      %2897 = vmatmul.bf16.gmra.mxu0 %v2560
      %v2898 = vpop.f32.mrf.mxu0
      %v2899 = vadd.f32 %v2870, %v2898
      %v2900 = vpop.f32.mrf.mxu0
      %v2901 = vadd.f32 %v2872, %v2900
      %2902 = vmatmul.bf16.gmra.mxu0 %v2562
      %v2903 = vpop.f32.mrf.mxu0
      %v2904 = vadd.f32 %v2875, %v2903
      %v2905 = vpop.f32.mrf.mxu0
      %v2906 = vadd.f32 %v2877, %v2905
      %2907 = vmatmul.bf16.gmra.mxu0 %v2564
      %v2908 = vpop.f32.mrf.mxu0
      %v2909 = vadd.f32 %v2880, %v2908
      %v2910 = vpop.f32.mrf.mxu0
      %v2911 = vadd.f32 %v2882, %v2910
      %2912 = vdwg.mxu0
      %v2913 = vmax.f32 %v2708, %v2894
      %v2914 = vmax.f32 %v2710, %v2896
      %v2915 = vmax.f32 %v2713, %v2899
      %v2916 = vmax.f32 %v2715, %v2901
      %v2917 = vmax.f32 %v2718, %v2904
      %v2918 = vmax.f32 %v2720, %v2906
      %v2919 = vmax.f32 %v2723, %v2909
      %v2920 = vmax.f32 %v2725, %v2911
      %v2921 = vld [vmem:[%s3] sm:$0xf]
      %v2922 = vld [vmem:[%s3 + $0x4] sm:$0xf]
      %v2923 = vld [vmem:[%s3 + $0x8] sm:$0xf]
      %v2924 = vld [vmem:[%s3 + $0xc] sm:$0xf]
      %v2925 = vld [vmem:[%s3 + $0x10] sm:$0xf]
      %v2926 = vld [vmem:[%s3 + $0x14] sm:$0xf]
      %v2927 = vld [vmem:[%s3 + $0x18] sm:$0xf]
      %v2928 = vld [vmem:[%s3 + $0x1c] sm:$0xf]
      %v2929 = vld [vmem:[%s3 + $0x20] sm:$0xf]
      %v2930 = vld [vmem:[%s3 + $0x24] sm:$0xf]
      %v2931 = vld [vmem:[%s3 + $0x28] sm:$0xf]
      %v2932 = vld [vmem:[%s3 + $0x2c] sm:$0xf]
      %v2933 = vld [vmem:[%s3 + $0x30] sm:$0xf]
      %v2934 = vld [vmem:[%s3 + $0x34] sm:$0xf]
      %v2935 = vld [vmem:[%s3 + $0x38] sm:$0xf]
      %v2936 = vld [vmem:[%s3 + $0x3c] sm:$0xf]
      %v2937 = vld [vmem:[%s3 + $0x40] sm:$0xf]
      %v2938 = vld [vmem:[%s3 + $0x44] sm:$0xf]
      %v2939 = vld [vmem:[%s3 + $0x48] sm:$0xf]
      %v2940 = vld [vmem:[%s3 + $0x4c] sm:$0xf]
      %v2941 = vld [vmem:[%s3 + $0x50] sm:$0xf]
      %v2942 = vld [vmem:[%s3 + $0x54] sm:$0xf]
      %v2943 = vld [vmem:[%s3 + $0x58] sm:$0xf]
      %v2944 = vld [vmem:[%s3 + $0x5c] sm:$0xf]
      %v2945 = vld [vmem:[%s3 + $0x60] sm:$0xf]
      %v2946 = vld [vmem:[%s3 + $0x64] sm:$0xf]
      %v2947 = vld [vmem:[%s3 + $0x68] sm:$0xf]
      %v2948 = vld [vmem:[%s3 + $0x6c] sm:$0xf]
      %v2949 = vld [vmem:[%s3 + $0x70] sm:$0xf]
      %v2950 = vld [vmem:[%s3 + $0x74] sm:$0xf]
      %v2951 = vld [vmem:[%s3 + $0x78] sm:$0xf]
      %v2952 = vld [vmem:[%s3 + $0x7c] sm:$0xf]
      %v2953 = vld [vmem:[%s3 + $0x80] sm:$0xf]
      %v2954 = vld [vmem:[%s3 + $0x84] sm:$0xf]
      %v2955 = vld [vmem:[%s3 + $0x88] sm:$0xf]
      %v2956 = vld [vmem:[%s3 + $0x8c] sm:$0xf]
      %v2957 = vld [vmem:[%s3 + $0x90] sm:$0xf]
      %v2958 = vld [vmem:[%s3 + $0x94] sm:$0xf]
      %v2959 = vld [vmem:[%s3 + $0x98] sm:$0xf]
      %v2960 = vld [vmem:[%s3 + $0x9c] sm:$0xf]
      %v2961 = vld [vmem:[%s3 + $0xa0] sm:$0xf]
      %v2962 = vld [vmem:[%s3 + $0xa4] sm:$0xf]
      %v2963 = vld [vmem:[%s3 + $0xa8] sm:$0xf]
      %v2964 = vld [vmem:[%s3 + $0xac] sm:$0xf]
      %v2965 = vld [vmem:[%s3 + $0xb0] sm:$0xf]
      %v2966 = vld [vmem:[%s3 + $0xb4] sm:$0xf]
      %v2967 = vld [vmem:[%s3 + $0xb8] sm:$0xf]
      %v2968 = vld [vmem:[%s3 + $0xbc] sm:$0xf]
      %v2977 = vrot.slane %v2913, 7
      %v2978 = vrot.slane %v2914, 7
      %v2979 = vrot.slane %v2915, 7
      %v2980 = vrot.slane %v2916, 7
      %v2981 = vrot.slane %v2917, 7
      %v2982 = vrot.slane %v2918, 7
      %v2983 = vrot.slane %v2919, 7
      %v2984 = vrot.slane %v2920, 7
      %v2993 = vsel %vm485, 0.0, %v2977
      %v2994 = vsel %vm485, 0.0, %v2978
      %v2995 = vsel %vm485, 0.0, %v2979
      %v2996 = vsel %vm485, 0.0, %v2980
      %v2997 = vsel %vm485, 0.0, %v2981
      %v2998 = vsel %vm485, 0.0, %v2982
      %v2999 = vsel %vm485, 0.0, %v2983
      %v3000 = vsel %vm485, 0.0, %v2984
      %v3001 = vrot.slane %v2913, 1
      %v3002 = vrot.slane %v2914, 1
      %v3003 = vrot.slane %v2915, 1
      %v3004 = vrot.slane %v2916, 1
      %v3005 = vrot.slane %v2917, 1
      %v3006 = vrot.slane %v2918, 1
      %v3007 = vrot.slane %v2919, 1
      %v3008 = vrot.slane %v2920, 1
      %v3017 = vsel %vm534, %v3001, 0.0
      %v3018 = vsel %vm534, %v3002, 0.0
      %v3019 = vsel %vm534, %v3003, 0.0
      %v3020 = vsel %vm534, %v3004, 0.0
      %v3021 = vsel %vm534, %v3005, 0.0
      %v3022 = vsel %vm534, %v3006, 0.0
      %v3023 = vsel %vm534, %v3007, 0.0
      %v3024 = vsel %vm534, %v3008, 0.0
      %v3025 = vpack.c.bf16 %v2994, %v2993
      %v3026 = vpack.c.bf16 %v2914, %v2913
      %v3027 = vpack.c.bf16 %v3018, %v3017
      %v3028 = vpack.c.bf16 %v2996, %v2995
      %v3029 = vpack.c.bf16 %v2916, %v2915
      %v3030 = vpack.c.bf16 %v3020, %v3019
      %v3031 = vpack.c.bf16 %v2998, %v2997
      %v3032 = vpack.c.bf16 %v2918, %v2917
      %v3033 = vpack.c.bf16 %v3022, %v3021
      %v3034 = vpack.c.bf16 %v3000, %v2999
      %v3035 = vpack.c.bf16 %v2920, %v2919
      %v3036 = vpack.c.bf16 %v3024, %v3023
      %v3037 = vld [vmem:[%s4] sm:$0x1]
      %v3039 = vperm.slane %v3037, 0
      %v3089 = vunpack.c.l.b16 %v2921
      %v3090 = vunpack.c.l.b16 %v2922
      %v3091 = vunpack.c.l.b16 %v2923
      %v3092 = vunpack.c.l.b16 %v2924
      %v3093 = vunpack.c.l.b16 %v2925
      %v3094 = vunpack.c.l.b16 %v2926
      %v3095 = vunpack.c.l.b16 %v2927
      %v3096 = vunpack.c.l.b16 %v2928
      %v3097 = vunpack.c.l.b16 %v2929
      %v3098 = vunpack.c.l.b16 %v2930
      %v3099 = vunpack.c.l.b16 %v2931
      %v3100 = vunpack.c.l.b16 %v2932
      %v3101 = vunpack.c.l.b16 %v2933
      %v3102 = vunpack.c.l.b16 %v2934
      %v3103 = vunpack.c.l.b16 %v2935
      %v3104 = vunpack.c.l.b16 %v2936
      %v3105 = vunpack.c.l.b16 %v2937
      %v3106 = vunpack.c.l.b16 %v2938
      %v3107 = vunpack.c.l.b16 %v2939
      %v3108 = vunpack.c.l.b16 %v2940
      %v3109 = vunpack.c.l.b16 %v2941
      %v3110 = vunpack.c.l.b16 %v2942
      %v3111 = vunpack.c.l.b16 %v2943
      %v3112 = vunpack.c.l.b16 %v2944
      %v3113 = vunpack.c.l.b16 %v2945
      %v3114 = vunpack.c.l.b16 %v2946
      %v3115 = vunpack.c.l.b16 %v2947
      %v3116 = vunpack.c.l.b16 %v2948
      %v3117 = vunpack.c.l.b16 %v2949
      %v3118 = vunpack.c.l.b16 %v2950
      %v3119 = vunpack.c.l.b16 %v2951
      %v3120 = vunpack.c.l.b16 %v2952
      %v3121 = vunpack.c.l.b16 %v2953
      %v3122 = vunpack.c.l.b16 %v2954
      %v3123 = vunpack.c.l.b16 %v2955
      %v3124 = vunpack.c.l.b16 %v2956
      %v3125 = vunpack.c.l.b16 %v2957
      %v3126 = vunpack.c.l.b16 %v2958
      %v3127 = vunpack.c.l.b16 %v2959
      %v3128 = vunpack.c.l.b16 %v2960
      %v3129 = vunpack.c.l.b16 %v2961
      %v3130 = vunpack.c.l.b16 %v2962
      %v3131 = vunpack.c.l.b16 %v2963
      %v3132 = vunpack.c.l.b16 %v2964
      %v3133 = vunpack.c.l.b16 %v2965
      %v3134 = vunpack.c.l.b16 %v2966
      %v3135 = vunpack.c.l.b16 %v2967
      %v3136 = vunpack.c.l.b16 %v2968
      %v3137 = vpack.c.b16 %v3090, %v3089
      %v3138 = vpack.c.b16 %v3092, %v3091
      %v3139 = vpack.c.b16 %v3094, %v3093
      %v3140 = vpack.c.b16 %v3096, %v3095
      %v3141 = vpack.c.b16 %v3098, %v3097
      %v3142 = vpack.c.b16 %v3100, %v3099
      %v3143 = vpack.c.b16 %v3102, %v3101
      %v3144 = vpack.c.b16 %v3104, %v3103
      %v3145 = vpack.c.b16 %v3106, %v3105
      %v3146 = vpack.c.b16 %v3108, %v3107
      %v3147 = vpack.c.b16 %v3110, %v3109
      %v3148 = vpack.c.b16 %v3112, %v3111
      %v3149 = vpack.c.b16 %v3114, %v3113
      %v3150 = vpack.c.b16 %v3116, %v3115
      %v3151 = vpack.c.b16 %v3118, %v3117
      %v3152 = vpack.c.b16 %v3120, %v3119
      %v3153 = vpack.c.b16 %v3122, %v3121
      %v3154 = vpack.c.b16 %v3124, %v3123
      %v3155 = vpack.c.b16 %v3126, %v3125
      %v3156 = vpack.c.b16 %v3128, %v3127
      %v3157 = vpack.c.b16 %v3130, %v3129
      %v3158 = vpack.c.b16 %v3132, %v3131
      %v3159 = vpack.c.b16 %v3134, %v3133
      %v3160 = vpack.c.b16 %v3136, %v3135
      %3185 = vmatpush.bf16.msra.mxu0 %v3144
      %3186 = vmatpush.bf16.msra.mxu0 %v3143
      %3187 = vmatpush.bf16.msra.mxu0 %v3142
      %3188 = vmatpush.bf16.msra.mxu0 %v3141
      %3189 = vmatpush.bf16.msra.mxu0 %v3140
      %3190 = vmatpush.bf16.msra.mxu0 %v3139
      %3191 = vmatpush.bf16.msra.mxu0 %v3138
      %3192 = vmatpush.bf16.msra.mxu0 %v3137
      %3193 = vmatmul.bf16.gmra.mxu0 %v3025
      %v3194 = vpop.f32.mrf.mxu0
      %v3195 = vadd.f32 %v3039, %v3194
      %v3196 = vpop.f32.mrf.mxu0
      %v3197 = vadd.f32 %v3039, %v3196
      %3198 = vmatmul.bf16.gmra.mxu0 %v3028
      %v3199 = vpop.f32.mrf.mxu0
      %v3200 = vadd.f32 %v3039, %v3199
      %v3201 = vpop.f32.mrf.mxu0
      %v3202 = vadd.f32 %v3039, %v3201
      %3203 = vmatmul.bf16.gmra.mxu0 %v3031
      %v3204 = vpop.f32.mrf.mxu0
      %v3205 = vadd.f32 %v3039, %v3204
      %v3206 = vpop.f32.mrf.mxu0
      %v3207 = vadd.f32 %v3039, %v3206
      %3208 = vmatmul.bf16.gmra.mxu0 %v3034
      %v3209 = vpop.f32.mrf.mxu0
      %v3210 = vadd.f32 %v3039, %v3209
      %v3211 = vpop.f32.mrf.mxu0
      %v3212 = vadd.f32 %v3039, %v3211
      %3213 = vdwg.mxu0
      %3214 = vmatpush.bf16.msra.mxu0 %v3152
      %3215 = vmatpush.bf16.msra.mxu0 %v3151
      %3216 = vmatpush.bf16.msra.mxu0 %v3150
      %3217 = vmatpush.bf16.msra.mxu0 %v3149
      %3218 = vmatpush.bf16.msra.mxu0 %v3148
      %3219 = vmatpush.bf16.msra.mxu0 %v3147
      %3220 = vmatpush.bf16.msra.mxu0 %v3146
      %3221 = vmatpush.bf16.msra.mxu0 %v3145
      %3222 = vmatmul.bf16.gmra.mxu0 %v3026
      %v3223 = vpop.f32.mrf.mxu0
      %v3224 = vadd.f32 %v3195, %v3223
      %v3225 = vpop.f32.mrf.mxu0
      %v3226 = vadd.f32 %v3197, %v3225
      %3227 = vmatmul.bf16.gmra.mxu0 %v3029
      %v3228 = vpop.f32.mrf.mxu0
      %v3229 = vadd.f32 %v3200, %v3228
      %v3230 = vpop.f32.mrf.mxu0
      %v3231 = vadd.f32 %v3202, %v3230
      %3232 = vmatmul.bf16.gmra.mxu0 %v3032
      %v3233 = vpop.f32.mrf.mxu0
      %v3234 = vadd.f32 %v3205, %v3233
      %v3235 = vpop.f32.mrf.mxu0
      %v3236 = vadd.f32 %v3207, %v3235
      %3237 = vmatmul.bf16.gmra.mxu0 %v3035
      %v3238 = vpop.f32.mrf.mxu0
      %v3239 = vadd.f32 %v3210, %v3238
      %v3240 = vpop.f32.mrf.mxu0
      %v3241 = vadd.f32 %v3212, %v3240
      %3242 = vdwg.mxu0
      %3243 = vmatpush.bf16.msra.mxu0 %v3160
      %3244 = vmatpush.bf16.msra.mxu0 %v3159
      %3245 = vmatpush.bf16.msra.mxu0 %v3158
      %3246 = vmatpush.bf16.msra.mxu0 %v3157
      %3247 = vmatpush.bf16.msra.mxu0 %v3156
      %3248 = vmatpush.bf16.msra.mxu0 %v3155
      %3249 = vmatpush.bf16.msra.mxu0 %v3154
      %3250 = vmatpush.bf16.msra.mxu0 %v3153
      %3251 = vmatmul.bf16.gmra.mxu0 %v3027
      %v3252 = vpop.f32.mrf.mxu0
      %v3253 = vadd.f32 %v3224, %v3252
      %v3254 = vpop.f32.mrf.mxu0
      %v3255 = vadd.f32 %v3226, %v3254
      %3256 = vmatmul.bf16.gmra.mxu0 %v3030
      %v3257 = vpop.f32.mrf.mxu0
      %v3258 = vadd.f32 %v3229, %v3257
      %v3259 = vpop.f32.mrf.mxu0
      %v3260 = vadd.f32 %v3231, %v3259
      %3261 = vmatmul.bf16.gmra.mxu0 %v3033
      %v3262 = vpop.f32.mrf.mxu0
      %v3263 = vadd.f32 %v3234, %v3262
      %v3264 = vpop.f32.mrf.mxu0
      %v3265 = vadd.f32 %v3236, %v3264
      %3266 = vmatmul.bf16.gmra.mxu0 %v3036
      %v3267 = vpop.f32.mrf.mxu0
      %v3268 = vadd.f32 %v3239, %v3267
      %v3269 = vpop.f32.mrf.mxu0
      %v3270 = vadd.f32 %v3241, %v3269
      %3271 = vdwg.mxu0
      %v3272 = vmax.f32 %v3253, 0.0
      %v3273 = vmax.f32 %v3255, 0.0
      %v3274 = vmax.f32 %v3258, 0.0
      %v3275 = vmax.f32 %v3260, 0.0
      %v3276 = vmax.f32 %v3263, 0.0
      %v3277 = vmax.f32 %v3265, 0.0
      %v3278 = vmax.f32 %v3268, 0.0
      %v3279 = vmax.f32 %v3270, 0.0
      %v3288 = vrot.slane %v3272, 2
      %v3289 = vrot.slane %v3272, 4
      %v3290 = vrot.slane %v3272, 6
      %v3291 = vrot.slane %v3273, 2
      %v3292 = vrot.slane %v3273, 4
      %v3293 = vrot.slane %v3273, 6
      %v3294 = vrot.slane %v3274, 2
      %v3295 = vrot.slane %v3274, 4
      %v3296 = vrot.slane %v3274, 6
      %v3297 = vrot.slane %v3275, 2
      %v3298 = vrot.slane %v3275, 4
      %v3299 = vrot.slane %v3275, 6
      %v3300 = vrot.slane %v3276, 2
      %v3301 = vrot.slane %v3276, 4
      %v3302 = vrot.slane %v3276, 6
      %v3303 = vrot.slane %v3277, 2
      %v3304 = vrot.slane %v3277, 4
      %v3305 = vrot.slane %v3277, 6
      %v3306 = vrot.slane %v3278, 2
      %v3307 = vrot.slane %v3278, 4
      %v3308 = vrot.slane %v3278, 6
      %v3309 = vrot.slane %v3279, 2
      %v3310 = vrot.slane %v3279, 4
      %v3311 = vrot.slane %v3279, 6
      %v3336 = vrot.slane %v3272, 7
      %v3337 = vrot.slane %v3336, 2
      %v3338 = vrot.slane %v3288, 7
      %v3339 = vrot.slane %v3338, 2
      %v3340 = vrot.slane %v3289, 7
      %v3341 = vrot.slane %v3340, 2
      %v3342 = vrot.slane %v3290, 7
      %v3343 = vrot.slane %v3342, 2
      %v3344 = vrot.slane %v3273, 7
      %v3345 = vrot.slane %v3344, 2
      %v3346 = vrot.slane %v3291, 7
      %v3347 = vrot.slane %v3346, 2
      %v3348 = vrot.slane %v3292, 7
      %v3349 = vrot.slane %v3348, 2
      %v3350 = vrot.slane %v3293, 7
      %v3351 = vrot.slane %v3350, 2
      %v3352 = vrot.slane %v3274, 7
      %v3353 = vrot.slane %v3352, 2
      %v3354 = vrot.slane %v3294, 7
      %v3355 = vrot.slane %v3354, 2
      %v3356 = vrot.slane %v3295, 7
      %v3357 = vrot.slane %v3356, 2
      %v3358 = vrot.slane %v3296, 7
      %v3359 = vrot.slane %v3358, 2
      %v3360 = vrot.slane %v3275, 7
      %v3361 = vrot.slane %v3360, 2
      %v3362 = vrot.slane %v3297, 7
      %v3363 = vrot.slane %v3362, 2
      %v3364 = vrot.slane %v3298, 7
      %v3365 = vrot.slane %v3364, 2
      %v3366 = vrot.slane %v3299, 7
      %v3367 = vrot.slane %v3366, 2
      %v3368 = vrot.slane %v3276, 7
      %v3369 = vrot.slane %v3368, 2
      %v3370 = vrot.slane %v3300, 7
      %v3371 = vrot.slane %v3370, 2
      %v3372 = vrot.slane %v3301, 7
      %v3373 = vrot.slane %v3372, 2
      %v3374 = vrot.slane %v3302, 7
      %v3375 = vrot.slane %v3374, 2
      %v3376 = vrot.slane %v3277, 7
      %v3377 = vrot.slane %v3376, 2
      %v3378 = vrot.slane %v3303, 7
      %v3379 = vrot.slane %v3378, 2
      %v3380 = vrot.slane %v3304, 7
      %v3381 = vrot.slane %v3380, 2
      %v3382 = vrot.slane %v3305, 7
      %v3383 = vrot.slane %v3382, 2
      %v3384 = vrot.slane %v3278, 7
      %v3385 = vrot.slane %v3384, 2
      %v3386 = vrot.slane %v3306, 7
      %v3387 = vrot.slane %v3386, 2
      %v3388 = vrot.slane %v3307, 7
      %v3389 = vrot.slane %v3388, 2
      %v3390 = vrot.slane %v3308, 7
      %v3391 = vrot.slane %v3390, 2
      %v3392 = vrot.slane %v3279, 7
      %v3393 = vrot.slane %v3392, 2
      %v3394 = vrot.slane %v3309, 7
      %v3395 = vrot.slane %v3394, 2
      %v3396 = vrot.slane %v3310, 7
      %v3397 = vrot.slane %v3396, 2
      %v3398 = vrot.slane %v3311, 7
      %v3399 = vrot.slane %v3398, 2
      %v3432 = vmax.f32 %v3272, %v3337
      %v3433 = vmax.f32 %v3288, %v3339
      %v3434 = vmax.f32 %v3289, %v3341
      %v3435 = vmax.f32 %v3290, %v3343
      %v3436 = vmax.f32 %v3273, %v3345
      %v3437 = vmax.f32 %v3291, %v3347
      %v3438 = vmax.f32 %v3292, %v3349
      %v3439 = vmax.f32 %v3293, %v3351
      %v3440 = vmax.f32 %v3274, %v3353
      %v3441 = vmax.f32 %v3294, %v3355
      %v3442 = vmax.f32 %v3295, %v3357
      %v3443 = vmax.f32 %v3296, %v3359
      %v3444 = vmax.f32 %v3275, %v3361
      %v3445 = vmax.f32 %v3297, %v3363
      %v3446 = vmax.f32 %v3298, %v3365
      %v3447 = vmax.f32 %v3299, %v3367
      %v3448 = vmax.f32 %v3276, %v3369
      %v3449 = vmax.f32 %v3300, %v3371
      %v3450 = vmax.f32 %v3301, %v3373
      %v3451 = vmax.f32 %v3302, %v3375
      %v3452 = vmax.f32 %v3277, %v3377
      %v3453 = vmax.f32 %v3303, %v3379
      %v3454 = vmax.f32 %v3304, %v3381
      %v3455 = vmax.f32 %v3305, %v3383
      %v3456 = vmax.f32 %v3278, %v3385
      %v3457 = vmax.f32 %v3306, %v3387
      %v3458 = vmax.f32 %v3307, %v3389
      %v3459 = vmax.f32 %v3308, %v3391
      %v3460 = vmax.f32 %v3279, %v3393
      %v3461 = vmax.f32 %v3309, %v3395
      %v3462 = vmax.f32 %v3310, %v3397
      %v3463 = vmax.f32 %v3311, %v3399
      %v3464 = vld [vmem:[%s7] sm:$0xf]
      %v3465 = vld [vmem:[%s7 + $0x4] sm:$0xf]
      %v3466 = vld [vmem:[%s7 + $0x8] sm:$0xf]
      %v3467 = vld [vmem:[%s7 + $0xc] sm:$0xf]
      %v3468 = vpack.c.bf16 %v3432, %v3432
      %v3469 = vpack.c.bf16 %v3433, %v3433
      %v3470 = vpack.c.bf16 %v3434, %v3434
      %v3471 = vpack.c.bf16 %v3435, %v3435
      %v3472 = vpack.c.bf16 %v3436, %v3436
      %v3473 = vpack.c.bf16 %v3437, %v3437
      %v3474 = vpack.c.bf16 %v3438, %v3438
      %v3475 = vpack.c.bf16 %v3439, %v3439
      %v3476 = vpack.c.bf16 %v3440, %v3440
      %v3477 = vpack.c.bf16 %v3441, %v3441
      %v3478 = vpack.c.bf16 %v3442, %v3442
      %v3479 = vpack.c.bf16 %v3443, %v3443
      %v3480 = vpack.c.bf16 %v3444, %v3444
      %v3481 = vpack.c.bf16 %v3445, %v3445
      %v3482 = vpack.c.bf16 %v3446, %v3446
      %v3483 = vpack.c.bf16 %v3447, %v3447
      %v3484 = vpack.c.bf16 %v3448, %v3448
      %v3485 = vpack.c.bf16 %v3449, %v3449
      %v3486 = vpack.c.bf16 %v3450, %v3450
      %v3487 = vpack.c.bf16 %v3451, %v3451
      %v3488 = vpack.c.bf16 %v3452, %v3452
      %v3489 = vpack.c.bf16 %v3453, %v3453
      %v3490 = vpack.c.bf16 %v3454, %v3454
      %v3491 = vpack.c.bf16 %v3455, %v3455
      %v3492 = vpack.c.bf16 %v3456, %v3456
      %v3493 = vpack.c.bf16 %v3457, %v3457
      %v3494 = vpack.c.bf16 %v3458, %v3458
      %v3495 = vpack.c.bf16 %v3459, %v3459
      %v3496 = vpack.c.bf16 %v3460, %v3460
      %v3497 = vpack.c.bf16 %v3461, %v3461
      %v3498 = vpack.c.bf16 %v3462, %v3462
      %v3499 = vpack.c.bf16 %v3463, %v3463
      %v3532 = vunpack.c.l.b16 %v3468
      %v3533 = vunpack.c.l.b16 %v3469
      %v3534 = vunpack.c.l.b16 %v3470
      %v3535 = vunpack.c.l.b16 %v3471
      %v3536 = vunpack.c.l.b16 %v3472
      %v3537 = vunpack.c.l.b16 %v3473
      %v3538 = vunpack.c.l.b16 %v3474
      %v3539 = vunpack.c.l.b16 %v3475
      %v3540 = vunpack.c.l.b16 %v3476
      %v3541 = vunpack.c.l.b16 %v3477
      %v3542 = vunpack.c.l.b16 %v3478
      %v3543 = vunpack.c.l.b16 %v3479
      %v3544 = vunpack.c.l.b16 %v3480
      %v3545 = vunpack.c.l.b16 %v3481
      %v3546 = vunpack.c.l.b16 %v3482
      %v3547 = vunpack.c.l.b16 %v3483
      %v3548 = vunpack.c.l.b16 %v3484
      %v3549 = vunpack.c.l.b16 %v3485
      %v3550 = vunpack.c.l.b16 %v3486
      %v3551 = vunpack.c.l.b16 %v3487
      %v3552 = vunpack.c.l.b16 %v3488
      %v3553 = vunpack.c.l.b16 %v3489
      %v3554 = vunpack.c.l.b16 %v3490
      %v3555 = vunpack.c.l.b16 %v3491
      %v3556 = vunpack.c.l.b16 %v3492
      %v3557 = vunpack.c.l.b16 %v3493
      %v3558 = vunpack.c.l.b16 %v3494
      %v3559 = vunpack.c.l.b16 %v3495
      %v3560 = vunpack.c.l.b16 %v3496
      %v3561 = vunpack.c.l.b16 %v3497
      %v3562 = vunpack.c.l.b16 %v3498
      %v3563 = vunpack.c.l.b16 %v3499
      %v3564 = vrot.slane %v3533, 7
      %v3565 = vsel %vm2327, %v3564, %v3532
      %v3566 = vrot.slane %v3534, 6
      %v3567 = vsel %vm2330, %v3566, %v3565
      %v3568 = vrot.slane %v3535, 5
      %v3569 = vsel %vm2333, %v3568, %v3567
      %v3570 = vrot.slane %v3536, 4
      %v3571 = vsel %vm2336, %v3570, %v3569
      %v3572 = vrot.slane %v3537, 3
      %v3573 = vsel %vm2339, %v3572, %v3571
      %v3574 = vrot.slane %v3538, 2
      %v3575 = vsel %vm2342, %v3574, %v3573
      %v3576 = vrot.slane %v3539, 1
      %v3577 = vsel %vm2345, %v3576, %v3575
      %v3578 = vrot.slane %v3541, 7
      %v3579 = vsel %vm2327, %v3578, %v3540
      %v3580 = vrot.slane %v3542, 6
      %v3581 = vsel %vm2330, %v3580, %v3579
      %v3582 = vrot.slane %v3543, 5
      %v3583 = vsel %vm2333, %v3582, %v3581
      %v3584 = vrot.slane %v3544, 4
      %v3585 = vsel %vm2336, %v3584, %v3583
      %v3586 = vrot.slane %v3545, 3
      %v3587 = vsel %vm2339, %v3586, %v3585
      %v3588 = vrot.slane %v3546, 2
      %v3589 = vsel %vm2342, %v3588, %v3587
      %v3590 = vrot.slane %v3547, 1
      %v3591 = vsel %vm2345, %v3590, %v3589
      %v3592 = vrot.slane %v3549, 7
      %v3593 = vsel %vm2327, %v3592, %v3548
      %v3594 = vrot.slane %v3550, 6
      %v3595 = vsel %vm2330, %v3594, %v3593
      %v3596 = vrot.slane %v3551, 5
      %v3597 = vsel %vm2333, %v3596, %v3595
      %v3598 = vrot.slane %v3552, 4
      %v3599 = vsel %vm2336, %v3598, %v3597
      %v3600 = vrot.slane %v3553, 3
      %v3601 = vsel %vm2339, %v3600, %v3599
      %v3602 = vrot.slane %v3554, 2
      %v3603 = vsel %vm2342, %v3602, %v3601
      %v3604 = vrot.slane %v3555, 1
      %v3605 = vsel %vm2345, %v3604, %v3603
      %v3606 = vrot.slane %v3557, 7
      %v3607 = vsel %vm2327, %v3606, %v3556
      %v3608 = vrot.slane %v3558, 6
      %v3609 = vsel %vm2330, %v3608, %v3607
      %v3610 = vrot.slane %v3559, 5
      %v3611 = vsel %vm2333, %v3610, %v3609
      %v3612 = vrot.slane %v3560, 4
      %v3613 = vsel %vm2336, %v3612, %v3611
      %v3614 = vrot.slane %v3561, 3
      %v3615 = vsel %vm2339, %v3614, %v3613
      %v3616 = vrot.slane %v3562, 2
      %v3617 = vsel %vm2342, %v3616, %v3615
      %v3618 = vrot.slane %v3563, 1
      %v3619 = vsel %vm2345, %v3618, %v3617
      %v3620 = vpack.c.b16 %v3591, %v3577
      %v3621 = vpack.c.b16 %v3619, %v3605
      %v3626 = vunpack.c.l.b16 %v3464
      %v3627 = vunpack.c.l.b16 %v3465
      %v3628 = vunpack.c.l.b16 %v3466
      %v3629 = vunpack.c.l.b16 %v3467
      %v3630 = vpack.c.b16 %v3627, %v3626
      %v3631 = vpack.c.b16 %v3629, %v3628
      %vm3634 = vcmask 261120
      %v3636 = vsel %vm3634, %v3620, 0
      %v3639 = vsel %vm3634, %v3621, 0
      %3641 = vmatpush.bf16.msra.mxu0 0
      %3642 = vmatpush.bf16.msra.mxu0 0
      %3643 = vmatpush.bf16.msra.mxu0 0
      %3644 = vmatpush.bf16.msra.mxu0 0
      %3645 = vmatpush.bf16.msra.mxu0 0
      %3646 = vmatpush.bf16.msra.mxu0 0
      %3647 = vmatpush.bf16.msra.mxu0 %v3631
      %3648 = vmatpush.bf16.msra.mxu0 %v3630
      %3649 = vmatmul.bf16.gmra.mxu0 %v3636
      %v3650 = vpop.f32.mrf.mxu0
      %v3651 = vadd.f32 0.0, %v3650
      %v3652 = vpop.f32.mrf.mxu0
      %v3653 = vadd.f32 0.0, %v3652
      %3654 = vmatmul.bf16.gmra.mxu0 %v3639
      %v3655 = vpop.f32.mrf.mxu0
      %v3656 = vadd.f32 0.0, %v3655
      %v3657 = vpop.f32.mrf.mxu0
      %v3658 = vadd.f32 0.0, %v3657
      %3659 = vdwg.mxu0
      %v3660 = vld [vmem:[%s8] sm:$0xf]
      %v3661 = vld [vmem:[%s8 + $0x4] sm:$0xf]
      %v3662 = vld [vmem:[%s8 + $0x8] sm:$0xf]
      %v3663 = vld [vmem:[%s8 + $0xc] sm:$0xf]
      %v3668 = vunpack.c.l.b16 %v3660
      %v3669 = vunpack.c.l.b16 %v3661
      %v3670 = vunpack.c.l.b16 %v3662
      %v3671 = vunpack.c.l.b16 %v3663
      %v3672 = vpack.c.b16 %v3669, %v3668
      %v3673 = vpack.c.b16 %v3671, %v3670
      %3676 = vmatpush.bf16.msra.mxu0 0
      %3677 = vmatpush.bf16.msra.mxu0 0
      %3678 = vmatpush.bf16.msra.mxu0 0
      %3679 = vmatpush.bf16.msra.mxu0 0
      %3680 = vmatpush.bf16.msra.mxu0 0
      %3681 = vmatpush.bf16.msra.mxu0 0
      %3682 = vmatpush.bf16.msra.mxu0 %v3673
      %3683 = vmatpush.bf16.msra.mxu0 %v3672
      %3684 = vmatmul.bf16.gmra.mxu0 %v3636
      %v3685 = vpop.f32.mrf.mxu0
      %v3686 = vadd.f32 0.0, %v3685
      %v3687 = vpop.f32.mrf.mxu0
      %v3688 = vadd.f32 0.0, %v3687
      %3689 = vmatmul.bf16.gmra.mxu0 %v3639
      %v3690 = vpop.f32.mrf.mxu0
      %v3691 = vadd.f32 0.0, %v3690
      %v3692 = vpop.f32.mrf.mxu0
      %v3693 = vadd.f32 0.0, %v3692
      %3694 = vdwg.mxu0
      %v3695 = vmax.f32 %v3651, %v3686
      %v3696 = vmax.f32 %v3653, %v3688
      %v3697 = vmax.f32 %v3656, %v3691
      %v3698 = vmax.f32 %v3658, %v3693
      %v3699 = vld [vmem:[%s9] sm:$0xf]
      %v3700 = vld [vmem:[%s9 + $0x4] sm:$0xf]
      %v3701 = vpack.c.bf16 %v3696, %v3695
      %v3702 = vpack.c.bf16 %v3698, %v3697
      %v3705 = vunpack.c.l.b16 %v3699
      %v3706 = vunpack.c.l.b16 %v3700
      %v3707 = vpack.c.b16 %v3706, %v3705
      %v3710 = vsel %vm609, %v3701, 0
      %v3713 = vsel %vm609, %v3702, 0
      %3715 = vmatpush.bf16.msra.mxu0 0
      %3716 = vmatpush.bf16.msra.mxu0 0
      %3717 = vmatpush.bf16.msra.mxu0 0
      %3718 = vmatpush.bf16.msra.mxu0 0
      %3719 = vmatpush.bf16.msra.mxu0 0
      %3720 = vmatpush.bf16.msra.mxu0 0
      %3721 = vmatpush.bf16.msra.mxu0 0
      %3722 = vmatpush.bf16.msra.mxu0 %v3707
      %3723 = vmatmul.bf16.gmra.mxu0 %v3710
      %v3724 = vpop.f32.mrf.mxu0
      %v3725 = vadd.f32 0.0, %v3724
      %v3726 = vpop.f32.mrf.mxu0
      %v3727 = vadd.f32 0.0, %v3726
      %3728 = vmatmul.bf16.gmra.mxu0 %v3713
      %v3729 = vpop.f32.mrf.mxu0
      %v3730 = vadd.f32 0.0, %v3729
      %v3731 = vpop.f32.mrf.mxu0
      %v3732 = vadd.f32 0.0, %v3731
      %3733 = vdwg.mxu0
      %s3734 = scalar_lea.vmem %s9, 8
      %v3735 = vld [vmem:[%s3734] sm:$0xf]
      %v3736 = vld [vmem:[%s3734 + $0x4] sm:$0xf]
      %v3739 = vunpack.c.l.b16 %v3735
      %v3740 = vunpack.c.l.b16 %v3736
      %v3741 = vpack.c.b16 %v3740, %v3739
      %3743 = vmatpush.bf16.msra.mxu0 0
      %3744 = vmatpush.bf16.msra.mxu0 0
      %3745 = vmatpush.bf16.msra.mxu0 0
      %3746 = vmatpush.bf16.msra.mxu0 0
      %3747 = vmatpush.bf16.msra.mxu0 0
      %3748 = vmatpush.bf16.msra.mxu0 0
      %3749 = vmatpush.bf16.msra.mxu0 0
      %3750 = vmatpush.bf16.msra.mxu0 %v3741
      %3751 = vmatmul.bf16.gmra.mxu0 %v3710
      %v3752 = vpop.f32.mrf.mxu0
      %v3753 = vadd.f32 0.0, %v3752
      %v3754 = vpop.f32.mrf.mxu0
      %v3755 = vadd.f32 0.0, %v3754
      %3756 = vmatmul.bf16.gmra.mxu0 %v3713
      %v3757 = vpop.f32.mrf.mxu0
      %v3758 = vadd.f32 0.0, %v3757
      %v3759 = vpop.f32.mrf.mxu0
      %v3760 = vadd.f32 0.0, %v3759
      %3761 = vdwg.mxu0
      %v3766 = vrot.slane %v3725, 1
      %v3767 = vrot.slane %v3725, 2
      %v3768 = vrot.slane %v3725, 3
      %v3769 = vrot.slane %v3725, 4
      %v3770 = vrot.slane %v3725, 5
      %v3771 = vrot.slane %v3725, 6
      %v3772 = vrot.slane %v3725, 7
      %v3773 = vrot.slane %v3727, 1
      %v3774 = vrot.slane %v3727, 2
      %v3775 = vrot.slane %v3727, 3
      %v3776 = vrot.slane %v3727, 4
      %v3777 = vrot.slane %v3727, 5
      %v3778 = vrot.slane %v3727, 6
      %v3779 = vrot.slane %v3727, 7
      %v3780 = vrot.slane %v3730, 1
      %v3781 = vrot.slane %v3730, 2
      %v3782 = vrot.slane %v3730, 3
      %v3783 = vrot.slane %v3730, 4
      %v3784 = vrot.slane %v3730, 5
      %v3785 = vrot.slane %v3730, 6
      %v3786 = vrot.slane %v3730, 7
      %v3787 = vrot.slane %v3732, 1
      %v3788 = vrot.slane %v3732, 2
      %v3789 = vrot.slane %v3732, 3
      %v3790 = vrot.slane %v3732, 4
      %v3791 = vrot.slane %v3732, 5
      %v3792 = vrot.slane %v3732, 6
      %v3793 = vrot.slane %v3732, 7
      %v3826 = vrot.slane %v3753, 1
      %v3827 = vrot.slane %v3753, 2
      %v3828 = vrot.slane %v3753, 3
      %v3829 = vrot.slane %v3753, 4
      %v3830 = vrot.slane %v3753, 5
      %v3831 = vrot.slane %v3753, 6
      %v3832 = vrot.slane %v3753, 7
      %v3833 = vrot.slane %v3755, 1
      %v3834 = vrot.slane %v3755, 2
      %v3835 = vrot.slane %v3755, 3
      %v3836 = vrot.slane %v3755, 4
      %v3837 = vrot.slane %v3755, 5
      %v3838 = vrot.slane %v3755, 6
      %v3839 = vrot.slane %v3755, 7
      %v3840 = vrot.slane %v3758, 1
      %v3841 = vrot.slane %v3758, 2
      %v3842 = vrot.slane %v3758, 3
      %v3843 = vrot.slane %v3758, 4
      %v3844 = vrot.slane %v3758, 5
      %v3845 = vrot.slane %v3758, 6
      %v3846 = vrot.slane %v3758, 7
      %v3847 = vrot.slane %v3760, 1
      %v3848 = vrot.slane %v3760, 2
      %v3849 = vrot.slane %v3760, 3
      %v3850 = vrot.slane %v3760, 4
      %v3851 = vrot.slane %v3760, 5
      %v3852 = vrot.slane %v3760, 6
      %v3853 = vrot.slane %v3760, 7
      %v3854 = vperm.slane %v3753, 0
      %v3855 = vperm.slane %v3826, 0
      %v3856 = vperm.slane %v3827, 0
      %v3857 = vperm.slane %v3828, 0
      %v3858 = vperm.slane %v3829, 0
      %v3859 = vperm.slane %v3830, 0
      %v3860 = vperm.slane %v3831, 0
      %v3861 = vperm.slane %v3832, 0
      %v3862 = vperm.slane %v3755, 0
      %v3863 = vperm.slane %v3833, 0
      %v3864 = vperm.slane %v3834, 0
      %v3865 = vperm.slane %v3835, 0
      %v3866 = vperm.slane %v3836, 0
      %v3867 = vperm.slane %v3837, 0
      %v3868 = vperm.slane %v3838, 0
      %v3869 = vperm.slane %v3839, 0
      %v3870 = vperm.slane %v3758, 0
      %v3871 = vperm.slane %v3840, 0
      %v3872 = vperm.slane %v3841, 0
      %v3873 = vperm.slane %v3842, 0
      %v3874 = vperm.slane %v3843, 0
      %v3875 = vperm.slane %v3844, 0
      %v3876 = vperm.slane %v3845, 0
      %v3877 = vperm.slane %v3846, 0
      %v3878 = vperm.slane %v3760, 0
      %v3879 = vperm.slane %v3847, 0
      %v3880 = vperm.slane %v3848, 0
      %v3881 = vperm.slane %v3849, 0
      %v3882 = vperm.slane %v3850, 0
      %v3883 = vperm.slane %v3851, 0
      %v3884 = vperm.slane %v3852, 0
      %v3885 = vperm.slane %v3853, 0
      %v3918 = vsel %vm485, %v3725, %v3854
      %v3919 = vsel %vm485, %v3766, %v3855
      %v3920 = vsel %vm485, %v3767, %v3856
      %v3921 = vsel %vm485, %v3768, %v3857
      %v3922 = vsel %vm485, %v3769, %v3858
      %v3923 = vsel %vm485, %v3770, %v3859
      %v3924 = vsel %vm485, %v3771, %v3860
      %v3925 = vsel %vm485, %v3772, %v3861
      %v3926 = vsel %vm485, %v3727, %v3862
      %v3927 = vsel %vm485, %v3773, %v3863
      %v3928 = vsel %vm485, %v3774, %v3864
      %v3929 = vsel %vm485, %v3775, %v3865
      %v3930 = vsel %vm485, %v3776, %v3866
      %v3931 = vsel %vm485, %v3777, %v3867
      %v3932 = vsel %vm485, %v3778, %v3868
      %v3933 = vsel %vm485, %v3779, %v3869
      %v3934 = vsel %vm485, %v3730, %v3870
      %v3935 = vsel %vm485, %v3780, %v3871
      %v3936 = vsel %vm485, %v3781, %v3872
      %v3937 = vsel %vm485, %v3782, %v3873
      %v3938 = vsel %vm485, %v3783, %v3874
      %v3939 = vsel %vm485, %v3784, %v3875
      %v3940 = vsel %vm485, %v3785, %v3876
      %v3941 = vsel %vm485, %v3786, %v3877
      %v3942 = vsel %vm485, %v3732, %v3878
      %v3943 = vsel %vm485, %v3787, %v3879
      %v3944 = vsel %vm485, %v3788, %v3880
      %v3945 = vsel %vm485, %v3789, %v3881
      %v3946 = vsel %vm485, %v3790, %v3882
      %v3947 = vsel %vm485, %v3791, %v3883
      %v3948 = vsel %vm485, %v3792, %v3884
      %v3949 = vsel %vm485, %v3793, %v3885
      %v3950 = vld [vmem:[%s10] sm:$0x1]
      %v3952 = vperm.slane %v3950, 0
      %v3954 = vrot.slane %v3952, 2
      %v3955 = vrot.slane %v3952, 4
      %v3956 = vrot.slane %v3952, 6
      %v3960 = vadd.f32 %v3918, %v3952
      %v3961 = vadd.f32 %v3919, %v3954
      %v3962 = vadd.f32 %v3920, %v3955
      %v3963 = vadd.f32 %v3921, %v3956
      %v3964 = vadd.f32 %v3922, %v3952
      %v3965 = vadd.f32 %v3923, %v3954
      %v3966 = vadd.f32 %v3924, %v3955
      %v3967 = vadd.f32 %v3925, %v3956
      %v3968 = vadd.f32 %v3926, %v3952
      %v3969 = vadd.f32 %v3927, %v3954
      %v3970 = vadd.f32 %v3928, %v3955
      %v3971 = vadd.f32 %v3929, %v3956
      %v3972 = vadd.f32 %v3930, %v3952
      %v3973 = vadd.f32 %v3931, %v3954
      %v3974 = vadd.f32 %v3932, %v3955
      %v3975 = vadd.f32 %v3933, %v3956
      %v3976 = vadd.f32 %v3934, %v3952
      %v3977 = vadd.f32 %v3935, %v3954
      %v3978 = vadd.f32 %v3936, %v3955
      %v3979 = vadd.f32 %v3937, %v3956
      %v3980 = vadd.f32 %v3938, %v3952
      %v3981 = vadd.f32 %v3939, %v3954
      %v3982 = vadd.f32 %v3940, %v3955
      %v3983 = vadd.f32 %v3941, %v3956
      %v3984 = vadd.f32 %v3942, %v3952
      %v3985 = vadd.f32 %v3943, %v3954
      %v3986 = vadd.f32 %v3944, %v3955
      %v3987 = vadd.f32 %v3945, %v3956
      %v3988 = vadd.f32 %v3946, %v3952
      %v3989 = vadd.f32 %v3947, %v3954
      %v3990 = vadd.f32 %v3948, %v3955
      %v3991 = vadd.f32 %v3949, %v3956
      %v3992 = vmax.f32 %v3960, 0.0
      %v3993 = vmax.f32 %v3961, 0.0
      %v3994 = vmax.f32 %v3962, 0.0
      %v3995 = vmax.f32 %v3963, 0.0
      %v3996 = vmax.f32 %v3964, 0.0
      %v3997 = vmax.f32 %v3965, 0.0
      %v3998 = vmax.f32 %v3966, 0.0
      %v3999 = vmax.f32 %v3967, 0.0
      %v4000 = vmax.f32 %v3968, 0.0
      %v4001 = vmax.f32 %v3969, 0.0
      %v4002 = vmax.f32 %v3970, 0.0
      %v4003 = vmax.f32 %v3971, 0.0
      %v4004 = vmax.f32 %v3972, 0.0
      %v4005 = vmax.f32 %v3973, 0.0
      %v4006 = vmax.f32 %v3974, 0.0
      %v4007 = vmax.f32 %v3975, 0.0
      %v4008 = vmax.f32 %v3976, 0.0
      %v4009 = vmax.f32 %v3977, 0.0
      %v4010 = vmax.f32 %v3978, 0.0
      %v4011 = vmax.f32 %v3979, 0.0
      %v4012 = vmax.f32 %v3980, 0.0
      %v4013 = vmax.f32 %v3981, 0.0
      %v4014 = vmax.f32 %v3982, 0.0
      %v4015 = vmax.f32 %v3983, 0.0
      %v4016 = vmax.f32 %v3984, 0.0
      %v4017 = vmax.f32 %v3985, 0.0
      %v4018 = vmax.f32 %v3986, 0.0
      %v4019 = vmax.f32 %v3987, 0.0
      %v4020 = vmax.f32 %v3988, 0.0
      %v4021 = vmax.f32 %v3989, 0.0
      %v4022 = vmax.f32 %v3990, 0.0
      %v4023 = vmax.f32 %v3991, 0.0
      %v4024 = vld [vmem:[%s11] sm:$0xf]
      %v4025 = vld [vmem:[%s11 + $0x4] sm:$0xf]
      %v4026 = vld [vmem:[%s11 + $0x8] sm:$0xf]
      %v4027 = vld [vmem:[%s11 + $0xc] sm:$0xf]
      %v4028 = vld [vmem:[%s11 + $0x10] sm:$0xf]
      %v4029 = vld [vmem:[%s11 + $0x14] sm:$0xf]
      %v4030 = vld [vmem:[%s11 + $0x18] sm:$0xf]
      %v4031 = vld [vmem:[%s11 + $0x1c] sm:$0xf]
      %v4032 = vld [vmem:[%s11 + $0x20] sm:$0xf]
      %v4033 = vld [vmem:[%s11 + $0x24] sm:$0xf]
      %v4034 = vld [vmem:[%s11 + $0x28] sm:$0xf]
      %v4035 = vld [vmem:[%s11 + $0x2c] sm:$0xf]
      %v4036 = vld [vmem:[%s11 + $0x30] sm:$0xf]
      %v4037 = vld [vmem:[%s11 + $0x34] sm:$0xf]
      %v4038 = vld [vmem:[%s11 + $0x38] sm:$0xf]
      %v4039 = vld [vmem:[%s11 + $0x3c] sm:$0xf]
      %4072 = vst [vmem:[#allocation1] ss:$4 sm:$0xff] %v3992
      %s4073 = scalar_lea.vmem [#allocation1], 1
      %4074 = vst [vmem:[%s4073] ss:$4 sm:$0xff] %v3993
      %s4075 = scalar_lea.vmem [#allocation1], 2
      %4076 = vst [vmem:[%s4075] ss:$4 sm:$0xff] %v3994
      %s4077 = scalar_lea.vmem [#allocation1], 3
      %4078 = vst [vmem:[%s4077] ss:$4 sm:$0xff] %v3995
      %s4079 = scalar_lea.vmem [#allocation1], 32
      %4080 = vst [vmem:[%s4079] ss:$4 sm:$0xff] %v3996
      %s4081 = scalar_lea.vmem [#allocation1], 33
      %4082 = vst [vmem:[%s4081] ss:$4 sm:$0xff] %v3997
      %s4083 = scalar_lea.vmem [#allocation1], 34
      %4084 = vst [vmem:[%s4083] ss:$4 sm:$0xff] %v3998
      %s4085 = scalar_lea.vmem [#allocation1], 35
      %4086 = vst [vmem:[%s4085] ss:$4 sm:$0xff] %v3999
      %v4087 = vld.sshfl [vmem:[#allocation1] sm:$0xff pattern:$0x73625140]
      %v4088 = vld.sshfl [vmem:[#allocation1 + $0x20] sm:$0xff pattern:$0x73625140]
      %4089 = vst [vmem:[#allocation1] ss:$4 sm:$0xff] %v4000
      %4090 = vst [vmem:[%s4073] ss:$4 sm:$0xff] %v4001
      %4091 = vst [vmem:[%s4075] ss:$4 sm:$0xff] %v4002
      %4092 = vst [vmem:[%s4077] ss:$4 sm:$0xff] %v4003
      %4093 = vst [vmem:[%s4079] ss:$4 sm:$0xff] %v4004
      %4094 = vst [vmem:[%s4081] ss:$4 sm:$0xff] %v4005
      %4095 = vst [vmem:[%s4083] ss:$4 sm:$0xff] %v4006
      %4096 = vst [vmem:[%s4085] ss:$4 sm:$0xff] %v4007
      %v4097 = vld.sshfl [vmem:[#allocation1] sm:$0xff pattern:$0x73625140]
      %v4098 = vld.sshfl [vmem:[#allocation1 + $0x20] sm:$0xff pattern:$0x73625140]
      %4099 = vst [vmem:[#allocation1] ss:$4 sm:$0xff] %v4008
      %4100 = vst [vmem:[%s4073] ss:$4 sm:$0xff] %v4009
      %4101 = vst [vmem:[%s4075] ss:$4 sm:$0xff] %v4010
      %4102 = vst [vmem:[%s4077] ss:$4 sm:$0xff] %v4011
      %4103 = vst [vmem:[%s4079] ss:$4 sm:$0xff] %v4012
      %4104 = vst [vmem:[%s4081] ss:$4 sm:$0xff] %v4013
      %4105 = vst [vmem:[%s4083] ss:$4 sm:$0xff] %v4014
      %4106 = vst [vmem:[%s4085] ss:$4 sm:$0xff] %v4015
      %v4107 = vld.sshfl [vmem:[#allocation1] sm:$0xff pattern:$0x73625140]
      %v4108 = vld.sshfl [vmem:[#allocation1 + $0x20] sm:$0xff pattern:$0x73625140]
      %4109 = vst [vmem:[#allocation1] ss:$4 sm:$0xff] %v4016
      %4110 = vst [vmem:[%s4073] ss:$4 sm:$0xff] %v4017
      %4111 = vst [vmem:[%s4075] ss:$4 sm:$0xff] %v4018
      %4112 = vst [vmem:[%s4077] ss:$4 sm:$0xff] %v4019
      %4113 = vst [vmem:[%s4079] ss:$4 sm:$0xff] %v4020
      %4114 = vst [vmem:[%s4081] ss:$4 sm:$0xff] %v4021
      %4115 = vst [vmem:[%s4083] ss:$4 sm:$0xff] %v4022
      %4116 = vst [vmem:[%s4085] ss:$4 sm:$0xff] %v4023
      %v4117 = vld.sshfl [vmem:[#allocation1] sm:$0xff pattern:$0x73625140]
      %v4118 = vld.sshfl [vmem:[#allocation1 + $0x20] sm:$0xff pattern:$0x73625140]
      %v4127 = vpack.c.bf16 %v4088, %v4087
      %v4128 = vpack.c.bf16 %v4098, %v4097
      %v4129 = vpack.c.bf16 %v4108, %v4107
      %v4130 = vpack.c.bf16 %v4118, %v4117
      %v4131 = vld [vmem:[%s12] sm:$0x1]
      %v4133 = vperm.slane %v4131, 0
      %v4151 = vunpack.c.l.b16 %v4024
      %v4152 = vunpack.c.l.b16 %v4025
      %v4153 = vunpack.c.l.b16 %v4026
      %v4154 = vunpack.c.l.b16 %v4027
      %v4155 = vunpack.c.l.b16 %v4028
      %v4156 = vunpack.c.l.b16 %v4029
      %v4157 = vunpack.c.l.b16 %v4030
      %v4158 = vunpack.c.l.b16 %v4031
      %v4159 = vunpack.c.l.b16 %v4032
      %v4160 = vunpack.c.l.b16 %v4033
      %v4161 = vunpack.c.l.b16 %v4034
      %v4162 = vunpack.c.l.b16 %v4035
      %v4163 = vunpack.c.l.b16 %v4036
      %v4164 = vunpack.c.l.b16 %v4037
      %v4165 = vunpack.c.l.b16 %v4038
      %v4166 = vunpack.c.l.b16 %v4039
      %v4167 = vpack.c.b16 %v4152, %v4151
      %v4168 = vpack.c.b16 %v4154, %v4153
      %v4169 = vpack.c.b16 %v4156, %v4155
      %v4170 = vpack.c.b16 %v4158, %v4157
      %v4171 = vpack.c.b16 %v4160, %v4159
      %v4172 = vpack.c.b16 %v4162, %v4161
      %v4173 = vpack.c.b16 %v4164, %v4163
      %v4174 = vpack.c.b16 %v4166, %v4165
      %4183 = vmatpush.bf16.msra.mxu0 %v4174
      %4184 = vmatpush.bf16.msra.mxu0 %v4173
      %4185 = vmatpush.bf16.msra.mxu0 %v4172
      %4186 = vmatpush.bf16.msra.mxu0 %v4171
      %4187 = vmatpush.bf16.msra.mxu0 %v4170
      %4188 = vmatpush.bf16.msra.mxu0 %v4169
      %4189 = vmatpush.bf16.msra.mxu0 %v4168
      %4190 = vmatpush.bf16.msra.mxu0 %v4167
      %4191 = vmatmul.bf16.gmra.mxu0 %v4127
      %v4192 = vpop.f32.mrf.mxu0
      %v4193 = vadd.f32 %v4133, %v4192
      %v4194 = vpop.f32.mrf.mxu0
      %v4195 = vadd.f32 %v4133, %v4194
      %4196 = vmatmul.bf16.gmra.mxu0 %v4128
      %v4197 = vpop.f32.mrf.mxu0
      %v4198 = vadd.f32 %v4133, %v4197
      %v4199 = vpop.f32.mrf.mxu0
      %v4200 = vadd.f32 %v4133, %v4199
      %4201 = vmatmul.bf16.gmra.mxu0 %v4129
      %v4202 = vpop.f32.mrf.mxu0
      %v4203 = vadd.f32 %v4133, %v4202
      %v4204 = vpop.f32.mrf.mxu0
      %v4205 = vadd.f32 %v4133, %v4204
      %4206 = vmatmul.bf16.gmra.mxu0 %v4130
      %v4207 = vpop.f32.mrf.mxu0
      %v4208 = vadd.f32 %v4133, %v4207
      %v4209 = vpop.f32.mrf.mxu0
      %v4210 = vadd.f32 %v4133, %v4209
      %4211 = vdwg.mxu0
      %v4220 = vrot.slane %v4195, 7
      %v4221 = vsel %vm2327, %v4220, %v4193
      %v4222 = vrot.slane %v4198, 6
      %v4223 = vsel %vm2330, %v4222, %v4221
      %v4224 = vrot.slane %v4200, 5
      %v4225 = vsel %vm2333, %v4224, %v4223
      %v4226 = vrot.slane %v4203, 4
      %v4227 = vsel %vm2336, %v4226, %v4225
      %v4228 = vrot.slane %v4205, 3
      %v4229 = vsel %vm2339, %v4228, %v4227
      %v4230 = vrot.slane %v4208, 2
      %v4231 = vsel %vm2342, %v4230, %v4229
      %v4232 = vrot.slane %v4210, 1
      %v4233 = vsel %vm2345, %v4232, %v4231
      %4235 = vst.msk [vmem:[%s445] sm:$0xff] %vm3634, %v4233
      %v4236 = vrot.slane %v4193, 1
      %v4237 = vsel %vm2327, %v4195, %v4236
      %v4238 = vrot.slane %v4198, 7
      %v4239 = vsel %vm2330, %v4238, %v4237
      %v4240 = vrot.slane %v4200, 6
      %v4241 = vsel %vm2333, %v4240, %v4239
      %v4242 = vrot.slane %v4203, 5
      %v4243 = vsel %vm2336, %v4242, %v4241
      %v4244 = vrot.slane %v4205, 4
      %v4245 = vsel %vm2339, %v4244, %v4243
      %v4246 = vrot.slane %v4208, 3
      %v4247 = vsel %vm2342, %v4246, %v4245
      %v4248 = vrot.slane %v4210, 2
      %v4249 = vsel %vm2345, %v4248, %v4247
      %4250 = vrot.lane.b32.xlu0 %v4249, 32
      %v4251 = vpop.permute.xlu0 %4250
      %vm4253 = vcmask 523520
      %4254 = vst.msk [vmem:[%s445] sm:$0xff] %vm4253, %v4251
      %v4255 = vrot.slane %v4193, 2
      %v4256 = vrot.slane %v4195, 1
      %v4257 = vsel %vm2327, %v4256, %v4255
      %v4258 = vsel %vm2330, %v4198, %v4257
      %v4259 = vrot.slane %v4200, 7
      %v4260 = vsel %vm2333, %v4259, %v4258
      %v4261 = vrot.slane %v4203, 6
      %v4262 = vsel %vm2336, %v4261, %v4260
      %v4263 = vrot.slane %v4205, 5
      %v4264 = vsel %vm2339, %v4263, %v4262
      %v4265 = vrot.slane %v4208, 4
      %v4266 = vsel %vm2342, %v4265, %v4264
      %v4267 = vrot.slane %v4210, 3
      %v4268 = vsel %vm2345, %v4267, %v4266
      %4269 = vrot.lane.b32.xlu0 %v4268, 64
      %v4270 = vpop.permute.xlu0 %4269
      %vm4272 = vcmask 785920
      %4273 = vst.msk [vmem:[%s445] sm:$0xff] %vm4272, %v4270
      %v4274 = vrot.slane %v4193, 3
      %v4275 = vrot.slane %v4195, 2
      %v4276 = vsel %vm2327, %v4275, %v4274
      %v4277 = vrot.slane %v4198, 1
      %v4278 = vsel %vm2330, %v4277, %v4276
      %v4279 = vsel %vm2333, %v4200, %v4278
      %v4280 = vrot.slane %v4203, 7
      %v4281 = vsel %vm2336, %v4280, %v4279
      %v4282 = vrot.slane %v4205, 6
      %v4283 = vsel %vm2339, %v4282, %v4281
      %v4284 = vrot.slane %v4208, 5
      %v4285 = vsel %vm2342, %v4284, %v4283
      %v4286 = vrot.slane %v4210, 4
      %v4287 = vsel %vm2345, %v4286, %v4285
      %4288 = vrot.lane.b32.xlu0 %v4287, 96
      %v4289 = vpop.permute.xlu0 %4288
      %vm4291 = vcmask 1048320
      %4292 = vst.msk [vmem:[%s445] sm:$0xff] %vm4291, %v4289
      %v4293 = vrot.slane %v4193, 4
      %v4294 = vrot.slane %v4195, 3
      %v4295 = vsel %vm2327, %v4294, %v4293
      %v4296 = vrot.slane %v4198, 2
      %v4297 = vsel %vm2330, %v4296, %v4295
      %v4298 = vrot.slane %v4200, 1
      %v4299 = vsel %vm2333, %v4298, %v4297
      %v4300 = vsel %vm2336, %v4203, %v4299
      %v4301 = vrot.slane %v4205, 7
      %v4302 = vsel %vm2339, %v4301, %v4300
      %v4303 = vrot.slane %v4208, 6
      %v4304 = vsel %vm2342, %v4303, %v4302
      %v4305 = vrot.slane %v4210, 5
      %v4306 = vsel %vm2345, %v4305, %v4304
      %4308 = vst.msk [vmem:[%s445 + $0x8] sm:$0xff] %vm3634, %v4306
      %v4309 = vrot.slane %v4193, 5
      %v4310 = vrot.slane %v4195, 4
      %v4311 = vsel %vm2327, %v4310, %v4309
      %v4312 = vrot.slane %v4198, 3
      %v4313 = vsel %vm2330, %v4312, %v4311
      %v4314 = vrot.slane %v4200, 2
      %v4315 = vsel %vm2333, %v4314, %v4313
      %v4316 = vrot.slane %v4203, 1
      %v4317 = vsel %vm2336, %v4316, %v4315
      %v4318 = vsel %vm2339, %v4205, %v4317
      %v4319 = vrot.slane %v4208, 7
      %v4320 = vsel %vm2342, %v4319, %v4318
      %v4321 = vrot.slane %v4210, 6
      %v4322 = vsel %vm2345, %v4321, %v4320
      %4323 = vrot.lane.b32.xlu0 %v4322, 32
      %v4324 = vpop.permute.xlu0 %4323
      %4326 = vst.msk [vmem:[%s445 + $0x8] sm:$0xff] %vm4253, %v4324
      %v4327 = vrot.slane %v4193, 6
      %v4328 = vrot.slane %v4195, 5
      %v4329 = vsel %vm2327, %v4328, %v4327
      %v4330 = vrot.slane %v4198, 4
      %v4331 = vsel %vm2330, %v4330, %v4329
      %v4332 = vrot.slane %v4200, 3
      %v4333 = vsel %vm2333, %v4332, %v4331
      %v4334 = vrot.slane %v4203, 2
      %v4335 = vsel %vm2336, %v4334, %v4333
      %v4336 = vrot.slane %v4205, 1
      %v4337 = vsel %vm2339, %v4336, %v4335
      %v4338 = vsel %vm2342, %v4208, %v4337
      %v4339 = vrot.slane %v4210, 7
      %v4340 = vsel %vm2345, %v4339, %v4338
      %4341 = vrot.lane.b32.xlu0 %v4340, 64
      %v4342 = vpop.permute.xlu0 %4341
      %4344 = vst.msk [vmem:[%s445 + $0x8] sm:$0xff] %vm4272, %v4342
      %v4345 = vrot.slane %v4193, 7
      %v4346 = vrot.slane %v4195, 6
      %v4347 = vsel %vm2327, %v4346, %v4345
      %v4348 = vrot.slane %v4198, 5
      %v4349 = vsel %vm2330, %v4348, %v4347
      %v4350 = vrot.slane %v4200, 4
      %v4351 = vsel %vm2333, %v4350, %v4349
      %v4352 = vrot.slane %v4203, 3
      %v4353 = vsel %vm2336, %v4352, %v4351
      %v4354 = vrot.slane %v4205, 2
      %v4355 = vsel %vm2339, %v4354, %v4353
      %v4356 = vrot.slane %v4208, 1
      %v4357 = vsel %vm2342, %v4356, %v4355
      %v4358 = vsel %vm2345, %v4210, %v4357
      %4359 = vrot.lane.b32.xlu0 %v4358, 96
      %v4360 = vpop.permute.xlu0 %4359
      %4362 = vst.msk [vmem:[%s445 + $0x8] sm:$0xff] %vm4291, %v4360
      %p4363 = scmp.lt.s32.totalorder %s24, 1
      %s4364 = scalar_select %p4363, %s24, 1
      %s4365 = smul.addr %s4364, 2
      %s4366 = smul.addr %s4365, 8
      %s4367 = scalar_lea.vmem %s13, %s4366
      // Predicated region
      $region73: #{conv_ae_forward.1} parent=71 // pred_check
        %p4368 = pneg %p320
      $region74: #{conv_ae_forward.1} parent=71 // pred_check_branch
        %4370 = sbr.rel (%p4368) target = $region76
      $region75: #{conv_ae_forward.1} parent=71 // pred_region
        _
      $region76: #{conv_ae_forward.1} parent=71 // pred_fallthru
        _
    $region72: #{conv_ae_forward.1} parent=5 // pred_fallthru
      _
    %p4371 = scmp.le.s32.totalorder 2, %s19
    // Predicated region
    $region77: #{conv_ae_forward.1} parent=5 // pred_check
      %p4372 = pneg %p4371
    $region78: #{conv_ae_forward.1} parent=5 // pred_check_branch
      %4374 = sbr.rel (%p4372) target = $region80
    $region79: #{conv_ae_forward.1} parent=5 // pred_region
      %s4375 = ssub.s32 %s19, 2
      // Predicated region
      $region81: #{conv_ae_forward.1} parent=79 // pred_check
        %p4376 = pneg %p326
      $region82: #{conv_ae_forward.1} parent=79 // pred_check_branch
        %4378 = sbr.rel (%p4376) target = $region84
      $region83: #{conv_ae_forward.1} parent=79 // pred_region
        %p4379 = scmp.lt.s32.totalorder %s25, 1
        %s4380 = scalar_select %p4379, %s25, 1
        %s4381 = smul.addr %s4380, 2
        %s4382 = smul.addr %s4381, 8
        %s4383 = scalar_lea.vmem %s13, %s4382
      $region84: #{conv_ae_forward.1} parent=79 // pred_fallthru
        _
    $region80: #{conv_ae_forward.1} parent=5 // pred_fallthru
      _
  $region6: #{conv_ae_forward.1} parent=0 // loop_footer
    %s23 = sadd.s32 1, %s19
  $region7: #{conv_ae_forward.1} parent=0 // loop_footer_branch
    %18 = sbr.rel target = $region3
  $region8: #{conv_ae_forward.1} parent=0 // loop_exit
    _

</llo_original>
